<compile_context>
chip_gen: v7x
topology: tpu7x:2x2x1
jax: 0.10.0
libtpu: 0.0.40
codegen_flags: <defaults>
</compile_context>

<pallas_src>
import jax
import jax.numpy as jnp
from jax.experimental import pallas as pl
from jax.experimental.pallas import tpu as pltpu

K_RAW = 28 * 28          # 784 flattened pixels
N_OUT = 10
N_PAD = 128              # lane-dense logits slab


def _round_up(n, m):
    return ((n + m - 1) // m) * m


def fcnet_kernel(x_ref, w1_ref, b1_ref, w2_ref, b2_ref,
                 w3_ref, b3_ref, w4_ref, b4_ref, o_ref):
    # Flattened pixels arrive as f32; cast to bf16 on the VPU so every matmul
    # runs bf16 x bf16 -> f32 acc on the MXU (K=784 is lane-padded by Mosaic).
    h = x_ref[...].astype(jnp.bfloat16)
    # Layer 1: (bm, 784) @ (784, 512); bias + ReLU in f32 on the VPU.
    h = jnp.dot(h, w1_ref[...], preferred_element_type=jnp.float32)
    h = jnp.maximum(h + b1_ref[...], 0.0).astype(jnp.bfloat16)
    # Layer 2: (bm, 512) @ (512, 256)
    h = jnp.dot(h, w2_ref[...], preferred_element_type=jnp.float32)
    h = jnp.maximum(h + b2_ref[...], 0.0).astype(jnp.bfloat16)
    # Layer 3: (bm, 256) @ (256, 128)
    h = jnp.dot(h, w3_ref[...], preferred_element_type=jnp.float32)
    h = jnp.maximum(h + b3_ref[...], 0.0).astype(jnp.bfloat16)
    # Layer 4 (logits padded to 128 lanes for an unmasked vst): (bm,128)@(128,128)
    o_ref[...] = (jnp.dot(h, w4_ref[...], preferred_element_type=jnp.float32)
                  + b4_ref[...]).astype(o_ref.dtype)


def _prepare_params(params):
    """Cast params to kernel dtypes; only the logits layer is lane-padded."""
    (w1, b1), (w2, b2), (w3, b3), (w4, b4) = params
    w1p = w1.astype(jnp.bfloat16)                                   # (784, 512)
    w2p = w2.astype(jnp.bfloat16)                                   # (512, 256)
    w3p = w3.astype(jnp.bfloat16)                                   # (256, 128)
    w4p = jnp.pad(w4, ((0, 0), (0, N_PAD - w4.shape[1]))).astype(jnp.bfloat16)
    b1p = b1.astype(jnp.float32)
    b2p = b2.astype(jnp.float32)
    b3p = b3.astype(jnp.float32)
    b4p = jnp.pad(b4, ((0, 0), (0, N_PAD - b4.shape[1]))).astype(jnp.float32)
    return (w1p, b1p, w2p, b2p, w3p, b3p, w4p, b4p)


def _const_spec(shape, pipeline_mode=None):
    """Full-array block with a constant index map (resident across the grid)."""
    nd = len(shape)
    idx = lambda i, _nd=nd: (0,) * _nd
    if pipeline_mode is not None:
        return pl.BlockSpec(shape, idx, pipeline_mode=pipeline_mode)
    return pl.BlockSpec(shape, idx)


def _pallas_forward(x2d, wparams, bm, out_dtype, single_buffer_weights):
    B = x2d.shape[0]
    w1, b1, w2, b2, w3, b3, w4, b4 = wparams
    pipe = pl.Buffered(1) if single_buffer_weights else None
    in_specs = [pl.BlockSpec((bm, K_RAW), lambda i: (i, 0))] + [
        _const_spec(a.shape, pipe) for a in (w1, b1, w2, b2, w3, b3, w4, b4)
    ]
    return pl.pallas_call(
        fcnet_kernel,
        out_shape=jax.ShapeDtypeStruct((B, N_PAD), out_dtype),
        grid_spec=pltpu.PrefetchScalarGridSpec(
            num_scalar_prefetch=0,
            grid=(pl.cdiv(B, bm),),          # non-divisible tail block is masked
            in_specs=in_specs,
            out_specs=pl.BlockSpec((bm, N_PAD), lambda i: (i, 0)),
        ),
        compiler_params=pltpu.CompilerParams(
            dimension_semantics=("parallel",),   # batch shards across v7x TCs
            vmem_limit_bytes=32 << 20,           # headroom for bm up to 1024
        ),
    )(x2d, w1, b1, w2, b2, w3, b3, w4, b4)


def fcnet_forward(x_nchw, params, *, bm=None, out_dtype=jnp.float32):
    """x_nchw: (B, 1, 28, 28) float32. Returns logits (B, 10) as out_dtype."""
    B = x_nchw.shape[0]
    # nn.Flatten only -- padding / casting happens inside the kernel.
    x2d = x_nchw.reshape(B, -1)
    if x2d.dtype != jnp.float32:
        x2d = x2d.astype(jnp.float32)

    if bm is None:
        if B > 256:
            # Big tiles to amortize per-step overhead, but keep >= 2 grid steps
            # so the parallel batch axis can use both v7x TensorCores.
            bm = min(1024, _round_up(pl.cdiv(B, 2), 256))
        else:
            bm = _round_up(B, 8)   # whole (sublane-rounded) batch in one step

    wparams = _prepare_params(params)

    try:
        # Preferred path: weights/biases single-buffered (they never re-DMA).
        out = jax.block_until_ready(
            _pallas_forward(x2d, wparams, bm, out_dtype, single_buffer_weights=True))
    except Exception:
        # pl.Buffered(1) not supported by this jax/Mosaic build -> default specs.
        out = _pallas_forward(x2d, wparams, bm, out_dtype, single_buffer_weights=False)

    # Lane-dense (B, 128) slab -> (B, 10) logits.  Consumers that can take the
    # padded slab directly may skip this slice (and pass out_dtype=bf16).
    return out[:, :N_OUT]


def init_params(key):
    """Deterministic init matching nn.Linear shapes (weights stored as (in, out))."""
    dims = [(K_RAW, 512), (512, 256), (256, 128), (128, N_OUT)]
    params = []
    for fan_in, fan_out in dims:
        key, kw, kb = jax.random.split(key, 3)
        bound = 1.0 / jnp.sqrt(fan_in)  # PyTorch default uniform(-1/sqrt(in), 1/sqrt(in))
        w = jax.random.uniform(kw, (fan_in, fan_out), jnp.float32, -bound, bound)
        b = jax.random.uniform(kb, (1, fan_out), jnp.float32, -bound, bound)
        params.append((w, b))
    return params


def fcnet_reference_bf16(x_nchw, params):
    """Plain-JAX reference with the SAME bf16-operand / f32-accumulate numerics."""
    h = x_nchw.reshape(x_nchw.shape[0], -1).astype(jnp.bfloat16)
    for i, (w, b) in enumerate(params):
        h = jnp.dot(h, w.astype(jnp.bfloat16),
                    preferred_element_type=jnp.float32) + b.astype(jnp.float32)
        if i < len(params) - 1:
            h = jnp.maximum(h, 0.0).astype(jnp.bfloat16)
    return h


if __name__ == "__main__":
    key = jax.random.PRNGKey(0)
    kx, kp = jax.random.split(key)
    params = init_params(kp)

    # Small MNIST-like batch: (B=8, C=1, H=28, W=28), NCHW like PyTorch.
    x = jax.random.normal(kx, (8, 1, 28, 28), jnp.float32)
    logits = jax.block_until_ready(fcnet_forward(x, params))
    ref = fcnet_reference_bf16(x, params)
    assert logits.shape == (8, 10)
    assert jnp.allclose(logits, ref, atol=1e-2, rtol=1e-2), "mismatch vs reference (B=8)"

    # Tiled path: B=512 -> bm=256, grid of 2 (megacore-shardable).
    x2 = jax.random.normal(kx, (512, 1, 28, 28), jnp.float32)
    logits2 = jax.block_until_ready(fcnet_forward(x2, params))
    ref2 = fcnet_reference_bf16(x2, params)
    assert logits2.shape == (512, 10)
    assert jnp.allclose(logits2, ref2, atol=1e-2, rtol=1e-2), "mismatch vs reference (B=512)"

    # Non-divisible tail: B=600 -> bm=512, grid of 2 with a masked partial block.
    x3 = jax.random.normal(kx, (600, 1, 28, 28), jnp.float32)
    logits3 = jax.block_until_ready(fcnet_forward(x3, params))
    ref3 = fcnet_reference_bf16(x3, params)
    assert logits3.shape == (600, 10)
    assert jnp.allclose(logits3, ref3, atol=1e-2, rtol=1e-2), "mismatch vs reference (B=600)"

    print("KERNEL_OK")
</pallas_src>

<mosaic_0001>
module attributes {stable_mosaic.version = 11 : i64} {
  func.func @fcnet_kernel(%arg0: i32, %arg1: memref<8x784xf32, #tpu.memory_space<vmem>>, %arg2: memref<784x512xbf16, #tpu.memory_space<vmem>>, %arg3: memref<1x512xf32, #tpu.memory_space<vmem>>, %arg4: memref<512x256xbf16, #tpu.memory_space<vmem>>, %arg5: memref<1x256xf32, #tpu.memory_space<vmem>>, %arg6: memref<256x128xbf16, #tpu.memory_space<vmem>>, %arg7: memref<1x128xf32, #tpu.memory_space<vmem>>, %arg8: memref<128x128xbf16, #tpu.memory_space<vmem>>, %arg9: memref<1x128xf32, #tpu.memory_space<vmem>>, %arg10: memref<8x128xf32, #tpu.memory_space<vmem>>) attributes {dimension_semantics = [#tpu.dimension_semantics<parallel>], iteration_bounds = array<i64: 1>, scalar_prefetch = 0 : i64, scratch_operands = 0 : i64, tpu.core_type = #tpu.core_type<tc>, window_params = [{transform_indices = @transform_0, window_bounds = array<i64: 8, 784>}, {pipeline_mode = #tpu.pipeline_mode<synchronous>, transform_indices = @transform_1, window_bounds = array<i64: 784, 512>}, {pipeline_mode = #tpu.pipeline_mode<synchronous>, transform_indices = @transform_2, window_bounds = array<i64: 1, 512>}, {pipeline_mode = #tpu.pipeline_mode<synchronous>, transform_indices = @transform_3, window_bounds = array<i64: 512, 256>}, {pipeline_mode = #tpu.pipeline_mode<synchronous>, transform_indices = @transform_4, window_bounds = array<i64: 1, 256>}, {pipeline_mode = #tpu.pipeline_mode<synchronous>, transform_indices = @transform_5, window_bounds = array<i64: 256, 128>}, {pipeline_mode = #tpu.pipeline_mode<synchronous>, transform_indices = @transform_6, window_bounds = array<i64: 1, 128>}, {pipeline_mode = #tpu.pipeline_mode<synchronous>, transform_indices = @transform_7, window_bounds = array<i64: 128, 128>}, {pipeline_mode = #tpu.pipeline_mode<synchronous>, transform_indices = @transform_8, window_bounds = array<i64: 1, 128>}, {transform_indices = @transform_9, window_bounds = array<i64: 8, 128>}]} {
    %c0 = arith.constant 0 : index
    %c0_0 = arith.constant 0 : index
    %0 = vector.load %arg1[%c0, %c0_0] : memref<8x784xf32, #tpu.memory_space<vmem>>, vector<8x784xf32>
    %1 = arith.truncf %0 : vector<8x784xf32> to vector<8x784xbf16>
    %c0_1 = arith.constant 0 : index
    %c0_2 = arith.constant 0 : index
    %2 = vector.load %arg2[%c0_1, %c0_2] : memref<784x512xbf16, #tpu.memory_space<vmem>>, vector<784x512xbf16>
    %cst = arith.constant dense<0.000000e+00> : vector<8x512xf32>
    %3 = tpu.matmul %1, %2, %cst {dimension_numbers = #tpu.dot_dimension_numbers<[1], [0], [0], [1], [0, 0, 1, 1], [], []>} : vector<8x784xbf16>, vector<784x512xbf16>, vector<8x512xf32> -> vector<8x512xf32>
    %c0_3 = arith.constant 0 : index
    %c0_4 = arith.constant 0 : index
    %4 = vector.load %arg3[%c0_3, %c0_4] : memref<1x512xf32, #tpu.memory_space<vmem>>, vector<1x512xf32>
    %5 = vector.broadcast %4 : vector<1x512xf32> to vector<8x512xf32>
    %6 = arith.addf %3, %5 : vector<8x512xf32>
    %cst_5 = arith.constant 0.000000e+00 : f32
    %7 = vector.broadcast %cst_5 : f32 to vector<8x512xf32>
    %8 = arith.maximumf %6, %7 : vector<8x512xf32>
    %9 = arith.truncf %8 : vector<8x512xf32> to vector<8x512xbf16>
    %c0_6 = arith.constant 0 : index
    %c0_7 = arith.constant 0 : index
    %10 = vector.load %arg4[%c0_6, %c0_7] : memref<512x256xbf16, #tpu.memory_space<vmem>>, vector<512x256xbf16>
    %cst_8 = arith.constant dense<0.000000e+00> : vector<8x256xf32>
    %11 = tpu.matmul %9, %10, %cst_8 {dimension_numbers = #tpu.dot_dimension_numbers<[1], [0], [0], [1], [0, 0, 1, 1], [], []>} : vector<8x512xbf16>, vector<512x256xbf16>, vector<8x256xf32> -> vector<8x256xf32>
    %c0_9 = arith.constant 0 : index
    %c0_10 = arith.constant 0 : index
    %12 = vector.load %arg5[%c0_9, %c0_10] : memref<1x256xf32, #tpu.memory_space<vmem>>, vector<1x256xf32>
    %13 = vector.broadcast %12 : vector<1x256xf32> to vector<8x256xf32>
    %14 = arith.addf %11, %13 : vector<8x256xf32>
    %cst_11 = arith.constant 0.000000e+00 : f32
    %15 = vector.broadcast %cst_11 : f32 to vector<8x256xf32>
    %16 = arith.maximumf %14, %15 : vector<8x256xf32>
    %17 = arith.truncf %16 : vector<8x256xf32> to vector<8x256xbf16>
    %c0_12 = arith.constant 0 : index
    %c0_13 = arith.constant 0 : index
    %18 = vector.load %arg6[%c0_12, %c0_13] : memref<256x128xbf16, #tpu.memory_space<vmem>>, vector<256x128xbf16>
    %cst_14 = arith.constant dense<0.000000e+00> : vector<8x128xf32>
    %19 = tpu.matmul %17, %18, %cst_14 {dimension_numbers = #tpu.dot_dimension_numbers<[1], [0], [0], [1], [0, 0, 1, 1], [], []>} : vector<8x256xbf16>, vector<256x128xbf16>, vector<8x128xf32> -> vector<8x128xf32>
    %c0_15 = arith.constant 0 : index
    %c0_16 = arith.constant 0 : index
    %20 = vector.load %arg7[%c0_15, %c0_16] : memref<1x128xf32, #tpu.memory_space<vmem>>, vector<1x128xf32>
    %21 = vector.broadcast %20 : vector<1x128xf32> to vector<8x128xf32>
    %22 = arith.addf %19, %21 : vector<8x128xf32>
    %cst_17 = arith.constant 0.000000e+00 : f32
    %23 = vector.broadcast %cst_17 : f32 to vector<8x128xf32>
    %24 = arith.maximumf %22, %23 : vector<8x128xf32>
    %25 = arith.truncf %24 : vector<8x128xf32> to vector<8x128xbf16>
    %c0_18 = arith.constant 0 : index
    %c0_19 = arith.constant 0 : index
    %26 = vector.load %arg8[%c0_18, %c0_19] : memref<128x128xbf16, #tpu.memory_space<vmem>>, vector<128x128xbf16>
    %cst_20 = arith.constant dense<0.000000e+00> : vector<8x128xf32>
    %27 = tpu.matmul %25, %26, %cst_20 {dimension_numbers = #tpu.dot_dimension_numbers<[1], [0], [0], [1], [0, 0, 1, 1], [], []>} : vector<8x128xbf16>, vector<128x128xbf16>, vector<8x128xf32> -> vector<8x128xf32>
    %c0_21 = arith.constant 0 : index
    %c0_22 = arith.constant 0 : index
    %28 = vector.load %arg9[%c0_21, %c0_22] : memref<1x128xf32, #tpu.memory_space<vmem>>, vector<1x128xf32>
    %29 = vector.broadcast %28 : vector<1x128xf32> to vector<8x128xf32>
    %30 = arith.addf %27, %29 : vector<8x128xf32>
    %c0_23 = arith.constant 0 : index
    %c0_24 = arith.constant 0 : index
    %31 = vector.load %arg10[%c0_23, %c0_24] : memref<8x128xf32, #tpu.memory_space<vmem>>, vector<8x128xf32>
    tpu.vector_store %arg10[%c0_23, %c0_24], %30 {strides = array<i32>} : memref<8x128xf32, #tpu.memory_space<vmem>>, vector<8x128xf32>,
    return
  }
  func.func @transform_0(%arg0: i32) -> (i32, i32) {
    %c0_i32 = arith.constant 0 : i32
    %c0_i32_0 = arith.constant 0 : i32
    return %arg0, %c0_i32 : i32, i32
  }
  func.func @transform_1(%arg0: i32) -> (i32, i32) {
    %c0_i32 = arith.constant 0 : i32
    %c0_i32_0 = arith.constant 0 : i32
    %c0_i32_1 = arith.constant 0 : i32
    return %c0_i32, %c0_i32_0 : i32, i32
  }
  func.func @transform_2(%arg0: i32) -> (i32, i32) {
    %c0_i32 = arith.constant 0 : i32
    %c0_i32_0 = arith.constant 0 : i32
    %c0_i32_1 = arith.constant 0 : i32
    return %c0_i32, %c0_i32_0 : i32, i32
  }
  func.func @transform_3(%arg0: i32) -> (i32, i32) {
    %c0_i32 = arith.constant 0 : i32
    %c0_i32_0 = arith.constant 0 : i32
    %c0_i32_1 = arith.constant 0 : i32
    return %c0_i32, %c0_i32_0 : i32, i32
  }
  func.func @transform_4(%arg0: i32) -> (i32, i32) {
    %c0_i32 = arith.constant 0 : i32
    %c0_i32_0 = arith.constant 0 : i32
    %c0_i32_1 = arith.constant 0 : i32
    return %c0_i32, %c0_i32_0 : i32, i32
  }
  func.func @transform_5(%arg0: i32) -> (i32, i32) {
    %c0_i32 = arith.constant 0 : i32
    %c0_i32_0 = arith.constant 0 : i32
    %c0_i32_1 = arith.constant 0 : i32
    return %c0_i32, %c0_i32_0 : i32, i32
  }
  func.func @transform_6(%arg0: i32) -> (i32, i32) {
    %c0_i32 = arith.constant 0 : i32
    %c0_i32_0 = arith.constant 0 : i32
    %c0_i32_1 = arith.constant 0 : i32
    return %c0_i32, %c0_i32_0 : i32, i32
  }
  func.func @transform_7(%arg0: i32) -> (i32, i32) {
    %c0_i32 = arith.constant 0 : i32
    %c0_i32_0 = arith.constant 0 : i32
    %c0_i32_1 = arith.constant 0 : i32
    return %c0_i32, %c0_i32_0 : i32, i32
  }
  func.func @transform_8(%arg0: i32) -> (i32, i32) {
    %c0_i32 = arith.constant 0 : i32
    %c0_i32_0 = arith.constant 0 : i32
    %c0_i32_1 = arith.constant 0 : i32
    return %c0_i32, %c0_i32_0 : i32, i32
  }
  func.func @transform_9(%arg0: i32) -> (i32, i32) {
    %c0_i32 = arith.constant 0 : i32
    %c0_i32_0 = arith.constant 0 : i32
    return %arg0, %c0_i32 : i32, i32
  }
}

module attributes {stable_mosaic.version = 11 : i64} {
  func.func @fcnet_kernel(%arg0: i32, %arg1: memref<8x784xf32, #tpu.memory_space<vmem>>, %arg2: memref<784x512xbf16, #tpu.memory_space<vmem>>, %arg3: memref<1x512xf32, #tpu.memory_space<vmem>>, %arg4: memref<512x256xbf16, #tpu.memory_space<vmem>>, %arg5: memref<1x256xf32, #tpu.memory_space<vmem>>, %arg6: memref<256x128xbf16, #tpu.memory_space<vmem>>, %arg7: memref<1x128xf32, #tpu.memory_space<vmem>>, %arg8: memref<128x128xbf16, #tpu.memory_space<vmem>>, %arg9: memref<1x128xf32, #tpu.memory_space<vmem>>, %arg10: memref<8x128xf32, #tpu.memory_space<vmem>>) attributes {dimension_semantics = [#tpu.dimension_semantics<parallel>], iteration_bounds = array<i64: 1>, scalar_prefetch = 0 : i64, scratch_operands = 0 : i64, tpu.core_type = #tpu.core_type<tc>, window_params = [{transform_indices = @transform_0, window_bounds = array<i64: 8, 784>}, {pipeline_mode = #tpu.pipeline_mode<synchronous>, transform_indices = @transform_1, window_bounds = array<i64: 784, 512>}, {pipeline_mode = #tpu.pipeline_mode<synchronous>, transform_indices = @transform_2, window_bounds = array<i64: 1, 512>}, {pipeline_mode = #tpu.pipeline_mode<synchronous>, transform_indices = @transform_3, window_bounds = array<i64: 512, 256>}, {pipeline_mode = #tpu.pipeline_mode<synchronous>, transform_indices = @transform_4, window_bounds = array<i64: 1, 256>}, {pipeline_mode = #tpu.pipeline_mode<synchronous>, transform_indices = @transform_5, window_bounds = array<i64: 256, 128>}, {pipeline_mode = #tpu.pipeline_mode<synchronous>, transform_indices = @transform_6, window_bounds = array<i64: 1, 128>}, {pipeline_mode = #tpu.pipeline_mode<synchronous>, transform_indices = @transform_7, window_bounds = array<i64: 128, 128>}, {pipeline_mode = #tpu.pipeline_mode<synchronous>, transform_indices = @transform_8, window_bounds = array<i64: 1, 128>}, {transform_indices = @transform_9, window_bounds = array<i64: 8, 128>}]} {
    %c0 = arith.constant 0 : index
    %c0_0 = arith.constant 0 : index
    %0 = vector.load %arg1[%c0, %c0_0] : memref<8x784xf32, #tpu.memory_space<vmem>>, vector<8x784xf32>
    %1 = arith.truncf %0 : vector<8x784xf32> to vector<8x784xbf16>
    %c0_1 = arith.constant 0 : index
    %c0_2 = arith.constant 0 : index
    %2 = vector.load %arg2[%c0_1, %c0_2] : memref<784x512xbf16, #tpu.memory_space<vmem>>, vector<784x512xbf16>
    %cst = arith.constant dense<0.000000e+00> : vector<8x512xf32>
    %3 = tpu.matmul %1, %2, %cst {dimension_numbers = #tpu.dot_dimension_numbers<[1], [0], [0], [1], [0, 0, 1, 1], [], []>} : vector<8x784xbf16>, vector<784x512xbf16>, vector<8x512xf32> -> vector<8x512xf32>
    %c0_3 = arith.constant 0 : index
    %c0_4 = arith.constant 0 : index
    %4 = vector.load %arg3[%c0_3, %c0_4] : memref<1x512xf32, #tpu.memory_space<vmem>>, vector<1x512xf32>
    %5 = vector.broadcast %4 : vector<1x512xf32> to vector<8x512xf32>
    %6 = arith.addf %3, %5 : vector<8x512xf32>
    %cst_5 = arith.constant 0.000000e+00 : f32
    %7 = vector.broadcast %cst_5 : f32 to vector<8x512xf32>
    %8 = arith.maximumf %6, %7 : vector<8x512xf32>
    %9 = arith.truncf %8 : vector<8x512xf32> to vector<8x512xbf16>
    %c0_6 = arith.constant 0 : index
    %c0_7 = arith.constant 0 : index
    %10 = vector.load %arg4[%c0_6, %c0_7] : memref<512x256xbf16, #tpu.memory_space<vmem>>, vector<512x256xbf16>
    %cst_8 = arith.constant dense<0.000000e+00> : vector<8x256xf32>
    %11 = tpu.matmul %9, %10, %cst_8 {dimension_numbers = #tpu.dot_dimension_numbers<[1], [0], [0], [1], [0, 0, 1, 1], [], []>} : vector<8x512xbf16>, vector<512x256xbf16>, vector<8x256xf32> -> vector<8x256xf32>
    %c0_9 = arith.constant 0 : index
    %c0_10 = arith.constant 0 : index
    %12 = vector.load %arg5[%c0_9, %c0_10] : memref<1x256xf32, #tpu.memory_space<vmem>>, vector<1x256xf32>
    %13 = vector.broadcast %12 : vector<1x256xf32> to vector<8x256xf32>
    %14 = arith.addf %11, %13 : vector<8x256xf32>
    %cst_11 = arith.constant 0.000000e+00 : f32
    %15 = vector.broadcast %cst_11 : f32 to vector<8x256xf32>
    %16 = arith.maximumf %14, %15 : vector<8x256xf32>
    %17 = arith.truncf %16 : vector<8x256xf32> to vector<8x256xbf16>
    %c0_12 = arith.constant 0 : index
    %c0_13 = arith.constant 0 : index
    %18 = vector.load %arg6[%c0_12, %c0_13] : memref<256x128xbf16, #tpu.memory_space<vmem>>, vector<256x128xbf16>
    %cst_14 = arith.constant dense<0.000000e+00> : vector<8x128xf32>
    %19 = tpu.matmul %17, %18, %cst_14 {dimension_numbers = #tpu.dot_dimension_numbers<[1], [0], [0], [1], [0, 0, 1, 1], [], []>} : vector<8x256xbf16>, vector<256x128xbf16>, vector<8x128xf32> -> vector<8x128xf32>
    %c0_15 = arith.constant 0 : index
    %c0_16 = arith.constant 0 : index
    %20 = vector.load %arg7[%c0_15, %c0_16] : memref<1x128xf32, #tpu.memory_space<vmem>>, vector<1x128xf32>
    %21 = vector.broadcast %20 : vector<1x128xf32> to vector<8x128xf32>
    %22 = arith.addf %19, %21 : vector<8x128xf32>
    %cst_17 = arith.constant 0.000000e+00 : f32
    %23 = vector.broadcast %cst_17 : f32 to vector<8x128xf32>
    %24 = arith.maximumf %22, %23 : vector<8x128xf32>
    %25 = arith.truncf %24 : vector<8x128xf32> to vector<8x128xbf16>
    %c0_18 = arith.constant 0 : index
    %c0_19 = arith.constant 0 : index
    %26 = vector.load %arg8[%c0_18, %c0_19] : memref<128x128xbf16, #tpu.memory_space<vmem>>, vector<128x128xbf16>
    %cst_20 = arith.constant dense<0.000000e+00> : vector<8x128xf32>
    %27 = tpu.matmul %25, %26, %cst_20 {dimension_numbers = #tpu.dot_dimension_numbers<[1], [0], [0], [1], [0, 0, 1, 1], [], []>} : vector<8x128xbf16>, vector<128x128xbf16>, vector<8x128xf32> -> vector<8x128xf32>
    %c0_21 = arith.constant 0 : index
    %c0_22 = arith.constant 0 : index
    %28 = vector.load %arg9[%c0_21, %c0_22] : memref<1x128xf32, #tpu.memory_space<vmem>>, vector<1x128xf32>
    %29 = vector.broadcast %28 : vector<1x128xf32> to vector<8x128xf32>
    %30 = arith.addf %27, %29 : vector<8x128xf32>
    %c0_23 = arith.constant 0 : index
    %c0_24 = arith.constant 0 : index
    %31 = vector.load %arg10[%c0_23, %c0_24] : memref<8x128xf32, #tpu.memory_space<vmem>>, vector<8x128xf32>
    tpu.vector_store %arg10[%c0_23, %c0_24], %30 {strides = array<i32>} : memref<8x128xf32, #tpu.memory_space<vmem>>, vector<8x128xf32>,
    return
  }
  func.func @transform_0(%arg0: i32) -> (i32, i32) {
    %c0_i32 = arith.constant 0 : i32
    %c0_i32_0 = arith.constant 0 : i32
    return %arg0, %c0_i32 : i32, i32
  }
  func.func @transform_1(%arg0: i32) -> (i32, i32) {
    %c0_i32 = arith.constant 0 : i32
    %c0_i32_0 = arith.constant 0 : i32
    %c0_i32_1 = arith.constant 0 : i32
    return %c0_i32, %c0_i32_0 : i32, i32
  }
  func.func @transform_2(%arg0: i32) -> (i32, i32) {
    %c0_i32 = arith.constant 0 : i32
    %c0_i32_0 = arith.constant 0 : i32
    %c0_i32_1 = arith.constant 0 : i32
    return %c0_i32, %c0_i32_0 : i32, i32
  }
  func.func @transform_3(%arg0: i32) -> (i32, i32) {
    %c0_i32 = arith.constant 0 : i32
    %c0_i32_0 = arith.constant 0 : i32
    %c0_i32_1 = arith.constant 0 : i32
    return %c0_i32, %c0_i32_0 : i32, i32
  }
  func.func @transform_4(%arg0: i32) -> (i32, i32) {
    %c0_i32 = arith.constant 0 : i32
    %c0_i32_0 = arith.constant 0 : i32
    %c0_i32_1 = arith.constant 0 : i32
    return %c0_i32, %c0_i32_0 : i32, i32
  }
  func.func @transform_5(%arg0: i32) -> (i32, i32) {
    %c0_i32 = arith.constant 0 : i32
    %c0_i32_0 = arith.constant 0 : i32
    %c0_i32_1 = arith.constant 0 : i32
    return %c0_i32, %c0_i32_0 : i32, i32
  }
  func.func @transform_6(%arg0: i32) -> (i32, i32) {
    %c0_i32 = arith.constant 0 : i32
    %c0_i32_0 = arith.constant 0 : i32
    %c0_i32_1 = arith.constant 0 : i32
    return %c0_i32, %c0_i32_0 : i32, i32
  }
  func.func @transform_7(%arg0: i32) -> (i32, i32) {
    %c0_i32 = arith.constant 0 : i32
    %c0_i32_0 = arith.constant 0 : i32
    %c0_i32_1 = arith.constant 0 : i32
    return %c0_i32, %c0_i32_0 : i32, i32
  }
  func.func @transform_8(%arg0: i32) -> (i32, i32) {
    %c0_i32 = arith.constant 0 : i32
    %c0_i32_0 = arith.constant 0 : i32
    %c0_i32_1 = arith.constant 0 : i32
    return %c0_i32, %c0_i32_0 : i32, i32
  }
  func.func @transform_9(%arg0: i32) -> (i32, i32) {
    %c0_i32 = arith.constant 0 : i32
    %c0_i32_0 = arith.constant 0 : i32
    return %arg0, %c0_i32 : i32, i32
  }
}

</mosaic_0001>

<llo_original>
// kernel: tpu_custom_call.1
$region0: #{tpu_custom_call.1}
  #allocation0 [shape = 'u32[]', space=smem, size = 0x4, offset = 0x4, fixed_abs, tag = 'smem constant byte address 0x4 - core index']
  #allocation1 [shape = 'u32[144,128]{1,0:T(1,128)}', space=vmem, size = 0x12000, scoped, tag = 'internal scratch']
  %s0 = inlined_call_operand.hbm [shape: f32[8,784], index: 0, kind: input, shape index: {}]
  %s1 = inlined_call_operand.hbm [shape: bf16[784,512], index: 1, kind: input, shape index: {}]
  %s2 = inlined_call_operand.vmem [shape: f32[1,512], index: 2, kind: input, shape index: {}]
  %s3 = inlined_call_operand.hbm [shape: bf16[512,256], index: 3, kind: input, shape index: {}]
  %s4 = inlined_call_operand.vmem [shape: f32[1,256], index: 4, kind: input, shape index: {}]
  %s5 = inlined_call_operand.hbm [shape: bf16[256,128], index: 5, kind: input, shape index: {}]
  %s6 = inlined_call_operand.vmem [shape: f32[1,128], index: 6, kind: input, shape index: {}]
  %s7 = inlined_call_operand.hbm [shape: bf16[128,128], index: 7, kind: input, shape index: {}]
  %s8 = inlined_call_operand.vmem [shape: f32[1,128], index: 8, kind: input, shape index: {}]
  %s9 = inlined_call_operand.hbm [shape: f32[8,128], index: 9, kind: output, shape index: {}]
  %s10 = sld [smem:[#allocation0]]
  $region66: #{tpu_custom_call.1} parent=0
    _
  %s12 = ssub.s32 1, %s10
  %s13 = scalar_select 0, %s12, %s10
  $region1: #{tpu_custom_call.1} parent=0
    #allocation2 [shape = 'u8[28672]{0}', space=vmem, size = 0x7000, scoped, tag = 'input window, operand 0, single buffered']
    #allocation3 [shape = 's32[1]{0}', space=sflag, size = 0x4, scoped, tag = 'scoped memory for tpu_custom_call.1']
    #allocation4 [shape = 's32[1]{0}', space=sflag, size = 0x4, scoped, tag = 'scoped memory for tpu_custom_call.1']
    #allocation5 [shape = 'u8[802816]{0}', space=vmem, size = 0xc4000, scoped, tag = 'input window, operand 1, single buffered']
    #allocation6 [shape = 's32[1]{0}', space=sflag, size = 0x4, scoped, tag = 'scoped memory for tpu_custom_call.1']
    #allocation7 [shape = 'u8[262144]{0}', space=vmem, size = 0x40000, scoped, tag = 'input window, operand 3, single buffered']
    #allocation8 [shape = 'u8[65536]{0}', space=vmem, size = 0x10000, scoped, tag = 'input window, operand 5, single buffered']
    #allocation9 [shape = 's32[1]{0}', space=sflag, size = 0x4, scoped, tag = 'scoped memory for tpu_custom_call.1']
    #allocation10 [shape = 'u8[32768]{0}', space=vmem, size = 0x8000, scoped, tag = 'input window, operand 7, single buffered']
    #allocation11 [shape = 'u8[4096]{0}', space=vmem, size = 0x1000, scoped, tag = 'output window, operand 0, single buffered']
    %14 = vsyncpa [#allocation3], 0
    %15 = vsyncpa [#allocation6], 0
    %16 = vsyncpa [#allocation9], 0
    %17 = vsyncpa [#allocation4], 0
    // Predicated region
    $region2: #{tpu_custom_call.1} parent=1 // pred_check
      _
    $region3: #{tpu_custom_call.1} parent=1 // pred_check_branch
      %19 = sbr.rel (0) target = $region5
    $region4: #{tpu_custom_call.1} parent=1 // pred_region
      %s21 = ssub.s32 896, 896
      %22 = vsyncadd [#allocation3], %s21
      %s24 = sshll.u32 [#allocation2], 4
      %s25 = int_to_ptr.vmem [resolvable:$true] %s24
      %27 = dma.hbm_to_vmem [thread:$0]  %s0, 896, %s25, [#allocation3]
    $region5: #{tpu_custom_call.1} parent=1 // pred_fallthru
      _
    // Predicated region
    $region6: #{tpu_custom_call.1} parent=1 // pred_check
      _
    $region7: #{tpu_custom_call.1} parent=1 // pred_check_branch
      %29 = sbr.rel (0) target = $region9
    $region8: #{tpu_custom_call.1} parent=1 // pred_region
      %s31 = ssub.s32 25088, 25088
      %32 = vsyncadd [#allocation6], %s31
      %s33 = sshll.u32 [#allocation5], 4
      %s34 = int_to_ptr.vmem [resolvable:$true] %s33
      %39 = dma.hbm_to_vmem [thread:$0]  %s1, 25088, %s34, [#allocation6], 256, 256, 16
    $region9: #{tpu_custom_call.1} parent=1 // pred_fallthru
      _
    // Predicated region
    $region10: #{tpu_custom_call.1} parent=1 // pred_check
      _
    $region11: #{tpu_custom_call.1} parent=1 // pred_check_branch
      %41 = sbr.rel (0) target = $region13
    $region12: #{tpu_custom_call.1} parent=1 // pred_region
      _
    $region13: #{tpu_custom_call.1} parent=1 // pred_fallthru
      _
    // Predicated region
    $region14: #{tpu_custom_call.1} parent=1 // pred_check
      _
    $region15: #{tpu_custom_call.1} parent=1 // pred_check_branch
      %43 = sbr.rel (0) target = $region17
    $region16: #{tpu_custom_call.1} parent=1 // pred_region
      %s45 = ssub.s32 8192, 8192
      %46 = vsyncadd [#allocation6], %s45
      %s47 = sshll.u32 [#allocation7], 4
      %s48 = int_to_ptr.vmem [resolvable:$true] %s47
      %53 = dma.hbm_to_vmem [thread:$0]  %s3, 8192, %s48, [#allocation6], 128, 128, 8
    $region17: #{tpu_custom_call.1} parent=1 // pred_fallthru
      _
    // Predicated region
    $region18: #{tpu_custom_call.1} parent=1 // pred_check
      _
    $region19: #{tpu_custom_call.1} parent=1 // pred_check_branch
      %55 = sbr.rel (0) target = $region21
    $region20: #{tpu_custom_call.1} parent=1 // pred_region
      _
    $region21: #{tpu_custom_call.1} parent=1 // pred_fallthru
      _
    // Predicated region
    $region22: #{tpu_custom_call.1} parent=1 // pred_check
      _
    $region23: #{tpu_custom_call.1} parent=1 // pred_check_branch
      %57 = sbr.rel (0) target = $region25
    $region24: #{tpu_custom_call.1} parent=1 // pred_region
      %s59 = ssub.s32 2048, 2048
      %60 = vsyncadd [#allocation9], %s59
      %s61 = sshll.u32 [#allocation8], 4
      %s62 = int_to_ptr.vmem [resolvable:$true] %s61
      %67 = dma.hbm_to_vmem [thread:$0]  %s5, 2048, %s62, [#allocation9], 64, 64, 4
    $region25: #{tpu_custom_call.1} parent=1 // pred_fallthru
      _
    // Predicated region
    $region26: #{tpu_custom_call.1} parent=1 // pred_check
      _
    $region27: #{tpu_custom_call.1} parent=1 // pred_check_branch
      %69 = sbr.rel (0) target = $region29
    $region28: #{tpu_custom_call.1} parent=1 // pred_region
      _
    $region29: #{tpu_custom_call.1} parent=1 // pred_fallthru
      _
    // Predicated region
    $region30: #{tpu_custom_call.1} parent=1 // pred_check
      _
    $region31: #{tpu_custom_call.1} parent=1 // pred_check_branch
      %71 = sbr.rel (0) target = $region33
    $region32: #{tpu_custom_call.1} parent=1 // pred_region
      %s73 = ssub.s32 1024, 1024
      %74 = vsyncadd [#allocation9], %s73
      %s75 = sshll.u32 [#allocation10], 4
      %s76 = int_to_ptr.vmem [resolvable:$true] %s75
      %81 = dma.hbm_to_vmem [thread:$0]  %s7, 1024, %s76, [#allocation9], 64, 64, 4
    $region33: #{tpu_custom_call.1} parent=1 // pred_fallthru
      _
    // Predicated region
    $region34: #{tpu_custom_call.1} parent=1 // pred_check
      _
    $region35: #{tpu_custom_call.1} parent=1 // pred_check_branch
      %83 = sbr.rel (0) target = $region37
    $region36: #{tpu_custom_call.1} parent=1 // pred_region
      _
    $region37: #{tpu_custom_call.1} parent=1 // pred_fallthru
      _
    // Predicated region
    $region38: #{tpu_custom_call.1} parent=1 // pred_check
      _
    $region39: #{tpu_custom_call.1} parent=1 // pred_check_branch
      %85 = sbr.rel (0) target = $region41
    $region40: #{tpu_custom_call.1} parent=1 // pred_region
      %86 = dma.done [#allocation3], 896
    $region41: #{tpu_custom_call.1} parent=1 // pred_fallthru
      _
    // Predicated region
    $region42: #{tpu_custom_call.1} parent=1 // pred_check
      _
    $region43: #{tpu_custom_call.1} parent=1 // pred_check_branch
      %88 = sbr.rel (0) target = $region45
    $region44: #{tpu_custom_call.1} parent=1 // pred_region
      %89 = dma.done [#allocation6], 25088
    $region45: #{tpu_custom_call.1} parent=1 // pred_fallthru
      _
    // Predicated region
    $region46: #{tpu_custom_call.1} parent=1 // pred_check
      _
    $region47: #{tpu_custom_call.1} parent=1 // pred_check_branch
      %91 = sbr.rel (0) target = $region49
    $region48: #{tpu_custom_call.1} parent=1 // pred_region
      %92 = dma.done [#allocation6], 8192
    $region49: #{tpu_custom_call.1} parent=1 // pred_fallthru
      _
    // Predicated region
    $region50: #{tpu_custom_call.1} parent=1 // pred_check
      _
    $region51: #{tpu_custom_call.1} parent=1 // pred_check_branch
      %94 = sbr.rel (0) target = $region53
    $region52: #{tpu_custom_call.1} parent=1 // pred_region
      %95 = dma.done [#allocation9], 2048
    $region53: #{tpu_custom_call.1} parent=1 // pred_fallthru
      _
    // Predicated region
    $region54: #{tpu_custom_call.1} parent=1 // pred_check
      _
    $region55: #{tpu_custom_call.1} parent=1 // pred_check_branch
      %97 = sbr.rel (0) target = $region57
    $region56: #{tpu_custom_call.1} parent=1 // pred_region
      %98 = dma.done [#allocation9], 1024
    $region57: #{tpu_custom_call.1} parent=1 // pred_fallthru
      _
    %v100 = vld [vmem:[#allocation2] sm:$0xff]
    %v101 = vld [vmem:[#allocation2 + $0x8] sm:$0xff]
    %v102 = vld [vmem:[#allocation2 + $0x10] sm:$0xff]
    %v103 = vld [vmem:[#allocation2 + $0x18] sm:$0xff]
    %v104 = vld [vmem:[#allocation2 + $0x20] sm:$0xff]
    %v105 = vld [vmem:[#allocation2 + $0x28] sm:$0xff]
    %v106 = vld [vmem:[#allocation2 + $0x30] sm:$0xff]
    %v107 = vpack.c.bf16 %v100, %v100
    %v108 = vpack.c.bf16 %v101, %v101
    %v109 = vpack.c.bf16 %v102, %v102
    %v110 = vpack.c.bf16 %v103, %v103
    %v111 = vpack.c.bf16 %v104, %v104
    %v112 = vpack.c.bf16 %v105, %v105
    %v113 = vpack.c.bf16 %v106, %v106
    %v114 = vld [vmem:[#allocation5] sm:$0xff]
    %v115 = vld [vmem:[#allocation5 + $0x8] sm:$0xff]
    %v116 = vld [vmem:[#allocation5 + $0x10] sm:$0xff]
    %v117 = vld [vmem:[#allocation5 + $0x18] sm:$0xff]
    %v118 = vld [vmem:[#allocation5 + $0x20] sm:$0xff]
    %v119 = vld [vmem:[#allocation5 + $0x28] sm:$0xff]
    %v120 = vld [vmem:[#allocation5 + $0x30] sm:$0xff]
    %v121 = vld [vmem:[#allocation5 + $0x38] sm:$0xff]
    %v122 = vld [vmem:[#allocation5 + $0x40] sm:$0xff]
    %v123 = vld [vmem:[#allocation5 + $0x48] sm:$0xff]
    %v124 = vld [vmem:[#allocation5 + $0x50] sm:$0xff]
    %v125 = vld [vmem:[#allocation5 + $0x58] sm:$0xff]
    %v126 = vld [vmem:[#allocation5 + $0x60] sm:$0xff]
    %v127 = vld [vmem:[#allocation5 + $0x68] sm:$0xff]
    %v128 = vld [vmem:[#allocation5 + $0x70] sm:$0xff]
    %v129 = vld [vmem:[#allocation5 + $0x78] sm:$0xff]
    %v130 = vld [vmem:[#allocation5 + $0x80] sm:$0xff]
    %v131 = vld [vmem:[#allocation5 + $0x88] sm:$0xff]
    %v132 = vld [vmem:[#allocation5 + $0x90] sm:$0xff]
    %v133 = vld [vmem:[#allocation5 + $0x98] sm:$0xff]
    %v134 = vld [vmem:[#allocation5 + $0xa0] sm:$0xff]
    %v135 = vld [vmem:[#allocation5 + $0xa8] sm:$0xff]
    %v136 = vld [vmem:[#allocation5 + $0xb0] sm:$0xff]
    %v137 = vld [vmem:[#allocation5 + $0xb8] sm:$0xff]
    %v138 = vld [vmem:[#allocation5 + $0xc0] sm:$0xff]
    %v139 = vld [vmem:[#allocation5 + $0xc8] sm:$0xff]
    %v140 = vld [vmem:[#allocation5 + $0xd0] sm:$0xff]
    %v141 = vld [vmem:[#allocation5 + $0xd8] sm:$0xff]
    %v142 = vld [vmem:[#allocation5 + $0xe0] sm:$0xff]
    %v143 = vld [vmem:[#allocation5 + $0xe8] sm:$0xff]
    %v144 = vld [vmem:[#allocation5 + $0xf0] sm:$0xff]
    %v145 = vld [vmem:[#allocation5 + $0xf8] sm:$0xff]
    %v146 = vld [vmem:[#allocation5 + $0x100] sm:$0xff]
    %v147 = vld [vmem:[#allocation5 + $0x108] sm:$0xff]
    %v148 = vld [vmem:[#allocation5 + $0x110] sm:$0xff]
    %v149 = vld [vmem:[#allocation5 + $0x118] sm:$0xff]
    %v150 = vld [vmem:[#allocation5 + $0x120] sm:$0xff]
    %v151 = vld [vmem:[#allocation5 + $0x128] sm:$0xff]
    %v152 = vld [vmem:[#allocation5 + $0x130] sm:$0xff]
    %v153 = vld [vmem:[#allocation5 + $0x138] sm:$0xff]
    %v154 = vld [vmem:[#allocation5 + $0x140] sm:$0xff]
    %v155 = vld [vmem:[#allocation5 + $0x148] sm:$0xff]
    %v156 = vld [vmem:[#allocation5 + $0x150] sm:$0xff]
    %v157 = vld [vmem:[#allocation5 + $0x158] sm:$0xff]
    %v158 = vld [vmem:[#allocation5 + $0x160] sm:$0xff]
    %v159 = vld [vmem:[#allocation5 + $0x168] sm:$0xff]
    %v160 = vld [vmem:[#allocation5 + $0x170] sm:$0xff]
    %v161 = vld [vmem:[#allocation5 + $0x178] sm:$0xff]
    %v162 = vld [vmem:[#allocation5 + $0x180] sm:$0xff]
    %v163 = vld [vmem:[#allocation5 + $0x188] sm:$0xff]
    %v164 = vld [vmem:[#allocation5 + $0x190] sm:$0xff]
    %v165 = vld [vmem:[#allocation5 + $0x198] sm:$0xff]
    %v166 = vld [vmem:[#allocation5 + $0x1a0] sm:$0xff]
    %v167 = vld [vmem:[#allocation5 + $0x1a8] sm:$0xff]
    %v168 = vld [vmem:[#allocation5 + $0x1b0] sm:$0xff]
    %v169 = vld [vmem:[#allocation5 + $0x1b8] sm:$0xff]
    %v170 = vld [vmem:[#allocation5 + $0x1c0] sm:$0xff]
    %v171 = vld [vmem:[#allocation5 + $0x1c8] sm:$0xff]
    %v172 = vld [vmem:[#allocation5 + $0x1d0] sm:$0xff]
    %v173 = vld [vmem:[#allocation5 + $0x1d8] sm:$0xff]
    %v174 = vld [vmem:[#allocation5 + $0x1e0] sm:$0xff]
    %v175 = vld [vmem:[#allocation5 + $0x1e8] sm:$0xff]
    %v176 = vld [vmem:[#allocation5 + $0x1f0] sm:$0xff]
    %v177 = vld [vmem:[#allocation5 + $0x1f8] sm:$0xff]
    %v178 = vld [vmem:[#allocation5 + $0x200] sm:$0xff]
    %v179 = vld [vmem:[#allocation5 + $0x208] sm:$0xff]
    %v180 = vld [vmem:[#allocation5 + $0x210] sm:$0xff]
    %v181 = vld [vmem:[#allocation5 + $0x218] sm:$0xff]
    %v182 = vld [vmem:[#allocation5 + $0x220] sm:$0xff]
    %v183 = vld [vmem:[#allocation5 + $0x228] sm:$0xff]
    %v184 = vld [vmem:[#allocation5 + $0x230] sm:$0xff]
    %v185 = vld [vmem:[#allocation5 + $0x238] sm:$0xff]
    %v186 = vld [vmem:[#allocation5 + $0x240] sm:$0xff]
    %v187 = vld [vmem:[#allocation5 + $0x248] sm:$0xff]
    %v188 = vld [vmem:[#allocation5 + $0x250] sm:$0xff]
    %v189 = vld [vmem:[#allocation5 + $0x258] sm:$0xff]
    %v190 = vld [vmem:[#allocation5 + $0x260] sm:$0xff]
    %v191 = vld [vmem:[#allocation5 + $0x268] sm:$0xff]
    %v192 = vld [vmem:[#allocation5 + $0x270] sm:$0xff]
    %v193 = vld [vmem:[#allocation5 + $0x278] sm:$0xff]
    %v194 = vld [vmem:[#allocation5 + $0x280] sm:$0xff]
    %v195 = vld [vmem:[#allocation5 + $0x288] sm:$0xff]
    %v196 = vld [vmem:[#allocation5 + $0x290] sm:$0xff]
    %v197 = vld [vmem:[#allocation5 + $0x298] sm:$0xff]
    %v198 = vld [vmem:[#allocation5 + $0x2a0] sm:$0xff]
    %v199 = vld [vmem:[#allocation5 + $0x2a8] sm:$0xff]
    %v200 = vld [vmem:[#allocation5 + $0x2b0] sm:$0xff]
    %v201 = vld [vmem:[#allocation5 + $0x2b8] sm:$0xff]
    %v202 = vld [vmem:[#allocation5 + $0x2c0] sm:$0xff]
    %v203 = vld [vmem:[#allocation5 + $0x2c8] sm:$0xff]
    %v204 = vld [vmem:[#allocation5 + $0x2d0] sm:$0xff]
    %v205 = vld [vmem:[#allocation5 + $0x2d8] sm:$0xff]
    %v206 = vld [vmem:[#allocation5 + $0x2e0] sm:$0xff]
    %v207 = vld [vmem:[#allocation5 + $0x2e8] sm:$0xff]
    %v208 = vld [vmem:[#allocation5 + $0x2f0] sm:$0xff]
    %v209 = vld [vmem:[#allocation5 + $0x2f8] sm:$0xff]
    %v210 = vld [vmem:[#allocation5 + $0x300] sm:$0xff]
    %v211 = vld [vmem:[#allocation5 + $0x308] sm:$0xff]
    %v212 = vld [vmem:[#allocation5 + $0x310] sm:$0xff]
    %v213 = vld [vmem:[#allocation5 + $0x318] sm:$0xff]
    %v214 = vld [vmem:[#allocation5 + $0x320] sm:$0xff]
    %v215 = vld [vmem:[#allocation5 + $0x328] sm:$0xff]
    %v216 = vld [vmem:[#allocation5 + $0x330] sm:$0xff]
    %v217 = vld [vmem:[#allocation5 + $0x338] sm:$0xff]
    %v218 = vld [vmem:[#allocation5 + $0x340] sm:$0xff]
    %v219 = vld [vmem:[#allocation5 + $0x348] sm:$0xff]
    %v220 = vld [vmem:[#allocation5 + $0x350] sm:$0xff]
    %v221 = vld [vmem:[#allocation5 + $0x358] sm:$0xff]
    %v222 = vld [vmem:[#allocation5 + $0x360] sm:$0xff]
    %v223 = vld [vmem:[#allocation5 + $0x368] sm:$0xff]
    %v224 = vld [vmem:[#allocation5 + $0x370] sm:$0xff]
    %v225 = vld [vmem:[#allocation5 + $0x378] sm:$0xff]
    %v226 = vld [vmem:[#allocation5 + $0x380] sm:$0xff]
    %v227 = vld [vmem:[#allocation5 + $0x388] sm:$0xff]
    %v228 = vld [vmem:[#allocation5 + $0x390] sm:$0xff]
    %v229 = vld [vmem:[#allocation5 + $0x398] sm:$0xff]
    %v230 = vld [vmem:[#allocation5 + $0x3a0] sm:$0xff]
    %v231 = vld [vmem:[#allocation5 + $0x3a8] sm:$0xff]
    %v232 = vld [vmem:[#allocation5 + $0x3b0] sm:$0xff]
    %v233 = vld [vmem:[#allocation5 + $0x3b8] sm:$0xff]
    %v234 = vld [vmem:[#allocation5 + $0x3c0] sm:$0xff]
    %v235 = vld [vmem:[#allocation5 + $0x3c8] sm:$0xff]
    %v236 = vld [vmem:[#allocation5 + $0x3d0] sm:$0xff]
    %v237 = vld [vmem:[#allocation5 + $0x3d8] sm:$0xff]
    %v238 = vld [vmem:[#allocation5 + $0x3e0] sm:$0xff]
    %v239 = vld [vmem:[#allocation5 + $0x3e8] sm:$0xff]
    %v240 = vld [vmem:[#allocation5 + $0x3f0] sm:$0xff]
    %v241 = vld [vmem:[#allocation5 + $0x3f8] sm:$0xff]
    %v242 = vld [vmem:[#allocation5 + $0x400] sm:$0xff]
    %v243 = vld [vmem:[#allocation5 + $0x408] sm:$0xff]
    %v244 = vld [vmem:[#allocation5 + $0x410] sm:$0xff]
    %v245 = vld [vmem:[#allocation5 + $0x418] sm:$0xff]
    %v246 = vld [vmem:[#allocation5 + $0x420] sm:$0xff]
    %v247 = vld [vmem:[#allocation5 + $0x428] sm:$0xff]
    %v248 = vld [vmem:[#allocation5 + $0x430] sm:$0xff]
    %v249 = vld [vmem:[#allocation5 + $0x438] sm:$0xff]
    %v250 = vld [vmem:[#allocation5 + $0x440] sm:$0xff]
    %v251 = vld [vmem:[#allocation5 + $0x448] sm:$0xff]
    %v252 = vld [vmem:[#allocation5 + $0x450] sm:$0xff]
    %v253 = vld [vmem:[#allocation5 + $0x458] sm:$0xff]
    %v254 = vld [vmem:[#allocation5 + $0x460] sm:$0xff]
    %v255 = vld [vmem:[#allocation5 + $0x468] sm:$0xff]
    %v256 = vld [vmem:[#allocation5 + $0x470] sm:$0xff]
    %v257 = vld [vmem:[#allocation5 + $0x478] sm:$0xff]
    %v258 = vld [vmem:[#allocation5 + $0x480] sm:$0xff]
    %v259 = vld [vmem:[#allocation5 + $0x488] sm:$0xff]
    %v260 = vld [vmem:[#allocation5 + $0x490] sm:$0xff]
    %v261 = vld [vmem:[#allocation5 + $0x498] sm:$0xff]
    %v262 = vld [vmem:[#allocation5 + $0x4a0] sm:$0xff]
    %v263 = vld [vmem:[#allocation5 + $0x4a8] sm:$0xff]
    %v264 = vld [vmem:[#allocation5 + $0x4b0] sm:$0xff]
    %v265 = vld [vmem:[#allocation5 + $0x4b8] sm:$0xff]
    %v266 = vld [vmem:[#allocation5 + $0x4c0] sm:$0xff]
    %v267 = vld [vmem:[#allocation5 + $0x4c8] sm:$0xff]
    %v268 = vld [vmem:[#allocation5 + $0x4d0] sm:$0xff]
    %v269 = vld [vmem:[#allocation5 + $0x4d8] sm:$0xff]
    %v270 = vld [vmem:[#allocation5 + $0x4e0] sm:$0xff]
    %v271 = vld [vmem:[#allocation5 + $0x4e8] sm:$0xff]
    %v272 = vld [vmem:[#allocation5 + $0x4f0] sm:$0xff]
    %v273 = vld [vmem:[#allocation5 + $0x4f8] sm:$0xff]
    %v274 = vld [vmem:[#allocation5 + $0x500] sm:$0xff]
    %v275 = vld [vmem:[#allocation5 + $0x508] sm:$0xff]
    %v276 = vld [vmem:[#allocation5 + $0x510] sm:$0xff]
    %v277 = vld [vmem:[#allocation5 + $0x518] sm:$0xff]
    %v278 = vld [vmem:[#allocation5 + $0x520] sm:$0xff]
    %v279 = vld [vmem:[#allocation5 + $0x528] sm:$0xff]
    %v280 = vld [vmem:[#allocation5 + $0x530] sm:$0xff]
    %v281 = vld [vmem:[#allocation5 + $0x538] sm:$0xff]
    %v282 = vld [vmem:[#allocation5 + $0x540] sm:$0xff]
    %v283 = vld [vmem:[#allocation5 + $0x548] sm:$0xff]
    %v284 = vld [vmem:[#allocation5 + $0x550] sm:$0xff]
    %v285 = vld [vmem:[#allocation5 + $0x558] sm:$0xff]
    %v286 = vld [vmem:[#allocation5 + $0x560] sm:$0xff]
    %v287 = vld [vmem:[#allocation5 + $0x568] sm:$0xff]
    %v288 = vld [vmem:[#allocation5 + $0x570] sm:$0xff]
    %v289 = vld [vmem:[#allocation5 + $0x578] sm:$0xff]
    %v290 = vld [vmem:[#allocation5 + $0x580] sm:$0xff]
    %v291 = vld [vmem:[#allocation5 + $0x588] sm:$0xff]
    %v292 = vld [vmem:[#allocation5 + $0x590] sm:$0xff]
    %v293 = vld [vmem:[#allocation5 + $0x598] sm:$0xff]
    %v294 = vld [vmem:[#allocation5 + $0x5a0] sm:$0xff]
    %v295 = vld [vmem:[#allocation5 + $0x5a8] sm:$0xff]
    %v296 = vld [vmem:[#allocation5 + $0x5b0] sm:$0xff]
    %v297 = vld [vmem:[#allocation5 + $0x5b8] sm:$0xff]
    %v298 = vld [vmem:[#allocation5 + $0x5c0] sm:$0xff]
    %v299 = vld [vmem:[#allocation5 + $0x5c8] sm:$0xff]
    %v300 = vld [vmem:[#allocation5 + $0x5d0] sm:$0xff]
    %v301 = vld [vmem:[#allocation5 + $0x5d8] sm:$0xff]
    %v302 = vld [vmem:[#allocation5 + $0x5e0] sm:$0xff]
    %v303 = vld [vmem:[#allocation5 + $0x5e8] sm:$0xff]
    %v304 = vld [vmem:[#allocation5 + $0x5f0] sm:$0xff]
    %v305 = vld [vmem:[#allocation5 + $0x5f8] sm:$0xff]
    %v306 = vld [vmem:[#allocation5 + $0x600] sm:$0xff]
    %v307 = vld [vmem:[#allocation5 + $0x608] sm:$0xff]
    %v308 = vld [vmem:[#allocation5 + $0x610] sm:$0xff]
    %v309 = vld [vmem:[#allocation5 + $0x618] sm:$0xff]
    %v310 = vld [vmem:[%s2] sm:$0xf]
    %v312 = vlaneseq
    %v313 = vshrl.u32 %v312, 7
    %v314 = vsub.s32 0, %v313
    %v315 = vrot.slane %v310, %v314
    %v316 = vlaneseq
    %v317 = vshrl.u32 %v316, 7
    %v318 = vsub.s32 1, %v317
    %v319 = vrot.slane %v310, %v318
    %v320 = vlaneseq
    %v321 = vshrl.u32 %v320, 7
    %v322 = vsub.s32 2, %v321
    %v323 = vrot.slane %v310, %v322
    %v324 = vlaneseq
    %v325 = vshrl.u32 %v324, 7
    %v326 = vsub.s32 3, %v325
    %v327 = vrot.slane %v310, %v326
    %v528 = vunpack.c.l.b16 %v114
    %v529 = vunpack.c.h.b16 %v114
    %v530 = vunpack.c.l.b16 %v115
    %v531 = vunpack.c.h.b16 %v115
    %v532 = vunpack.c.l.b16 %v116
    %v533 = vunpack.c.h.b16 %v116
    %v534 = vunpack.c.l.b16 %v117
    %v535 = vunpack.c.h.b16 %v117
    %v536 = vunpack.c.l.b16 %v118
    %v537 = vunpack.c.h.b16 %v118
    %v538 = vunpack.c.l.b16 %v119
    %v539 = vunpack.c.h.b16 %v119
    %v540 = vunpack.c.l.b16 %v120
    %v541 = vunpack.c.h.b16 %v120
    %v542 = vunpack.c.l.b16 %v121
    %v543 = vunpack.c.h.b16 %v121
    %v544 = vunpack.c.l.b16 %v122
    %v545 = vunpack.c.h.b16 %v122
    %v546 = vunpack.c.l.b16 %v123
    %v547 = vunpack.c.h.b16 %v123
    %v548 = vunpack.c.l.b16 %v124
    %v549 = vunpack.c.h.b16 %v124
    %v550 = vunpack.c.l.b16 %v125
    %v551 = vunpack.c.h.b16 %v125
    %v552 = vunpack.c.l.b16 %v126
    %v553 = vunpack.c.h.b16 %v126
    %v554 = vunpack.c.l.b16 %v127
    %v555 = vunpack.c.h.b16 %v127
    %v556 = vunpack.c.l.b16 %v128
    %v557 = vunpack.c.h.b16 %v128
    %v558 = vunpack.c.l.b16 %v129
    %v559 = vunpack.c.h.b16 %v129
    %v560 = vunpack.c.l.b16 %v130
    %v561 = vunpack.c.h.b16 %v130
    %v562 = vunpack.c.l.b16 %v131
    %v563 = vunpack.c.h.b16 %v131
    %v564 = vunpack.c.l.b16 %v132
    %v565 = vunpack.c.h.b16 %v132
    %v566 = vunpack.c.l.b16 %v133
    %v567 = vunpack.c.h.b16 %v133
    %v568 = vunpack.c.l.b16 %v134
    %v569 = vunpack.c.h.b16 %v134
    %v570 = vunpack.c.l.b16 %v135
    %v571 = vunpack.c.h.b16 %v135
    %v572 = vunpack.c.l.b16 %v136
    %v573 = vunpack.c.h.b16 %v136
    %v574 = vunpack.c.l.b16 %v137
    %v575 = vunpack.c.h.b16 %v137
    %v576 = vunpack.c.l.b16 %v138
    %v577 = vunpack.c.h.b16 %v138
    %v578 = vunpack.c.l.b16 %v139
    %v579 = vunpack.c.h.b16 %v139
    %v580 = vunpack.c.l.b16 %v140
    %v581 = vunpack.c.h.b16 %v140
    %v582 = vunpack.c.l.b16 %v141
    %v583 = vunpack.c.h.b16 %v141
    %v584 = vunpack.c.l.b16 %v142
    %v585 = vunpack.c.h.b16 %v142
    %v586 = vunpack.c.l.b16 %v143
    %v587 = vunpack.c.h.b16 %v143
    %v588 = vunpack.c.l.b16 %v144
    %v589 = vunpack.c.h.b16 %v144
    %v590 = vunpack.c.l.b16 %v145
    %v591 = vunpack.c.h.b16 %v145
    %v592 = vunpack.c.l.b16 %v146
    %v593 = vunpack.c.h.b16 %v146
    %v594 = vunpack.c.l.b16 %v147
    %v595 = vunpack.c.h.b16 %v147
    %v596 = vunpack.c.l.b16 %v148
    %v597 = vunpack.c.h.b16 %v148
    %v598 = vunpack.c.l.b16 %v149
    %v599 = vunpack.c.h.b16 %v149
    %v600 = vunpack.c.l.b16 %v150
    %v601 = vunpack.c.h.b16 %v150
    %v602 = vunpack.c.l.b16 %v151
    %v603 = vunpack.c.h.b16 %v151
    %v604 = vunpack.c.l.b16 %v152
    %v605 = vunpack.c.h.b16 %v152
    %v606 = vunpack.c.l.b16 %v153
    %v607 = vunpack.c.h.b16 %v153
    %v608 = vunpack.c.l.b16 %v154
    %v609 = vunpack.c.h.b16 %v154
    %v610 = vunpack.c.l.b16 %v155
    %v611 = vunpack.c.h.b16 %v155
    %v612 = vunpack.c.l.b16 %v156
    %v613 = vunpack.c.h.b16 %v156
    %v614 = vunpack.c.l.b16 %v157
    %v615 = vunpack.c.h.b16 %v157
    %v616 = vunpack.c.l.b16 %v158
    %v617 = vunpack.c.h.b16 %v158
    %v618 = vunpack.c.l.b16 %v159
    %v619 = vunpack.c.h.b16 %v159
    %v620 = vunpack.c.l.b16 %v160
    %v621 = vunpack.c.h.b16 %v160
    %v622 = vunpack.c.l.b16 %v161
    %v623 = vunpack.c.h.b16 %v161
    %v624 = vunpack.c.l.b16 %v162
    %v625 = vunpack.c.h.b16 %v162
    %v626 = vunpack.c.l.b16 %v163
    %v627 = vunpack.c.h.b16 %v163
    %v628 = vunpack.c.l.b16 %v164
    %v629 = vunpack.c.h.b16 %v164
    %v630 = vunpack.c.l.b16 %v165
    %v631 = vunpack.c.h.b16 %v165
    %v632 = vunpack.c.l.b16 %v166
    %v633 = vunpack.c.h.b16 %v166
    %v634 = vunpack.c.l.b16 %v167
    %v635 = vunpack.c.h.b16 %v167
    %v636 = vunpack.c.l.b16 %v168
    %v637 = vunpack.c.h.b16 %v168
    %v638 = vunpack.c.l.b16 %v169
    %v639 = vunpack.c.h.b16 %v169
    %v640 = vunpack.c.l.b16 %v170
    %v641 = vunpack.c.h.b16 %v170
    %v642 = vunpack.c.l.b16 %v171
    %v643 = vunpack.c.h.b16 %v171
    %v644 = vunpack.c.l.b16 %v172
    %v645 = vunpack.c.h.b16 %v172
    %v646 = vunpack.c.l.b16 %v173
    %v647 = vunpack.c.h.b16 %v173
    %v648 = vunpack.c.l.b16 %v174
    %v649 = vunpack.c.h.b16 %v174
    %v650 = vunpack.c.l.b16 %v175
    %v651 = vunpack.c.h.b16 %v175
    %v652 = vunpack.c.l.b16 %v176
    %v653 = vunpack.c.h.b16 %v176
    %v654 = vunpack.c.l.b16 %v177
    %v655 = vunpack.c.h.b16 %v177
    %v656 = vunpack.c.l.b16 %v178
    %v657 = vunpack.c.h.b16 %v178
    %v658 = vunpack.c.l.b16 %v179
    %v659 = vunpack.c.h.b16 %v179
    %v660 = vunpack.c.l.b16 %v180
    %v661 = vunpack.c.h.b16 %v180
    %v662 = vunpack.c.l.b16 %v181
    %v663 = vunpack.c.h.b16 %v181
    %v664 = vunpack.c.l.b16 %v182
    %v665 = vunpack.c.h.b16 %v182
    %v666 = vunpack.c.l.b16 %v183
    %v667 = vunpack.c.h.b16 %v183
    %v668 = vunpack.c.l.b16 %v184
    %v669 = vunpack.c.h.b16 %v184
    %v670 = vunpack.c.l.b16 %v185
    %v671 = vunpack.c.h.b16 %v185
    %v672 = vunpack.c.l.b16 %v186
    %v673 = vunpack.c.h.b16 %v186
    %v674 = vunpack.c.l.b16 %v187
    %v675 = vunpack.c.h.b16 %v187
    %v676 = vunpack.c.l.b16 %v188
    %v677 = vunpack.c.h.b16 %v188
    %v678 = vunpack.c.l.b16 %v189
    %v679 = vunpack.c.h.b16 %v189
    %v680 = vunpack.c.l.b16 %v190
    %v681 = vunpack.c.h.b16 %v190
    %v682 = vunpack.c.l.b16 %v191
    %v683 = vunpack.c.h.b16 %v191
    %v684 = vunpack.c.l.b16 %v192
    %v685 = vunpack.c.h.b16 %v192
    %v686 = vunpack.c.l.b16 %v193
    %v687 = vunpack.c.h.b16 %v193
    %v688 = vunpack.c.l.b16 %v194
    %v689 = vunpack.c.h.b16 %v194
    %v690 = vunpack.c.l.b16 %v195
    %v691 = vunpack.c.h.b16 %v195
    %v692 = vunpack.c.l.b16 %v196
    %v693 = vunpack.c.h.b16 %v196
    %v694 = vunpack.c.l.b16 %v197
    %v695 = vunpack.c.h.b16 %v197
    %v696 = vunpack.c.l.b16 %v198
    %v697 = vunpack.c.h.b16 %v198
    %v698 = vunpack.c.l.b16 %v199
    %v699 = vunpack.c.h.b16 %v199
    %v700 = vunpack.c.l.b16 %v200
    %v701 = vunpack.c.h.b16 %v200
    %v702 = vunpack.c.l.b16 %v201
    %v703 = vunpack.c.h.b16 %v201
    %v704 = vunpack.c.l.b16 %v202
    %v705 = vunpack.c.h.b16 %v202
    %v706 = vunpack.c.l.b16 %v203
    %v707 = vunpack.c.h.b16 %v203
    %v708 = vunpack.c.l.b16 %v204
    %v709 = vunpack.c.h.b16 %v204
    %v710 = vunpack.c.l.b16 %v205
    %v711 = vunpack.c.h.b16 %v205
    %v712 = vunpack.c.l.b16 %v206
    %v713 = vunpack.c.h.b16 %v206
    %v714 = vunpack.c.l.b16 %v207
    %v715 = vunpack.c.h.b16 %v207
    %v716 = vunpack.c.l.b16 %v208
    %v717 = vunpack.c.h.b16 %v208
    %v718 = vunpack.c.l.b16 %v209
    %v719 = vunpack.c.h.b16 %v209
    %v720 = vunpack.c.l.b16 %v210
    %v721 = vunpack.c.h.b16 %v210
    %v722 = vunpack.c.l.b16 %v211
    %v723 = vunpack.c.h.b16 %v211
    %v724 = vunpack.c.l.b16 %v212
    %v725 = vunpack.c.h.b16 %v212
    %v726 = vunpack.c.l.b16 %v213
    %v727 = vunpack.c.h.b16 %v213
    %v728 = vunpack.c.l.b16 %v214
    %v729 = vunpack.c.h.b16 %v214
    %v730 = vunpack.c.l.b16 %v215
    %v731 = vunpack.c.h.b16 %v215
    %v732 = vunpack.c.l.b16 %v216
    %v733 = vunpack.c.h.b16 %v216
    %v734 = vunpack.c.l.b16 %v217
    %v735 = vunpack.c.h.b16 %v217
    %v736 = vunpack.c.l.b16 %v218
    %v737 = vunpack.c.h.b16 %v218
    %v738 = vunpack.c.l.b16 %v219
    %v739 = vunpack.c.h.b16 %v219
    %v740 = vunpack.c.l.b16 %v220
    %v741 = vunpack.c.h.b16 %v220
    %v742 = vunpack.c.l.b16 %v221
    %v743 = vunpack.c.h.b16 %v221
    %v744 = vunpack.c.l.b16 %v222
    %v745 = vunpack.c.h.b16 %v222
    %v746 = vunpack.c.l.b16 %v223
    %v747 = vunpack.c.h.b16 %v223
    %v748 = vunpack.c.l.b16 %v224
    %v749 = vunpack.c.h.b16 %v224
    %v750 = vunpack.c.l.b16 %v225
    %v751 = vunpack.c.h.b16 %v225
    %v752 = vunpack.c.l.b16 %v226
    %v753 = vunpack.c.h.b16 %v226
    %v754 = vunpack.c.l.b16 %v227
    %v755 = vunpack.c.h.b16 %v227
    %v756 = vunpack.c.l.b16 %v228
    %v757 = vunpack.c.h.b16 %v228
    %v758 = vunpack.c.l.b16 %v229
    %v759 = vunpack.c.h.b16 %v229
    %v760 = vunpack.c.l.b16 %v230
    %v761 = vunpack.c.h.b16 %v230
    %v762 = vunpack.c.l.b16 %v231
    %v763 = vunpack.c.h.b16 %v231
    %v764 = vunpack.c.l.b16 %v232
    %v765 = vunpack.c.h.b16 %v232
    %v766 = vunpack.c.l.b16 %v233
    %v767 = vunpack.c.h.b16 %v233
    %v768 = vunpack.c.l.b16 %v234
    %v769 = vunpack.c.h.b16 %v234
    %v770 = vunpack.c.l.b16 %v235
    %v771 = vunpack.c.h.b16 %v235
    %v772 = vunpack.c.l.b16 %v236
    %v773 = vunpack.c.h.b16 %v236
    %v774 = vunpack.c.l.b16 %v237
    %v775 = vunpack.c.h.b16 %v237
    %v776 = vunpack.c.l.b16 %v238
    %v777 = vunpack.c.h.b16 %v238
    %v778 = vunpack.c.l.b16 %v239
    %v779 = vunpack.c.h.b16 %v239
    %v780 = vunpack.c.l.b16 %v240
    %v781 = vunpack.c.h.b16 %v240
    %v782 = vunpack.c.l.b16 %v241
    %v783 = vunpack.c.h.b16 %v241
    %v784 = vunpack.c.l.b16 %v242
    %v785 = vunpack.c.h.b16 %v242
    %v786 = vunpack.c.l.b16 %v243
    %v787 = vunpack.c.h.b16 %v243
    %v788 = vunpack.c.l.b16 %v244
    %v789 = vunpack.c.h.b16 %v244
    %v790 = vunpack.c.l.b16 %v245
    %v791 = vunpack.c.h.b16 %v245
    %v792 = vunpack.c.l.b16 %v246
    %v793 = vunpack.c.h.b16 %v246
    %v794 = vunpack.c.l.b16 %v247
    %v795 = vunpack.c.h.b16 %v247
    %v796 = vunpack.c.l.b16 %v248
    %v797 = vunpack.c.h.b16 %v248
    %v798 = vunpack.c.l.b16 %v249
    %v799 = vunpack.c.h.b16 %v249
    %v800 = vunpack.c.l.b16 %v250
    %v801 = vunpack.c.h.b16 %v250
    %v802 = vunpack.c.l.b16 %v251
    %v803 = vunpack.c.h.b16 %v251
    %v804 = vunpack.c.l.b16 %v252
    %v805 = vunpack.c.h.b16 %v252
    %v806 = vunpack.c.l.b16 %v253
    %v807 = vunpack.c.h.b16 %v253
    %v808 = vunpack.c.l.b16 %v254
    %v809 = vunpack.c.h.b16 %v254
    %v810 = vunpack.c.l.b16 %v255
    %v811 = vunpack.c.h.b16 %v255
    %v812 = vunpack.c.l.b16 %v256
    %v813 = vunpack.c.h.b16 %v256
    %v814 = vunpack.c.l.b16 %v257
    %v815 = vunpack.c.h.b16 %v257
    %v816 = vunpack.c.l.b16 %v258
    %v817 = vunpack.c.h.b16 %v258
    %v818 = vunpack.c.l.b16 %v259
    %v819 = vunpack.c.h.b16 %v259
    %v820 = vunpack.c.l.b16 %v260
    %v821 = vunpack.c.h.b16 %v260
    %v822 = vunpack.c.l.b16 %v261
    %v823 = vunpack.c.h.b16 %v261
    %v824 = vunpack.c.l.b16 %v262
    %v825 = vunpack.c.h.b16 %v262
    %v826 = vunpack.c.l.b16 %v263
    %v827 = vunpack.c.h.b16 %v263
    %v828 = vunpack.c.l.b16 %v264
    %v829 = vunpack.c.h.b16 %v264
    %v830 = vunpack.c.l.b16 %v265
    %v831 = vunpack.c.h.b16 %v265
    %v832 = vunpack.c.l.b16 %v266
    %v833 = vunpack.c.h.b16 %v266
    %v834 = vunpack.c.l.b16 %v267
    %v835 = vunpack.c.h.b16 %v267
    %v836 = vunpack.c.l.b16 %v268
    %v837 = vunpack.c.h.b16 %v268
    %v838 = vunpack.c.l.b16 %v269
    %v839 = vunpack.c.h.b16 %v269
    %v840 = vunpack.c.l.b16 %v270
    %v841 = vunpack.c.h.b16 %v270
    %v842 = vunpack.c.l.b16 %v271
    %v843 = vunpack.c.h.b16 %v271
    %v844 = vunpack.c.l.b16 %v272
    %v845 = vunpack.c.h.b16 %v272
    %v846 = vunpack.c.l.b16 %v273
    %v847 = vunpack.c.h.b16 %v273
    %v848 = vunpack.c.l.b16 %v274
    %v849 = vunpack.c.h.b16 %v274
    %v850 = vunpack.c.l.b16 %v275
    %v851 = vunpack.c.h.b16 %v275
    %v852 = vunpack.c.l.b16 %v276
    %v853 = vunpack.c.h.b16 %v276
    %v854 = vunpack.c.l.b16 %v277
    %v855 = vunpack.c.h.b16 %v277
    %v856 = vunpack.c.l.b16 %v278
    %v857 = vunpack.c.h.b16 %v278
    %v858 = vunpack.c.l.b16 %v279
    %v859 = vunpack.c.h.b16 %v279
    %v860 = vunpack.c.l.b16 %v280
    %v861 = vunpack.c.h.b16 %v280
    %v862 = vunpack.c.l.b16 %v281
    %v863 = vunpack.c.h.b16 %v281
    %v864 = vunpack.c.l.b16 %v282
    %v865 = vunpack.c.h.b16 %v282
    %v866 = vunpack.c.l.b16 %v283
    %v867 = vunpack.c.h.b16 %v283
    %v868 = vunpack.c.l.b16 %v284
    %v869 = vunpack.c.h.b16 %v284
    %v870 = vunpack.c.l.b16 %v285
    %v871 = vunpack.c.h.b16 %v285
    %v872 = vunpack.c.l.b16 %v286
    %v873 = vunpack.c.h.b16 %v286
    %v874 = vunpack.c.l.b16 %v287
    %v875 = vunpack.c.h.b16 %v287
    %v876 = vunpack.c.l.b16 %v288
    %v877 = vunpack.c.h.b16 %v288
    %v878 = vunpack.c.l.b16 %v289
    %v879 = vunpack.c.h.b16 %v289
    %v880 = vunpack.c.l.b16 %v290
    %v881 = vunpack.c.h.b16 %v290
    %v882 = vunpack.c.l.b16 %v291
    %v883 = vunpack.c.h.b16 %v291
    %v884 = vunpack.c.l.b16 %v292
    %v885 = vunpack.c.h.b16 %v292
    %v886 = vunpack.c.l.b16 %v293
    %v887 = vunpack.c.h.b16 %v293
    %v888 = vunpack.c.l.b16 %v294
    %v889 = vunpack.c.h.b16 %v294
    %v890 = vunpack.c.l.b16 %v295
    %v891 = vunpack.c.h.b16 %v295
    %v892 = vunpack.c.l.b16 %v296
    %v893 = vunpack.c.h.b16 %v296
    %v894 = vunpack.c.l.b16 %v297
    %v895 = vunpack.c.h.b16 %v297
    %v896 = vunpack.c.l.b16 %v298
    %v897 = vunpack.c.h.b16 %v298
    %v898 = vunpack.c.l.b16 %v299
    %v899 = vunpack.c.h.b16 %v299
    %v900 = vunpack.c.l.b16 %v300
    %v901 = vunpack.c.h.b16 %v300
    %v902 = vunpack.c.l.b16 %v301
    %v903 = vunpack.c.h.b16 %v301
    %v904 = vunpack.c.l.b16 %v302
    %v905 = vunpack.c.h.b16 %v302
    %v906 = vunpack.c.l.b16 %v303
    %v907 = vunpack.c.h.b16 %v303
    %v908 = vunpack.c.l.b16 %v304
    %v909 = vunpack.c.h.b16 %v304
    %v910 = vunpack.c.l.b16 %v305
    %v911 = vunpack.c.h.b16 %v305
    %v912 = vunpack.c.l.b16 %v306
    %v913 = vunpack.c.h.b16 %v306
    %v914 = vunpack.c.l.b16 %v307
    %v915 = vunpack.c.h.b16 %v307
    %v916 = vunpack.c.l.b16 %v308
    %v917 = vunpack.c.h.b16 %v308
    %v918 = vunpack.c.l.b16 %v309
    %v919 = vunpack.c.h.b16 %v309
    %v920 = vpack.c.b16 %v532, %v528
    %v921 = vpack.c.b16 %v533, %v529
    %v922 = vpack.c.b16 %v534, %v530
    %v923 = vpack.c.b16 %v535, %v531
    %v924 = vpack.c.b16 %v540, %v536
    %v925 = vpack.c.b16 %v541, %v537
    %v926 = vpack.c.b16 %v542, %v538
    %v927 = vpack.c.b16 %v543, %v539
    %v928 = vpack.c.b16 %v548, %v544
    %v929 = vpack.c.b16 %v549, %v545
    %v930 = vpack.c.b16 %v550, %v546
    %v931 = vpack.c.b16 %v551, %v547
    %v932 = vpack.c.b16 %v556, %v552
    %v933 = vpack.c.b16 %v557, %v553
    %v934 = vpack.c.b16 %v558, %v554
    %v935 = vpack.c.b16 %v559, %v555
    %v936 = vpack.c.b16 %v564, %v560
    %v937 = vpack.c.b16 %v565, %v561
    %v938 = vpack.c.b16 %v566, %v562
    %v939 = vpack.c.b16 %v567, %v563
    %v940 = vpack.c.b16 %v572, %v568
    %v941 = vpack.c.b16 %v573, %v569
    %v942 = vpack.c.b16 %v574, %v570
    %v943 = vpack.c.b16 %v575, %v571
    %v944 = vpack.c.b16 %v580, %v576
    %v945 = vpack.c.b16 %v581, %v577
    %v946 = vpack.c.b16 %v582, %v578
    %v947 = vpack.c.b16 %v583, %v579
    %v948 = vpack.c.b16 %v588, %v584
    %v949 = vpack.c.b16 %v589, %v585
    %v950 = vpack.c.b16 %v590, %v586
    %v951 = vpack.c.b16 %v591, %v587
    %v952 = vpack.c.b16 %v596, %v592
    %v953 = vpack.c.b16 %v597, %v593
    %v954 = vpack.c.b16 %v598, %v594
    %v955 = vpack.c.b16 %v599, %v595
    %v956 = vpack.c.b16 %v604, %v600
    %v957 = vpack.c.b16 %v605, %v601
    %v958 = vpack.c.b16 %v606, %v602
    %v959 = vpack.c.b16 %v607, %v603
    %v960 = vpack.c.b16 %v612, %v608
    %v961 = vpack.c.b16 %v613, %v609
    %v962 = vpack.c.b16 %v614, %v610
    %v963 = vpack.c.b16 %v615, %v611
    %v964 = vpack.c.b16 %v620, %v616
    %v965 = vpack.c.b16 %v621, %v617
    %v966 = vpack.c.b16 %v622, %v618
    %v967 = vpack.c.b16 %v623, %v619
    %v968 = vpack.c.b16 %v628, %v624
    %v969 = vpack.c.b16 %v629, %v625
    %v970 = vpack.c.b16 %v630, %v626
    %v971 = vpack.c.b16 %v631, %v627
    %v972 = vpack.c.b16 %v636, %v632
    %v973 = vpack.c.b16 %v637, %v633
    %v974 = vpack.c.b16 %v638, %v634
    %v975 = vpack.c.b16 %v639, %v635
    %v976 = vpack.c.b16 %v644, %v640
    %v977 = vpack.c.b16 %v645, %v641
    %v978 = vpack.c.b16 %v646, %v642
    %v979 = vpack.c.b16 %v647, %v643
    %v980 = vpack.c.b16 %v652, %v648
    %v981 = vpack.c.b16 %v653, %v649
    %v982 = vpack.c.b16 %v654, %v650
    %v983 = vpack.c.b16 %v655, %v651
    %v984 = vpack.c.b16 %v660, %v656
    %v985 = vpack.c.b16 %v661, %v657
    %v986 = vpack.c.b16 %v662, %v658
    %v987 = vpack.c.b16 %v663, %v659
    %v988 = vpack.c.b16 %v668, %v664
    %v989 = vpack.c.b16 %v669, %v665
    %v990 = vpack.c.b16 %v670, %v666
    %v991 = vpack.c.b16 %v671, %v667
    %v992 = vpack.c.b16 %v676, %v672
    %v993 = vpack.c.b16 %v677, %v673
    %v994 = vpack.c.b16 %v678, %v674
    %v995 = vpack.c.b16 %v679, %v675
    %v996 = vpack.c.b16 %v684, %v680
    %v997 = vpack.c.b16 %v685, %v681
    %v998 = vpack.c.b16 %v686, %v682
    %v999 = vpack.c.b16 %v687, %v683
    %v1000 = vpack.c.b16 %v692, %v688
    %v1001 = vpack.c.b16 %v693, %v689
    %v1002 = vpack.c.b16 %v694, %v690
    %v1003 = vpack.c.b16 %v695, %v691
    %v1004 = vpack.c.b16 %v700, %v696
    %v1005 = vpack.c.b16 %v701, %v697
    %v1006 = vpack.c.b16 %v702, %v698
    %v1007 = vpack.c.b16 %v703, %v699
    %v1008 = vpack.c.b16 %v708, %v704
    %v1009 = vpack.c.b16 %v709, %v705
    %v1010 = vpack.c.b16 %v710, %v706
    %v1011 = vpack.c.b16 %v711, %v707
    %v1012 = vpack.c.b16 %v716, %v712
    %v1013 = vpack.c.b16 %v717, %v713
    %v1014 = vpack.c.b16 %v718, %v714
    %v1015 = vpack.c.b16 %v719, %v715
    %v1016 = vpack.c.b16 %v724, %v720
    %v1017 = vpack.c.b16 %v725, %v721
    %v1018 = vpack.c.b16 %v726, %v722
    %v1019 = vpack.c.b16 %v727, %v723
    %v1020 = vpack.c.b16 %v732, %v728
    %v1021 = vpack.c.b16 %v733, %v729
    %v1022 = vpack.c.b16 %v734, %v730
    %v1023 = vpack.c.b16 %v735, %v731
    %v1024 = vpack.c.b16 %v740, %v736
    %v1025 = vpack.c.b16 %v741, %v737
    %v1026 = vpack.c.b16 %v742, %v738
    %v1027 = vpack.c.b16 %v743, %v739
    %v1028 = vpack.c.b16 %v748, %v744
    %v1029 = vpack.c.b16 %v749, %v745
    %v1030 = vpack.c.b16 %v750, %v746
    %v1031 = vpack.c.b16 %v751, %v747
    %v1032 = vpack.c.b16 %v756, %v752
    %v1033 = vpack.c.b16 %v757, %v753
    %v1034 = vpack.c.b16 %v758, %v754
    %v1035 = vpack.c.b16 %v759, %v755
    %v1036 = vpack.c.b16 %v764, %v760
    %v1037 = vpack.c.b16 %v765, %v761
    %v1038 = vpack.c.b16 %v766, %v762
    %v1039 = vpack.c.b16 %v767, %v763
    %v1040 = vpack.c.b16 %v772, %v768
    %v1041 = vpack.c.b16 %v773, %v769
    %v1042 = vpack.c.b16 %v774, %v770
    %v1043 = vpack.c.b16 %v775, %v771
    %v1044 = vpack.c.b16 %v780, %v776
    %v1045 = vpack.c.b16 %v781, %v777
    %v1046 = vpack.c.b16 %v782, %v778
    %v1047 = vpack.c.b16 %v783, %v779
    %v1048 = vpack.c.b16 %v788, %v784
    %v1049 = vpack.c.b16 %v789, %v785
    %v1050 = vpack.c.b16 %v790, %v786
    %v1051 = vpack.c.b16 %v791, %v787
    %v1052 = vpack.c.b16 %v796, %v792
    %v1053 = vpack.c.b16 %v797, %v793
    %v1054 = vpack.c.b16 %v798, %v794
    %v1055 = vpack.c.b16 %v799, %v795
    %v1056 = vpack.c.b16 %v804, %v800
    %v1057 = vpack.c.b16 %v805, %v801
    %v1058 = vpack.c.b16 %v806, %v802
    %v1059 = vpack.c.b16 %v807, %v803
    %v1060 = vpack.c.b16 %v812, %v808
    %v1061 = vpack.c.b16 %v813, %v809
    %v1062 = vpack.c.b16 %v814, %v810
    %v1063 = vpack.c.b16 %v815, %v811
    %v1064 = vpack.c.b16 %v820, %v816
    %v1065 = vpack.c.b16 %v821, %v817
    %v1066 = vpack.c.b16 %v822, %v818
    %v1067 = vpack.c.b16 %v823, %v819
    %v1068 = vpack.c.b16 %v828, %v824
    %v1069 = vpack.c.b16 %v829, %v825
    %v1070 = vpack.c.b16 %v830, %v826
    %v1071 = vpack.c.b16 %v831, %v827
    %v1072 = vpack.c.b16 %v836, %v832
    %v1073 = vpack.c.b16 %v837, %v833
    %v1074 = vpack.c.b16 %v838, %v834
    %v1075 = vpack.c.b16 %v839, %v835
    %v1076 = vpack.c.b16 %v844, %v840
    %v1077 = vpack.c.b16 %v845, %v841
    %v1078 = vpack.c.b16 %v846, %v842
    %v1079 = vpack.c.b16 %v847, %v843
    %v1080 = vpack.c.b16 %v852, %v848
    %v1081 = vpack.c.b16 %v853, %v849
    %v1082 = vpack.c.b16 %v854, %v850
    %v1083 = vpack.c.b16 %v855, %v851
    %v1084 = vpack.c.b16 %v860, %v856
    %v1085 = vpack.c.b16 %v861, %v857
    %v1086 = vpack.c.b16 %v862, %v858
    %v1087 = vpack.c.b16 %v863, %v859
    %v1088 = vpack.c.b16 %v868, %v864
    %v1089 = vpack.c.b16 %v869, %v865
    %v1090 = vpack.c.b16 %v870, %v866
    %v1091 = vpack.c.b16 %v871, %v867
    %v1092 = vpack.c.b16 %v876, %v872
    %v1093 = vpack.c.b16 %v877, %v873
    %v1094 = vpack.c.b16 %v878, %v874
    %v1095 = vpack.c.b16 %v879, %v875
    %v1096 = vpack.c.b16 %v884, %v880
    %v1097 = vpack.c.b16 %v885, %v881
    %v1098 = vpack.c.b16 %v886, %v882
    %v1099 = vpack.c.b16 %v887, %v883
    %v1100 = vpack.c.b16 %v892, %v888
    %v1101 = vpack.c.b16 %v893, %v889
    %v1102 = vpack.c.b16 %v894, %v890
    %v1103 = vpack.c.b16 %v895, %v891
    %v1104 = vpack.c.b16 %v900, %v896
    %v1105 = vpack.c.b16 %v901, %v897
    %v1106 = vpack.c.b16 %v902, %v898
    %v1107 = vpack.c.b16 %v903, %v899
    %v1108 = vpack.c.b16 %v908, %v904
    %v1109 = vpack.c.b16 %v909, %v905
    %v1110 = vpack.c.b16 %v910, %v906
    %v1111 = vpack.c.b16 %v911, %v907
    %v1112 = vpack.c.b16 %v916, %v912
    %v1113 = vpack.c.b16 %v917, %v913
    %v1114 = vpack.c.b16 %v918, %v914
    %v1115 = vpack.c.b16 %v919, %v915
    %vm1312 = vcmask 130048
    %v1314 = vsel %vm1312, %v113, 0
    %1316 = vmatprep.subr.bf16.mxu0 %v921
    %1317 = vmatpush1.bf16.msra.mxu0 %v920
    %1318 = vmatprep.subr.bf16.mxu0 %v925
    %1319 = vmatpush1.bf16.msra.mxu0 %v924
    %1320 = vmatprep.subr.bf16.mxu0 %v929
    %1321 = vmatpush1.bf16.msra.mxu0 %v928
    %1322 = vmatprep.subr.bf16.mxu0 %v933
    %1323 = vmatpush1.bf16.msra.mxu0 %v932
    %1324 = vmatprep.subr.bf16.mxu0 %v937
    %1325 = vmatpush1.bf16.msra.mxu0 %v936
    %1326 = vmatprep.subr.bf16.mxu0 %v941
    %1327 = vmatpush1.bf16.msra.mxu0 %v940
    %1328 = vmatprep.subr.bf16.mxu0 %v945
    %1329 = vmatpush1.bf16.msra.mxu0 %v944
    %1330 = vmatprep.subr.bf16.mxu0 %v949
    %1331 = vmatpush1.bf16.msra.mxu0 %v948
    %1332 = vmatprep.subr.bf16.mxu0 %v953
    %1333 = vmatpush1.bf16.msra.mxu0 %v952
    %1334 = vmatprep.subr.bf16.mxu0 %v957
    %1335 = vmatpush1.bf16.msra.mxu0 %v956
    %1336 = vmatprep.subr.bf16.mxu0 %v961
    %1337 = vmatpush1.bf16.msra.mxu0 %v960
    %1338 = vmatprep.subr.bf16.mxu0 %v965
    %1339 = vmatpush1.bf16.msra.mxu0 %v964
    %1340 = vmatprep.subr.bf16.mxu0 %v969
    %1341 = vmatpush1.bf16.msra.mxu0 %v968
    %1342 = vmatprep.subr.bf16.mxu0 %v973
    %1343 = vmatpush1.bf16.msra.mxu0 %v972
    %1344 = vmatprep.subr.bf16.mxu0 %v977
    %1345 = vmatpush1.bf16.msra.mxu0 %v976
    %1346 = vmatprep.subr.bf16.mxu0 %v981
    %1347 = vmatpush1.bf16.msra.mxu0 %v980
    %1348 = vmatprep.mubr.bf16.mxu0 %v108
    %1349 = vmatmul.mubr.bf16.gmra.mrb[0].mxu0 %v107
    %v1350 = vpop.f32.mrb[0].mxu0
    %v1351 = vadd.f32 %v315, %v1350
    %v1352 = vpop.f32.mrb[0].mxu0
    %v1353 = vadd.f32 %v319, %v1352
    %v1354 = vpop.f32.mrb[0].mxu0
    %v1355 = vpop.f32.mrb[0].mxu0
    %1356 = vdwg.mxu0
    %1357 = vmatprep.subr.bf16.mxu0 %v985
    %1358 = vmatpush1.bf16.msra.mxu0 %v984
    %1359 = vmatprep.subr.bf16.mxu0 %v989
    %1360 = vmatpush1.bf16.msra.mxu0 %v988
    %1361 = vmatprep.subr.bf16.mxu0 %v993
    %1362 = vmatpush1.bf16.msra.mxu0 %v992
    %1363 = vmatprep.subr.bf16.mxu0 %v997
    %1364 = vmatpush1.bf16.msra.mxu0 %v996
    %1365 = vmatprep.subr.bf16.mxu0 %v1001
    %1366 = vmatpush1.bf16.msra.mxu0 %v1000
    %1367 = vmatprep.subr.bf16.mxu0 %v1005
    %1368 = vmatpush1.bf16.msra.mxu0 %v1004
    %1369 = vmatprep.subr.bf16.mxu0 %v1009
    %1370 = vmatpush1.bf16.msra.mxu0 %v1008
    %1371 = vmatprep.subr.bf16.mxu0 %v1013
    %1372 = vmatpush1.bf16.msra.mxu0 %v1012
    %1373 = vmatprep.subr.bf16.mxu0 %v1017
    %1374 = vmatpush1.bf16.msra.mxu0 %v1016
    %1375 = vmatprep.subr.bf16.mxu0 %v1021
    %1376 = vmatpush1.bf16.msra.mxu0 %v1020
    %1377 = vmatprep.subr.bf16.mxu0 %v1025
    %1378 = vmatpush1.bf16.msra.mxu0 %v1024
    %1379 = vmatprep.subr.bf16.mxu0 %v1029
    %1380 = vmatpush1.bf16.msra.mxu0 %v1028
    %1381 = vmatprep.subr.bf16.mxu0 %v1033
    %1382 = vmatpush1.bf16.msra.mxu0 %v1032
    %1383 = vmatprep.subr.bf16.mxu0 %v1037
    %1384 = vmatpush1.bf16.msra.mxu0 %v1036
    %1385 = vmatprep.subr.bf16.mxu0 %v1041
    %1386 = vmatpush1.bf16.msra.mxu0 %v1040
    %1387 = vmatprep.subr.bf16.mxu0 %v1045
    %1388 = vmatpush1.bf16.msra.mxu0 %v1044
    %1389 = vmatprep.mubr.bf16.mxu0 %v110
    %1390 = vmatmul.mubr.bf16.gmra.mrb[0].mxu0 %v109
    %v1391 = vpop.f32.mrb[0].mxu0
    %v1392 = vadd.f32 %v1351, %v1391
    %v1393 = vpop.f32.mrb[0].mxu0
    %v1394 = vadd.f32 %v1353, %v1393
    %v1395 = vpop.f32.mrb[0].mxu0
    %v1396 = vpop.f32.mrb[0].mxu0
    %1397 = vdwg.mxu0
    %1398 = vmatprep.subr.bf16.mxu0 %v1049
    %1399 = vmatpush1.bf16.msra.mxu0 %v1048
    %1400 = vmatprep.subr.bf16.mxu0 %v1053
    %1401 = vmatpush1.bf16.msra.mxu0 %v1052
    %1402 = vmatprep.subr.bf16.mxu0 %v1057
    %1403 = vmatpush1.bf16.msra.mxu0 %v1056
    %1404 = vmatprep.subr.bf16.mxu0 %v1061
    %1405 = vmatpush1.bf16.msra.mxu0 %v1060
    %1406 = vmatprep.subr.bf16.mxu0 %v1065
    %1407 = vmatpush1.bf16.msra.mxu0 %v1064
    %1408 = vmatprep.subr.bf16.mxu0 %v1069
    %1409 = vmatpush1.bf16.msra.mxu0 %v1068
    %1410 = vmatprep.subr.bf16.mxu0 %v1073
    %1411 = vmatpush1.bf16.msra.mxu0 %v1072
    %1412 = vmatprep.subr.bf16.mxu0 %v1077
    %1413 = vmatpush1.bf16.msra.mxu0 %v1076
    %1414 = vmatprep.subr.bf16.mxu0 %v1081
    %1415 = vmatpush1.bf16.msra.mxu0 %v1080
    %1416 = vmatprep.subr.bf16.mxu0 %v1085
    %1417 = vmatpush1.bf16.msra.mxu0 %v1084
    %1418 = vmatprep.subr.bf16.mxu0 %v1089
    %1419 = vmatpush1.bf16.msra.mxu0 %v1088
    %1420 = vmatprep.subr.bf16.mxu0 %v1093
    %1421 = vmatpush1.bf16.msra.mxu0 %v1092
    %1422 = vmatprep.subr.bf16.mxu0 %v1097
    %1423 = vmatpush1.bf16.msra.mxu0 %v1096
    %1424 = vmatprep.subr.bf16.mxu0 %v1101
    %1425 = vmatpush1.bf16.msra.mxu0 %v1100
    %1426 = vmatprep.subr.bf16.mxu0 %v1105
    %1427 = vmatpush1.bf16.msra.mxu0 %v1104
    %1428 = vmatprep.subr.bf16.mxu0 %v1109
    %1429 = vmatpush1.bf16.msra.mxu0 %v1108
    %1430 = vmatprep.mubr.bf16.mxu0 %v112
    %1431 = vmatmul.mubr.bf16.gmra.mrb[0].mxu0 %v111
    %v1432 = vpop.f32.mrb[0].mxu0
    %v1433 = vadd.f32 %v1392, %v1432
    %v1434 = vpop.f32.mrb[0].mxu0
    %v1435 = vadd.f32 %v1394, %v1434
    %v1436 = vpop.f32.mrb[0].mxu0
    %v1437 = vpop.f32.mrb[0].mxu0
    %1438 = vdwg.mxu0
    %1439 = vmatprep.subr.bf16.mxu0 %v1113
    %1440 = vmatpush1.bf16.msra.mxu0 %v1112
    %1441 = vmatprep.subr.bf16.mxu0 0
    %1442 = vmatpush1.bf16.msra.mxu0 0
    %1443 = vmatprep.subr.bf16.mxu0 0
    %1444 = vmatpush1.bf16.msra.mxu0 0
    %1445 = vmatprep.subr.bf16.mxu0 0
    %1446 = vmatpush1.bf16.msra.mxu0 0
    %1447 = vmatprep.subr.bf16.mxu0 0
    %1448 = vmatpush1.bf16.msra.mxu0 0
    %1449 = vmatprep.subr.bf16.mxu0 0
    %1450 = vmatpush1.bf16.msra.mxu0 0
    %1451 = vmatprep.subr.bf16.mxu0 0
    %1452 = vmatpush1.bf16.msra.mxu0 0
    %1453 = vmatprep.subr.bf16.mxu0 0
    %1454 = vmatpush1.bf16.msra.mxu0 0
    %1455 = vmatprep.subr.bf16.mxu0 0
    %1456 = vmatpush1.bf16.msra.mxu0 0
    %1457 = vmatprep.subr.bf16.mxu0 0
    %1458 = vmatpush1.bf16.msra.mxu0 0
    %1459 = vmatprep.subr.bf16.mxu0 0
    %1460 = vmatpush1.bf16.msra.mxu0 0
    %1461 = vmatprep.subr.bf16.mxu0 0
    %1462 = vmatpush1.bf16.msra.mxu0 0
    %1463 = vmatprep.subr.bf16.mxu0 0
    %1464 = vmatpush1.bf16.msra.mxu0 0
    %1465 = vmatprep.subr.bf16.mxu0 0
    %1466 = vmatpush1.bf16.msra.mxu0 0
    %1467 = vmatprep.subr.bf16.mxu0 0
    %1468 = vmatpush1.bf16.msra.mxu0 0
    %1469 = vmatprep.subr.bf16.mxu0 0
    %1470 = vmatpush1.bf16.msra.mxu0 0
    %1471 = vmatprep.mubr.bf16.mxu0 0
    %1472 = vmatmul.mubr.bf16.gmra.mrb[0].mxu0 %v1314
    %v1473 = vpop.f32.mrb[0].mxu0
    %v1474 = vadd.f32 %v1433, %v1473
    %v1475 = vpop.f32.mrb[0].mxu0
    %v1476 = vadd.f32 %v1435, %v1475
    %v1477 = vpop.f32.mrb[0].mxu0
    %v1478 = vpop.f32.mrb[0].mxu0
    %1479 = vdwg.mxu0
    %1480 = vmatprep.subr.bf16.mxu0 %v923
    %1481 = vmatpush1.bf16.msra.mxu0 %v922
    %1482 = vmatprep.subr.bf16.mxu0 %v927
    %1483 = vmatpush1.bf16.msra.mxu0 %v926
    %1484 = vmatprep.subr.bf16.mxu0 %v931
    %1485 = vmatpush1.bf16.msra.mxu0 %v930
    %1486 = vmatprep.subr.bf16.mxu0 %v935
    %1487 = vmatpush1.bf16.msra.mxu0 %v934
    %1488 = vmatprep.subr.bf16.mxu0 %v939
    %1489 = vmatpush1.bf16.msra.mxu0 %v938
    %1490 = vmatprep.subr.bf16.mxu0 %v943
    %1491 = vmatpush1.bf16.msra.mxu0 %v942
    %1492 = vmatprep.subr.bf16.mxu0 %v947
    %1493 = vmatpush1.bf16.msra.mxu0 %v946
    %1494 = vmatprep.subr.bf16.mxu0 %v951
    %1495 = vmatpush1.bf16.msra.mxu0 %v950
    %1496 = vmatprep.subr.bf16.mxu0 %v955
    %1497 = vmatpush1.bf16.msra.mxu0 %v954
    %1498 = vmatprep.subr.bf16.mxu0 %v959
    %1499 = vmatpush1.bf16.msra.mxu0 %v958
    %1500 = vmatprep.subr.bf16.mxu0 %v963
    %1501 = vmatpush1.bf16.msra.mxu0 %v962
    %1502 = vmatprep.subr.bf16.mxu0 %v967
    %1503 = vmatpush1.bf16.msra.mxu0 %v966
    %1504 = vmatprep.subr.bf16.mxu0 %v971
    %1505 = vmatpush1.bf16.msra.mxu0 %v970
    %1506 = vmatprep.subr.bf16.mxu0 %v975
    %1507 = vmatpush1.bf16.msra.mxu0 %v974
    %1508 = vmatprep.subr.bf16.mxu0 %v979
    %1509 = vmatpush1.bf16.msra.mxu0 %v978
    %1510 = vmatprep.subr.bf16.mxu0 %v983
    %1511 = vmatpush1.bf16.msra.mxu0 %v982
    %1512 = vmatprep.mubr.bf16.mxu0 %v108
    %1513 = vmatmul.mubr.bf16.gmra.mrb[0].mxu0 %v107
    %v1514 = vpop.f32.mrb[0].mxu0
    %v1515 = vadd.f32 %v323, %v1514
    %v1516 = vpop.f32.mrb[0].mxu0
    %v1517 = vadd.f32 %v327, %v1516
    %v1518 = vpop.f32.mrb[0].mxu0
    %v1519 = vpop.f32.mrb[0].mxu0
    %1520 = vdwg.mxu0
    %1521 = vmatprep.subr.bf16.mxu0 %v987
    %1522 = vmatpush1.bf16.msra.mxu0 %v986
    %1523 = vmatprep.subr.bf16.mxu0 %v991
    %1524 = vmatpush1.bf16.msra.mxu0 %v990
    %1525 = vmatprep.subr.bf16.mxu0 %v995
    %1526 = vmatpush1.bf16.msra.mxu0 %v994
    %1527 = vmatprep.subr.bf16.mxu0 %v999
    %1528 = vmatpush1.bf16.msra.mxu0 %v998
    %1529 = vmatprep.subr.bf16.mxu0 %v1003
    %1530 = vmatpush1.bf16.msra.mxu0 %v1002
    %1531 = vmatprep.subr.bf16.mxu0 %v1007
    %1532 = vmatpush1.bf16.msra.mxu0 %v1006
    %1533 = vmatprep.subr.bf16.mxu0 %v1011
    %1534 = vmatpush1.bf16.msra.mxu0 %v1010
    %1535 = vmatprep.subr.bf16.mxu0 %v1015
    %1536 = vmatpush1.bf16.msra.mxu0 %v1014
    %1537 = vmatprep.subr.bf16.mxu0 %v1019
    %1538 = vmatpush1.bf16.msra.mxu0 %v1018
    %1539 = vmatprep.subr.bf16.mxu0 %v1023
    %1540 = vmatpush1.bf16.msra.mxu0 %v1022
    %1541 = vmatprep.subr.bf16.mxu0 %v1027
    %1542 = vmatpush1.bf16.msra.mxu0 %v1026
    %1543 = vmatprep.subr.bf16.mxu0 %v1031
    %1544 = vmatpush1.bf16.msra.mxu0 %v1030
    %1545 = vmatprep.subr.bf16.mxu0 %v1035
    %1546 = vmatpush1.bf16.msra.mxu0 %v1034
    %1547 = vmatprep.subr.bf16.mxu0 %v1039
    %1548 = vmatpush1.bf16.msra.mxu0 %v1038
    %1549 = vmatprep.subr.bf16.mxu0 %v1043
    %1550 = vmatpush1.bf16.msra.mxu0 %v1042
    %1551 = vmatprep.subr.bf16.mxu0 %v1047
    %1552 = vmatpush1.bf16.msra.mxu0 %v1046
    %1553 = vmatprep.mubr.bf16.mxu0 %v110
    %1554 = vmatmul.mubr.bf16.gmra.mrb[0].mxu0 %v109
    %v1555 = vpop.f32.mrb[0].mxu0
    %v1556 = vadd.f32 %v1515, %v1555
    %v1557 = vpop.f32.mrb[0].mxu0
    %v1558 = vadd.f32 %v1517, %v1557
    %v1559 = vpop.f32.mrb[0].mxu0
    %v1560 = vpop.f32.mrb[0].mxu0
    %1561 = vdwg.mxu0
    %1562 = vmatprep.subr.bf16.mxu0 %v1051
    %1563 = vmatpush1.bf16.msra.mxu0 %v1050
    %1564 = vmatprep.subr.bf16.mxu0 %v1055
    %1565 = vmatpush1.bf16.msra.mxu0 %v1054
    %1566 = vmatprep.subr.bf16.mxu0 %v1059
    %1567 = vmatpush1.bf16.msra.mxu0 %v1058
    %1568 = vmatprep.subr.bf16.mxu0 %v1063
    %1569 = vmatpush1.bf16.msra.mxu0 %v1062
    %1570 = vmatprep.subr.bf16.mxu0 %v1067
    %1571 = vmatpush1.bf16.msra.mxu0 %v1066
    %1572 = vmatprep.subr.bf16.mxu0 %v1071
    %1573 = vmatpush1.bf16.msra.mxu0 %v1070
    %1574 = vmatprep.subr.bf16.mxu0 %v1075
    %1575 = vmatpush1.bf16.msra.mxu0 %v1074
    %1576 = vmatprep.subr.bf16.mxu0 %v1079
    %1577 = vmatpush1.bf16.msra.mxu0 %v1078
    %1578 = vmatprep.subr.bf16.mxu0 %v1083
    %1579 = vmatpush1.bf16.msra.mxu0 %v1082
    %1580 = vmatprep.subr.bf16.mxu0 %v1087
    %1581 = vmatpush1.bf16.msra.mxu0 %v1086
    %1582 = vmatprep.subr.bf16.mxu0 %v1091
    %1583 = vmatpush1.bf16.msra.mxu0 %v1090
    %1584 = vmatprep.subr.bf16.mxu0 %v1095
    %1585 = vmatpush1.bf16.msra.mxu0 %v1094
    %1586 = vmatprep.subr.bf16.mxu0 %v1099
    %1587 = vmatpush1.bf16.msra.mxu0 %v1098
    %1588 = vmatprep.subr.bf16.mxu0 %v1103
    %1589 = vmatpush1.bf16.msra.mxu0 %v1102
    %1590 = vmatprep.subr.bf16.mxu0 %v1107
    %1591 = vmatpush1.bf16.msra.mxu0 %v1106
    %1592 = vmatprep.subr.bf16.mxu0 %v1111
    %1593 = vmatpush1.bf16.msra.mxu0 %v1110
    %1594 = vmatprep.mubr.bf16.mxu0 %v112
    %1595 = vmatmul.mubr.bf16.gmra.mrb[0].mxu0 %v111
    %v1596 = vpop.f32.mrb[0].mxu0
    %v1597 = vadd.f32 %v1556, %v1596
    %v1598 = vpop.f32.mrb[0].mxu0
    %v1599 = vadd.f32 %v1558, %v1598
    %v1600 = vpop.f32.mrb[0].mxu0
    %v1601 = vpop.f32.mrb[0].mxu0
    %1602 = vdwg.mxu0
    %1603 = vmatprep.subr.bf16.mxu0 %v1115
    %1604 = vmatpush1.bf16.msra.mxu0 %v1114
    %1605 = vmatprep.subr.bf16.mxu0 0
    %1606 = vmatpush1.bf16.msra.mxu0 0
    %1607 = vmatprep.subr.bf16.mxu0 0
    %1608 = vmatpush1.bf16.msra.mxu0 0
    %1609 = vmatprep.subr.bf16.mxu0 0
    %1610 = vmatpush1.bf16.msra.mxu0 0
    %1611 = vmatprep.subr.bf16.mxu0 0
    %1612 = vmatpush1.bf16.msra.mxu0 0
    %1613 = vmatprep.subr.bf16.mxu0 0
    %1614 = vmatpush1.bf16.msra.mxu0 0
    %1615 = vmatprep.subr.bf16.mxu0 0
    %1616 = vmatpush1.bf16.msra.mxu0 0
    %1617 = vmatprep.subr.bf16.mxu0 0
    %1618 = vmatpush1.bf16.msra.mxu0 0
    %1619 = vmatprep.subr.bf16.mxu0 0
    %1620 = vmatpush1.bf16.msra.mxu0 0
    %1621 = vmatprep.subr.bf16.mxu0 0
    %1622 = vmatpush1.bf16.msra.mxu0 0
    %1623 = vmatprep.subr.bf16.mxu0 0
    %1624 = vmatpush1.bf16.msra.mxu0 0
    %1625 = vmatprep.subr.bf16.mxu0 0
    %1626 = vmatpush1.bf16.msra.mxu0 0
    %1627 = vmatprep.subr.bf16.mxu0 0
    %1628 = vmatpush1.bf16.msra.mxu0 0
    %1629 = vmatprep.subr.bf16.mxu0 0
    %1630 = vmatpush1.bf16.msra.mxu0 0
    %1631 = vmatprep.subr.bf16.mxu0 0
    %1632 = vmatpush1.bf16.msra.mxu0 0
    %1633 = vmatprep.subr.bf16.mxu0 0
    %1634 = vmatpush1.bf16.msra.mxu0 0
    %1635 = vmatprep.mubr.bf16.mxu0 0
    %1636 = vmatmul.mubr.bf16.gmra.mrb[0].mxu0 %v1314
    %v1637 = vpop.f32.mrb[0].mxu0
    %v1638 = vadd.f32 %v1597, %v1637
    %v1639 = vpop.f32.mrb[0].mxu0
    %v1640 = vadd.f32 %v1599, %v1639
    %v1641 = vpop.f32.mrb[0].mxu0
    %v1642 = vpop.f32.mrb[0].mxu0
    %1643 = vdwg.mxu0
    %v1644 = vmax.f32 %v1474, 0.0
    %v1645 = vmax.f32 %v1476, 0.0
    %v1646 = vmax.f32 %v1638, 0.0
    %v1647 = vmax.f32 %v1640, 0.0
    %v1648 = vpack.c.bf16 %v1644, %v1644
    %v1649 = vpack.c.bf16 %v1645, %v1645
    %v1650 = vpack.c.bf16 %v1646, %v1646
    %v1651 = vpack.c.bf16 %v1647, %v1647
    %v1652 = vld [vmem:[#allocation7] sm:$0xff]
    %v1653 = vld [vmem:[#allocation7 + $0x8] sm:$0xff]
    %v1654 = vld [vmem:[#allocation7 + $0x10] sm:$0xff]
    %v1655 = vld [vmem:[#allocation7 + $0x18] sm:$0xff]
    %v1656 = vld [vmem:[#allocation7 + $0x20] sm:$0xff]
    %v1657 = vld [vmem:[#allocation7 + $0x28] sm:$0xff]
    %v1658 = vld [vmem:[#allocation7 + $0x30] sm:$0xff]
    %v1659 = vld [vmem:[#allocation7 + $0x38] sm:$0xff]
    %v1660 = vld [vmem:[#allocation7 + $0x40] sm:$0xff]
    %v1661 = vld [vmem:[#allocation7 + $0x48] sm:$0xff]
    %v1662 = vld [vmem:[#allocation7 + $0x50] sm:$0xff]
    %v1663 = vld [vmem:[#allocation7 + $0x58] sm:$0xff]
    %v1664 = vld [vmem:[#allocation7 + $0x60] sm:$0xff]
    %v1665 = vld [vmem:[#allocation7 + $0x68] sm:$0xff]
    %v1666 = vld [vmem:[#allocation7 + $0x70] sm:$0xff]
    %v1667 = vld [vmem:[#allocation7 + $0x78] sm:$0xff]
    %v1668 = vld [vmem:[#allocation7 + $0x80] sm:$0xff]
    %v1669 = vld [vmem:[#allocation7 + $0x88] sm:$0xff]
    %v1670 = vld [vmem:[#allocation7 + $0x90] sm:$0xff]
    %v1671 = vld [vmem:[#allocation7 + $0x98] sm:$0xff]
    %v1672 = vld [vmem:[#allocation7 + $0xa0] sm:$0xff]
    %v1673 = vld [vmem:[#allocation7 + $0xa8] sm:$0xff]
    %v1674 = vld [vmem:[#allocation7 + $0xb0] sm:$0xff]
    %v1675 = vld [vmem:[#allocation7 + $0xb8] sm:$0xff]
    %v1676 = vld [vmem:[#allocation7 + $0xc0] sm:$0xff]
    %v1677 = vld [vmem:[#allocation7 + $0xc8] sm:$0xff]
    %v1678 = vld [vmem:[#allocation7 + $0xd0] sm:$0xff]
    %v1679 = vld [vmem:[#allocation7 + $0xd8] sm:$0xff]
    %v1680 = vld [vmem:[#allocation7 + $0xe0] sm:$0xff]
    %v1681 = vld [vmem:[#allocation7 + $0xe8] sm:$0xff]
    %v1682 = vld [vmem:[#allocation7 + $0xf0] sm:$0xff]
    %v1683 = vld [vmem:[#allocation7 + $0xf8] sm:$0xff]
    %v1684 = vld [vmem:[#allocation7 + $0x100] sm:$0xff]
    %v1685 = vld [vmem:[#allocation7 + $0x108] sm:$0xff]
    %v1686 = vld [vmem:[#allocation7 + $0x110] sm:$0xff]
    %v1687 = vld [vmem:[#allocation7 + $0x118] sm:$0xff]
    %v1688 = vld [vmem:[#allocation7 + $0x120] sm:$0xff]
    %v1689 = vld [vmem:[#allocation7 + $0x128] sm:$0xff]
    %v1690 = vld [vmem:[#allocation7 + $0x130] sm:$0xff]
    %v1691 = vld [vmem:[#allocation7 + $0x138] sm:$0xff]
    %v1692 = vld [vmem:[#allocation7 + $0x140] sm:$0xff]
    %v1693 = vld [vmem:[#allocation7 + $0x148] sm:$0xff]
    %v1694 = vld [vmem:[#allocation7 + $0x150] sm:$0xff]
    %v1695 = vld [vmem:[#allocation7 + $0x158] sm:$0xff]
    %v1696 = vld [vmem:[#allocation7 + $0x160] sm:$0xff]
    %v1697 = vld [vmem:[#allocation7 + $0x168] sm:$0xff]
    %v1698 = vld [vmem:[#allocation7 + $0x170] sm:$0xff]
    %v1699 = vld [vmem:[#allocation7 + $0x178] sm:$0xff]
    %v1700 = vld [vmem:[#allocation7 + $0x180] sm:$0xff]
    %v1701 = vld [vmem:[#allocation7 + $0x188] sm:$0xff]
    %v1702 = vld [vmem:[#allocation7 + $0x190] sm:$0xff]
    %v1703 = vld [vmem:[#allocation7 + $0x198] sm:$0xff]
    %v1704 = vld [vmem:[#allocation7 + $0x1a0] sm:$0xff]
    %v1705 = vld [vmem:[#allocation7 + $0x1a8] sm:$0xff]
    %v1706 = vld [vmem:[#allocation7 + $0x1b0] sm:$0xff]
    %v1707 = vld [vmem:[#allocation7 + $0x1b8] sm:$0xff]
    %v1708 = vld [vmem:[#allocation7 + $0x1c0] sm:$0xff]
    %v1709 = vld [vmem:[#allocation7 + $0x1c8] sm:$0xff]
    %v1710 = vld [vmem:[#allocation7 + $0x1d0] sm:$0xff]
    %v1711 = vld [vmem:[#allocation7 + $0x1d8] sm:$0xff]
    %v1712 = vld [vmem:[#allocation7 + $0x1e0] sm:$0xff]
    %v1713 = vld [vmem:[#allocation7 + $0x1e8] sm:$0xff]
    %v1714 = vld [vmem:[#allocation7 + $0x1f0] sm:$0xff]
    %v1715 = vld [vmem:[#allocation7 + $0x1f8] sm:$0xff]
    %v1716 = vld [vmem:[%s4] sm:$0x3]
    %v1718 = vlaneseq
    %v1719 = vshrl.u32 %v1718, 7
    %v1720 = vsub.s32 0, %v1719
    %v1721 = vrot.slane %v1716, %v1720
    %v1722 = vlaneseq
    %v1723 = vshrl.u32 %v1722, 7
    %v1724 = vsub.s32 1, %v1723
    %v1725 = vrot.slane %v1716, %v1724
    %v1792 = vunpack.c.l.b16 %v1652
    %v1793 = vunpack.c.h.b16 %v1652
    %v1794 = vunpack.c.l.b16 %v1653
    %v1795 = vunpack.c.h.b16 %v1653
    %v1796 = vunpack.c.l.b16 %v1654
    %v1797 = vunpack.c.h.b16 %v1654
    %v1798 = vunpack.c.l.b16 %v1655
    %v1799 = vunpack.c.h.b16 %v1655
    %v1800 = vunpack.c.l.b16 %v1656
    %v1801 = vunpack.c.h.b16 %v1656
    %v1802 = vunpack.c.l.b16 %v1657
    %v1803 = vunpack.c.h.b16 %v1657
    %v1804 = vunpack.c.l.b16 %v1658
    %v1805 = vunpack.c.h.b16 %v1658
    %v1806 = vunpack.c.l.b16 %v1659
    %v1807 = vunpack.c.h.b16 %v1659
    %v1808 = vunpack.c.l.b16 %v1660
    %v1809 = vunpack.c.h.b16 %v1660
    %v1810 = vunpack.c.l.b16 %v1661
    %v1811 = vunpack.c.h.b16 %v1661
    %v1812 = vunpack.c.l.b16 %v1662
    %v1813 = vunpack.c.h.b16 %v1662
    %v1814 = vunpack.c.l.b16 %v1663
    %v1815 = vunpack.c.h.b16 %v1663
    %v1816 = vunpack.c.l.b16 %v1664
    %v1817 = vunpack.c.h.b16 %v1664
    %v1818 = vunpack.c.l.b16 %v1665
    %v1819 = vunpack.c.h.b16 %v1665
    %v1820 = vunpack.c.l.b16 %v1666
    %v1821 = vunpack.c.h.b16 %v1666
    %v1822 = vunpack.c.l.b16 %v1667
    %v1823 = vunpack.c.h.b16 %v1667
    %v1824 = vunpack.c.l.b16 %v1668
    %v1825 = vunpack.c.h.b16 %v1668
    %v1826 = vunpack.c.l.b16 %v1669
    %v1827 = vunpack.c.h.b16 %v1669
    %v1828 = vunpack.c.l.b16 %v1670
    %v1829 = vunpack.c.h.b16 %v1670
    %v1830 = vunpack.c.l.b16 %v1671
    %v1831 = vunpack.c.h.b16 %v1671
    %v1832 = vunpack.c.l.b16 %v1672
    %v1833 = vunpack.c.h.b16 %v1672
    %v1834 = vunpack.c.l.b16 %v1673
    %v1835 = vunpack.c.h.b16 %v1673
    %v1836 = vunpack.c.l.b16 %v1674
    %v1837 = vunpack.c.h.b16 %v1674
    %v1838 = vunpack.c.l.b16 %v1675
    %v1839 = vunpack.c.h.b16 %v1675
    %v1840 = vunpack.c.l.b16 %v1676
    %v1841 = vunpack.c.h.b16 %v1676
    %v1842 = vunpack.c.l.b16 %v1677
    %v1843 = vunpack.c.h.b16 %v1677
    %v1844 = vunpack.c.l.b16 %v1678
    %v1845 = vunpack.c.h.b16 %v1678
    %v1846 = vunpack.c.l.b16 %v1679
    %v1847 = vunpack.c.h.b16 %v1679
    %v1848 = vunpack.c.l.b16 %v1680
    %v1849 = vunpack.c.h.b16 %v1680
    %v1850 = vunpack.c.l.b16 %v1681
    %v1851 = vunpack.c.h.b16 %v1681
    %v1852 = vunpack.c.l.b16 %v1682
    %v1853 = vunpack.c.h.b16 %v1682
    %v1854 = vunpack.c.l.b16 %v1683
    %v1855 = vunpack.c.h.b16 %v1683
    %v1856 = vunpack.c.l.b16 %v1684
    %v1857 = vunpack.c.h.b16 %v1684
    %v1858 = vunpack.c.l.b16 %v1685
    %v1859 = vunpack.c.h.b16 %v1685
    %v1860 = vunpack.c.l.b16 %v1686
    %v1861 = vunpack.c.h.b16 %v1686
    %v1862 = vunpack.c.l.b16 %v1687
    %v1863 = vunpack.c.h.b16 %v1687
    %v1864 = vunpack.c.l.b16 %v1688
    %v1865 = vunpack.c.h.b16 %v1688
    %v1866 = vunpack.c.l.b16 %v1689
    %v1867 = vunpack.c.h.b16 %v1689
    %v1868 = vunpack.c.l.b16 %v1690
    %v1869 = vunpack.c.h.b16 %v1690
    %v1870 = vunpack.c.l.b16 %v1691
    %v1871 = vunpack.c.h.b16 %v1691
    %v1872 = vunpack.c.l.b16 %v1692
    %v1873 = vunpack.c.h.b16 %v1692
    %v1874 = vunpack.c.l.b16 %v1693
    %v1875 = vunpack.c.h.b16 %v1693
    %v1876 = vunpack.c.l.b16 %v1694
    %v1877 = vunpack.c.h.b16 %v1694
    %v1878 = vunpack.c.l.b16 %v1695
    %v1879 = vunpack.c.h.b16 %v1695
    %v1880 = vunpack.c.l.b16 %v1696
    %v1881 = vunpack.c.h.b16 %v1696
    %v1882 = vunpack.c.l.b16 %v1697
    %v1883 = vunpack.c.h.b16 %v1697
    %v1884 = vunpack.c.l.b16 %v1698
    %v1885 = vunpack.c.h.b16 %v1698
    %v1886 = vunpack.c.l.b16 %v1699
    %v1887 = vunpack.c.h.b16 %v1699
    %v1888 = vunpack.c.l.b16 %v1700
    %v1889 = vunpack.c.h.b16 %v1700
    %v1890 = vunpack.c.l.b16 %v1701
    %v1891 = vunpack.c.h.b16 %v1701
    %v1892 = vunpack.c.l.b16 %v1702
    %v1893 = vunpack.c.h.b16 %v1702
    %v1894 = vunpack.c.l.b16 %v1703
    %v1895 = vunpack.c.h.b16 %v1703
    %v1896 = vunpack.c.l.b16 %v1704
    %v1897 = vunpack.c.h.b16 %v1704
    %v1898 = vunpack.c.l.b16 %v1705
    %v1899 = vunpack.c.h.b16 %v1705
    %v1900 = vunpack.c.l.b16 %v1706
    %v1901 = vunpack.c.h.b16 %v1706
    %v1902 = vunpack.c.l.b16 %v1707
    %v1903 = vunpack.c.h.b16 %v1707
    %v1904 = vunpack.c.l.b16 %v1708
    %v1905 = vunpack.c.h.b16 %v1708
    %v1906 = vunpack.c.l.b16 %v1709
    %v1907 = vunpack.c.h.b16 %v1709
    %v1908 = vunpack.c.l.b16 %v1710
    %v1909 = vunpack.c.h.b16 %v1710
    %v1910 = vunpack.c.l.b16 %v1711
    %v1911 = vunpack.c.h.b16 %v1711
    %v1912 = vunpack.c.l.b16 %v1712
    %v1913 = vunpack.c.h.b16 %v1712
    %v1914 = vunpack.c.l.b16 %v1713
    %v1915 = vunpack.c.h.b16 %v1713
    %v1916 = vunpack.c.l.b16 %v1714
    %v1917 = vunpack.c.h.b16 %v1714
    %v1918 = vunpack.c.l.b16 %v1715
    %v1919 = vunpack.c.h.b16 %v1715
    %v1920 = vpack.c.b16 %v1794, %v1792
    %v1921 = vpack.c.b16 %v1795, %v1793
    %v1922 = vpack.c.b16 %v1798, %v1796
    %v1923 = vpack.c.b16 %v1799, %v1797
    %v1924 = vpack.c.b16 %v1802, %v1800
    %v1925 = vpack.c.b16 %v1803, %v1801
    %v1926 = vpack.c.b16 %v1806, %v1804
    %v1927 = vpack.c.b16 %v1807, %v1805
    %v1928 = vpack.c.b16 %v1810, %v1808
    %v1929 = vpack.c.b16 %v1811, %v1809
    %v1930 = vpack.c.b16 %v1814, %v1812
    %v1931 = vpack.c.b16 %v1815, %v1813
    %v1932 = vpack.c.b16 %v1818, %v1816
    %v1933 = vpack.c.b16 %v1819, %v1817
    %v1934 = vpack.c.b16 %v1822, %v1820
    %v1935 = vpack.c.b16 %v1823, %v1821
    %v1936 = vpack.c.b16 %v1826, %v1824
    %v1937 = vpack.c.b16 %v1827, %v1825
    %v1938 = vpack.c.b16 %v1830, %v1828
    %v1939 = vpack.c.b16 %v1831, %v1829
    %v1940 = vpack.c.b16 %v1834, %v1832
    %v1941 = vpack.c.b16 %v1835, %v1833
    %v1942 = vpack.c.b16 %v1838, %v1836
    %v1943 = vpack.c.b16 %v1839, %v1837
    %v1944 = vpack.c.b16 %v1842, %v1840
    %v1945 = vpack.c.b16 %v1843, %v1841
    %v1946 = vpack.c.b16 %v1846, %v1844
    %v1947 = vpack.c.b16 %v1847, %v1845
    %v1948 = vpack.c.b16 %v1850, %v1848
    %v1949 = vpack.c.b16 %v1851, %v1849
    %v1950 = vpack.c.b16 %v1854, %v1852
    %v1951 = vpack.c.b16 %v1855, %v1853
    %v1952 = vpack.c.b16 %v1858, %v1856
    %v1953 = vpack.c.b16 %v1859, %v1857
    %v1954 = vpack.c.b16 %v1862, %v1860
    %v1955 = vpack.c.b16 %v1863, %v1861
    %v1956 = vpack.c.b16 %v1866, %v1864
    %v1957 = vpack.c.b16 %v1867, %v1865
    %v1958 = vpack.c.b16 %v1870, %v1868
    %v1959 = vpack.c.b16 %v1871, %v1869
    %v1960 = vpack.c.b16 %v1874, %v1872
    %v1961 = vpack.c.b16 %v1875, %v1873
    %v1962 = vpack.c.b16 %v1878, %v1876
    %v1963 = vpack.c.b16 %v1879, %v1877
    %v1964 = vpack.c.b16 %v1882, %v1880
    %v1965 = vpack.c.b16 %v1883, %v1881
    %v1966 = vpack.c.b16 %v1886, %v1884
    %v1967 = vpack.c.b16 %v1887, %v1885
    %v1968 = vpack.c.b16 %v1890, %v1888
    %v1969 = vpack.c.b16 %v1891, %v1889
    %v1970 = vpack.c.b16 %v1894, %v1892
    %v1971 = vpack.c.b16 %v1895, %v1893
    %v1972 = vpack.c.b16 %v1898, %v1896
    %v1973 = vpack.c.b16 %v1899, %v1897
    %v1974 = vpack.c.b16 %v1902, %v1900
    %v1975 = vpack.c.b16 %v1903, %v1901
    %v1976 = vpack.c.b16 %v1906, %v1904
    %v1977 = vpack.c.b16 %v1907, %v1905
    %v1978 = vpack.c.b16 %v1910, %v1908
    %v1979 = vpack.c.b16 %v1911, %v1909
    %v1980 = vpack.c.b16 %v1914, %v1912
    %v1981 = vpack.c.b16 %v1915, %v1913
    %v1982 = vpack.c.b16 %v1918, %v1916
    %v1983 = vpack.c.b16 %v1919, %v1917
    %2048 = vmatprep.subr.bf16.mxu0 %v1921
    %2049 = vmatpush1.bf16.msra.mxu0 %v1920
    %2050 = vmatprep.subr.bf16.mxu0 %v1923
    %2051 = vmatpush1.bf16.msra.mxu0 %v1922
    %2052 = vmatprep.subr.bf16.mxu0 %v1925
    %2053 = vmatpush1.bf16.msra.mxu0 %v1924
    %2054 = vmatprep.subr.bf16.mxu0 %v1927
    %2055 = vmatpush1.bf16.msra.mxu0 %v1926
    %2056 = vmatprep.subr.bf16.mxu0 %v1929
    %2057 = vmatpush1.bf16.msra.mxu0 %v1928
    %2058 = vmatprep.subr.bf16.mxu0 %v1931
    %2059 = vmatpush1.bf16.msra.mxu0 %v1930
    %2060 = vmatprep.subr.bf16.mxu0 %v1933
    %2061 = vmatpush1.bf16.msra.mxu0 %v1932
    %2062 = vmatprep.subr.bf16.mxu0 %v1935
    %2063 = vmatpush1.bf16.msra.mxu0 %v1934
    %2064 = vmatprep.subr.bf16.mxu0 %v1937
    %2065 = vmatpush1.bf16.msra.mxu0 %v1936
    %2066 = vmatprep.subr.bf16.mxu0 %v1939
    %2067 = vmatpush1.bf16.msra.mxu0 %v1938
    %2068 = vmatprep.subr.bf16.mxu0 %v1941
    %2069 = vmatpush1.bf16.msra.mxu0 %v1940
    %2070 = vmatprep.subr.bf16.mxu0 %v1943
    %2071 = vmatpush1.bf16.msra.mxu0 %v1942
    %2072 = vmatprep.subr.bf16.mxu0 %v1945
    %2073 = vmatpush1.bf16.msra.mxu0 %v1944
    %2074 = vmatprep.subr.bf16.mxu0 %v1947
    %2075 = vmatpush1.bf16.msra.mxu0 %v1946
    %2076 = vmatprep.subr.bf16.mxu0 %v1949
    %2077 = vmatpush1.bf16.msra.mxu0 %v1948
    %2078 = vmatprep.subr.bf16.mxu0 %v1951
    %2079 = vmatpush1.bf16.msra.mxu0 %v1950
    %2080 = vmatprep.mubr.bf16.mxu0 %v1649
    %2081 = vmatmul.mubr.bf16.gmra.mrb[0].mxu0 %v1648
    %v2082 = vpop.f32.mrb[0].mxu0
    %v2083 = vadd.f32 %v1721, %v2082
    %v2084 = vpop.f32.mrb[0].mxu0
    %v2085 = vadd.f32 %v1725, %v2084
    %v2086 = vpop.f32.mrb[0].mxu0
    %v2087 = vpop.f32.mrb[0].mxu0
    %2088 = vdwg.mxu0
    %2089 = vmatprep.subr.bf16.mxu0 %v1953
    %2090 = vmatpush1.bf16.msra.mxu0 %v1952
    %2091 = vmatprep.subr.bf16.mxu0 %v1955
    %2092 = vmatpush1.bf16.msra.mxu0 %v1954
    %2093 = vmatprep.subr.bf16.mxu0 %v1957
    %2094 = vmatpush1.bf16.msra.mxu0 %v1956
    %2095 = vmatprep.subr.bf16.mxu0 %v1959
    %2096 = vmatpush1.bf16.msra.mxu0 %v1958
    %2097 = vmatprep.subr.bf16.mxu0 %v1961
    %2098 = vmatpush1.bf16.msra.mxu0 %v1960
    %2099 = vmatprep.subr.bf16.mxu0 %v1963
    %2100 = vmatpush1.bf16.msra.mxu0 %v1962
    %2101 = vmatprep.subr.bf16.mxu0 %v1965
    %2102 = vmatpush1.bf16.msra.mxu0 %v1964
    %2103 = vmatprep.subr.bf16.mxu0 %v1967
    %2104 = vmatpush1.bf16.msra.mxu0 %v1966
    %2105 = vmatprep.subr.bf16.mxu0 %v1969
    %2106 = vmatpush1.bf16.msra.mxu0 %v1968
    %2107 = vmatprep.subr.bf16.mxu0 %v1971
    %2108 = vmatpush1.bf16.msra.mxu0 %v1970
    %2109 = vmatprep.subr.bf16.mxu0 %v1973
    %2110 = vmatpush1.bf16.msra.mxu0 %v1972
    %2111 = vmatprep.subr.bf16.mxu0 %v1975
    %2112 = vmatpush1.bf16.msra.mxu0 %v1974
    %2113 = vmatprep.subr.bf16.mxu0 %v1977
    %2114 = vmatpush1.bf16.msra.mxu0 %v1976
    %2115 = vmatprep.subr.bf16.mxu0 %v1979
    %2116 = vmatpush1.bf16.msra.mxu0 %v1978
    %2117 = vmatprep.subr.bf16.mxu0 %v1981
    %2118 = vmatpush1.bf16.msra.mxu0 %v1980
    %2119 = vmatprep.subr.bf16.mxu0 %v1983
    %2120 = vmatpush1.bf16.msra.mxu0 %v1982
    %2121 = vmatprep.mubr.bf16.mxu0 %v1651
    %2122 = vmatmul.mubr.bf16.gmra.mrb[0].mxu0 %v1650
    %v2123 = vpop.f32.mrb[0].mxu0
    %v2124 = vadd.f32 %v2083, %v2123
    %v2125 = vpop.f32.mrb[0].mxu0
    %v2126 = vadd.f32 %v2085, %v2125
    %v2127 = vpop.f32.mrb[0].mxu0
    %v2128 = vpop.f32.mrb[0].mxu0
    %2129 = vdwg.mxu0
    %v2130 = vmax.f32 %v2124, 0.0
    %v2131 = vmax.f32 %v2126, 0.0
    %v2132 = vpack.c.bf16 %v2130, %v2130
    %v2133 = vpack.c.bf16 %v2131, %v2131
    %v2134 = vld [vmem:[#allocation8] sm:$0xf]
    %v2135 = vld [vmem:[#allocation8 + $0x4] sm:$0xf]
    %v2136 = vld [vmem:[#allocation8 + $0x8] sm:$0xf]
    %v2137 = vld [vmem:[#allocation8 + $0xc] sm:$0xf]
    %v2138 = vld [vmem:[#allocation8 + $0x10] sm:$0xf]
    %v2139 = vld [vmem:[#allocation8 + $0x14] sm:$0xf]
    %v2140 = vld [vmem:[#allocation8 + $0x18] sm:$0xf]
    %v2141 = vld [vmem:[#allocation8 + $0x1c] sm:$0xf]
    %v2142 = vld [vmem:[#allocation8 + $0x20] sm:$0xf]
    %v2143 = vld [vmem:[#allocation8 + $0x24] sm:$0xf]
    %v2144 = vld [vmem:[#allocation8 + $0x28] sm:$0xf]
    %v2145 = vld [vmem:[#allocation8 + $0x2c] sm:$0xf]
    %v2146 = vld [vmem:[#allocation8 + $0x30] sm:$0xf]
    %v2147 = vld [vmem:[#allocation8 + $0x34] sm:$0xf]
    %v2148 = vld [vmem:[#allocation8 + $0x38] sm:$0xf]
    %v2149 = vld [vmem:[#allocation8 + $0x3c] sm:$0xf]
    %v2150 = vld [vmem:[#allocation8 + $0x40] sm:$0xf]
    %v2151 = vld [vmem:[#allocation8 + $0x44] sm:$0xf]
    %v2152 = vld [vmem:[#allocation8 + $0x48] sm:$0xf]
    %v2153 = vld [vmem:[#allocation8 + $0x4c] sm:$0xf]
    %v2154 = vld [vmem:[#allocation8 + $0x50] sm:$0xf]
    %v2155 = vld [vmem:[#allocation8 + $0x54] sm:$0xf]
    %v2156 = vld [vmem:[#allocation8 + $0x58] sm:$0xf]
    %v2157 = vld [vmem:[#allocation8 + $0x5c] sm:$0xf]
    %v2158 = vld [vmem:[#allocation8 + $0x60] sm:$0xf]
    %v2159 = vld [vmem:[#allocation8 + $0x64] sm:$0xf]
    %v2160 = vld [vmem:[#allocation8 + $0x68] sm:$0xf]
    %v2161 = vld [vmem:[#allocation8 + $0x6c] sm:$0xf]
    %v2162 = vld [vmem:[#allocation8 + $0x70] sm:$0xf]
    %v2163 = vld [vmem:[#allocation8 + $0x74] sm:$0xf]
    %v2164 = vld [vmem:[#allocation8 + $0x78] sm:$0xf]
    %v2165 = vld [vmem:[#allocation8 + $0x7c] sm:$0xf]
    %v2166 = vld [vmem:[%s6] sm:$0x1]
    %v2168 = vlaneseq
    %v2169 = vshrl.u32 %v2168, 7
    %v2170 = vsub.s32 0, %v2169
    %v2171 = vrot.slane %v2166, %v2170
    %v2205 = vunpack.c.l.b16 %v2134
    %v2206 = vunpack.c.l.b16 %v2135
    %v2207 = vunpack.c.l.b16 %v2136
    %v2208 = vunpack.c.l.b16 %v2137
    %v2209 = vunpack.c.l.b16 %v2138
    %v2210 = vunpack.c.l.b16 %v2139
    %v2211 = vunpack.c.l.b16 %v2140
    %v2212 = vunpack.c.l.b16 %v2141
    %v2213 = vunpack.c.l.b16 %v2142
    %v2214 = vunpack.c.l.b16 %v2143
    %v2215 = vunpack.c.l.b16 %v2144
    %v2216 = vunpack.c.l.b16 %v2145
    %v2217 = vunpack.c.l.b16 %v2146
    %v2218 = vunpack.c.l.b16 %v2147
    %v2219 = vunpack.c.l.b16 %v2148
    %v2220 = vunpack.c.l.b16 %v2149
    %v2221 = vunpack.c.l.b16 %v2150
    %v2222 = vunpack.c.l.b16 %v2151
    %v2223 = vunpack.c.l.b16 %v2152
    %v2224 = vunpack.c.l.b16 %v2153
    %v2225 = vunpack.c.l.b16 %v2154
    %v2226 = vunpack.c.l.b16 %v2155
    %v2227 = vunpack.c.l.b16 %v2156
    %v2228 = vunpack.c.l.b16 %v2157
    %v2229 = vunpack.c.l.b16 %v2158
    %v2230 = vunpack.c.l.b16 %v2159
    %v2231 = vunpack.c.l.b16 %v2160
    %v2232 = vunpack.c.l.b16 %v2161
    %v2233 = vunpack.c.l.b16 %v2162
    %v2234 = vunpack.c.l.b16 %v2163
    %v2235 = vunpack.c.l.b16 %v2164
    %v2236 = vunpack.c.l.b16 %v2165
    %v2237 = vpack.c.b16 %v2206, %v2205
    %v2238 = vpack.c.b16 %v2208, %v2207
    %v2239 = vpack.c.b16 %v2210, %v2209
    %v2240 = vpack.c.b16 %v2212, %v2211
    %v2241 = vpack.c.b16 %v2214, %v2213
    %v2242 = vpack.c.b16 %v2216, %v2215
    %v2243 = vpack.c.b16 %v2218, %v2217
    %v2244 = vpack.c.b16 %v2220, %v2219
    %v2245 = vpack.c.b16 %v2222, %v2221
    %v2246 = vpack.c.b16 %v2224, %v2223
    %v2247 = vpack.c.b16 %v2226, %v2225
    %v2248 = vpack.c.b16 %v2228, %v2227
    %v2249 = vpack.c.b16 %v2230, %v2229
    %v2250 = vpack.c.b16 %v2232, %v2231
    %v2251 = vpack.c.b16 %v2234, %v2233
    %v2252 = vpack.c.b16 %v2236, %v2235
    %2269 = vmatprep.subr.bf16.mxu0 0
    %2270 = vmatpush1.bf16.msra.mxu0 %v2237
    %2271 = vmatprep.subr.bf16.mxu0 0
    %2272 = vmatpush1.bf16.msra.mxu0 %v2238
    %2273 = vmatprep.subr.bf16.mxu0 0
    %2274 = vmatpush1.bf16.msra.mxu0 %v2239
    %2275 = vmatprep.subr.bf16.mxu0 0
    %2276 = vmatpush1.bf16.msra.mxu0 %v2240
    %2277 = vmatprep.subr.bf16.mxu0 0
    %2278 = vmatpush1.bf16.msra.mxu0 %v2241
    %2279 = vmatprep.subr.bf16.mxu0 0
    %2280 = vmatpush1.bf16.msra.mxu0 %v2242
    %2281 = vmatprep.subr.bf16.mxu0 0
    %2282 = vmatpush1.bf16.msra.mxu0 %v2243
    %2283 = vmatprep.subr.bf16.mxu0 0
    %2284 = vmatpush1.bf16.msra.mxu0 %v2244
    %2285 = vmatprep.subr.bf16.mxu0 0
    %2286 = vmatpush1.bf16.msra.mxu0 %v2245
    %2287 = vmatprep.subr.bf16.mxu0 0
    %2288 = vmatpush1.bf16.msra.mxu0 %v2246
    %2289 = vmatprep.subr.bf16.mxu0 0
    %2290 = vmatpush1.bf16.msra.mxu0 %v2247
    %2291 = vmatprep.subr.bf16.mxu0 0
    %2292 = vmatpush1.bf16.msra.mxu0 %v2248
    %2293 = vmatprep.subr.bf16.mxu0 0
    %2294 = vmatpush1.bf16.msra.mxu0 %v2249
    %2295 = vmatprep.subr.bf16.mxu0 0
    %2296 = vmatpush1.bf16.msra.mxu0 %v2250
    %2297 = vmatprep.subr.bf16.mxu0 0
    %2298 = vmatpush1.bf16.msra.mxu0 %v2251
    %2299 = vmatprep.subr.bf16.mxu0 0
    %2300 = vmatpush1.bf16.msra.mxu0 %v2252
    %2301 = vmatprep.mubr.bf16.mxu0 %v2133
    %2302 = vmatmul.mubr.bf16.gmra.mrb[0].mxu0 %v2132
    %v2303 = vpop.f32.mrb[0].mxu0
    %v2304 = vadd.f32 %v2171, %v2303
    %v2305 = vpop.f32.mrb[0].mxu0
    %v2306 = vpop.f32.mrb[0].mxu0
    %v2307 = vpop.f32.mrb[0].mxu0
    %2308 = vdwg.mxu0
    %v2309 = vmax.f32 %v2304, 0.0
    %v2310 = vpack.c.bf16 %v2309, %v2309
    %v2311 = vld [vmem:[#allocation10] sm:$0xf]
    %v2312 = vld [vmem:[#allocation10 + $0x4] sm:$0xf]
    %v2313 = vld [vmem:[#allocation10 + $0x8] sm:$0xf]
    %v2314 = vld [vmem:[#allocation10 + $0xc] sm:$0xf]
    %v2315 = vld [vmem:[#allocation10 + $0x10] sm:$0xf]
    %v2316 = vld [vmem:[#allocation10 + $0x14] sm:$0xf]
    %v2317 = vld [vmem:[#allocation10 + $0x18] sm:$0xf]
    %v2318 = vld [vmem:[#allocation10 + $0x1c] sm:$0xf]
    %v2319 = vld [vmem:[#allocation10 + $0x20] sm:$0xf]
    %v2320 = vld [vmem:[#allocation10 + $0x24] sm:$0xf]
    %v2321 = vld [vmem:[#allocation10 + $0x28] sm:$0xf]
    %v2322 = vld [vmem:[#allocation10 + $0x2c] sm:$0xf]
    %v2323 = vld [vmem:[#allocation10 + $0x30] sm:$0xf]
    %v2324 = vld [vmem:[#allocation10 + $0x34] sm:$0xf]
    %v2325 = vld [vmem:[#allocation10 + $0x38] sm:$0xf]
    %v2326 = vld [vmem:[#allocation10 + $0x3c] sm:$0xf]
    %v2327 = vld [vmem:[%s8] sm:$0x1]
    %v2329 = vlaneseq
    %v2330 = vshrl.u32 %v2329, 7
    %v2331 = vsub.s32 0, %v2330
    %v2332 = vrot.slane %v2327, %v2331
    %v2350 = vunpack.c.l.b16 %v2311
    %v2351 = vunpack.c.l.b16 %v2312
    %v2352 = vunpack.c.l.b16 %v2313
    %v2353 = vunpack.c.l.b16 %v2314
    %v2354 = vunpack.c.l.b16 %v2315
    %v2355 = vunpack.c.l.b16 %v2316
    %v2356 = vunpack.c.l.b16 %v2317
    %v2357 = vunpack.c.l.b16 %v2318
    %v2358 = vunpack.c.l.b16 %v2319
    %v2359 = vunpack.c.l.b16 %v2320
    %v2360 = vunpack.c.l.b16 %v2321
    %v2361 = vunpack.c.l.b16 %v2322
    %v2362 = vunpack.c.l.b16 %v2323
    %v2363 = vunpack.c.l.b16 %v2324
    %v2364 = vunpack.c.l.b16 %v2325
    %v2365 = vunpack.c.l.b16 %v2326
    %v2366 = vpack.c.b16 %v2351, %v2350
    %v2367 = vpack.c.b16 %v2353, %v2352
    %v2368 = vpack.c.b16 %v2355, %v2354
    %v2369 = vpack.c.b16 %v2357, %v2356
    %v2370 = vpack.c.b16 %v2359, %v2358
    %v2371 = vpack.c.b16 %v2361, %v2360
    %v2372 = vpack.c.b16 %v2363, %v2362
    %v2373 = vpack.c.b16 %v2365, %v2364
    %2382 = vmatprep.subr.bf16.mxu0 0
    %2383 = vmatpush1.bf16.msra.mxu0 %v2366
    %2384 = vmatprep.subr.bf16.mxu0 0
    %2385 = vmatpush1.bf16.msra.mxu0 %v2367
    %2386 = vmatprep.subr.bf16.mxu0 0
    %2387 = vmatpush1.bf16.msra.mxu0 %v2368
    %2388 = vmatprep.subr.bf16.mxu0 0
    %2389 = vmatpush1.bf16.msra.mxu0 %v2369
    %2390 = vmatprep.subr.bf16.mxu0 0
    %2391 = vmatpush1.bf16.msra.mxu0 %v2370
    %2392 = vmatprep.subr.bf16.mxu0 0
    %2393 = vmatpush1.bf16.msra.mxu0 %v2371
    %2394 = vmatprep.subr.bf16.mxu0 0
    %2395 = vmatpush1.bf16.msra.mxu0 %v2372
    %2396 = vmatprep.subr.bf16.mxu0 0
    %2397 = vmatpush1.bf16.msra.mxu0 %v2373
    %2398 = vmatprep.subr.bf16.mxu0 0
    %2399 = vmatpush1.bf16.msra.mxu0 0
    %2400 = vmatprep.subr.bf16.mxu0 0
    %2401 = vmatpush1.bf16.msra.mxu0 0
    %2402 = vmatprep.subr.bf16.mxu0 0
    %2403 = vmatpush1.bf16.msra.mxu0 0
    %2404 = vmatprep.subr.bf16.mxu0 0
    %2405 = vmatpush1.bf16.msra.mxu0 0
    %2406 = vmatprep.subr.bf16.mxu0 0
    %2407 = vmatpush1.bf16.msra.mxu0 0
    %2408 = vmatprep.subr.bf16.mxu0 0
    %2409 = vmatpush1.bf16.msra.mxu0 0
    %2410 = vmatprep.subr.bf16.mxu0 0
    %2411 = vmatpush1.bf16.msra.mxu0 0
    %2412 = vmatprep.subr.bf16.mxu0 0
    %2413 = vmatpush1.bf16.msra.mxu0 0
    %2414 = vmatprep.mubr.bf16.mxu0 0
    %2415 = vmatmul.mubr.bf16.gmra.mrb[0].mxu0 %v2310
    %v2416 = vpop.f32.mrb[0].mxu0
    %v2417 = vadd.f32 %v2332, %v2416
    %v2418 = vpop.f32.mrb[0].mxu0
    %v2419 = vpop.f32.mrb[0].mxu0
    %v2420 = vpop.f32.mrb[0].mxu0
    %2421 = vdwg.mxu0
    %2422 = vst [vmem:[#allocation11] sm:$0xff] %v2417
    // Predicated region
    $region58: #{tpu_custom_call.1} parent=1 // pred_check
      _
    $region59: #{tpu_custom_call.1} parent=1 // pred_check_branch
      %2424 = sbr.rel (0) target = $region61
    $region60: #{tpu_custom_call.1} parent=1 // pred_region
      %s2426 = ssub.s32 128, 128
      %2427 = vsyncadd [#allocation4], %s2426
      %s2429 = sshll.u32 [#allocation11], 4
      %s2430 = int_to_ptr.vmem [resolvable:$true] %s2429
      %2432 = dma.vmem_to_hbm [thread:$0]  %s2430, 128, %s9, [#allocation4]
    $region61: #{tpu_custom_call.1} parent=1 // pred_fallthru
      _
    // Predicated region
    $region62: #{tpu_custom_call.1} parent=1 // pred_check
      _
    $region63: #{tpu_custom_call.1} parent=1 // pred_check_branch
      %2434 = sbr.rel (0) target = $region65
    $region64: #{tpu_custom_call.1} parent=1 // pred_region
      %2435 = dma.done [#allocation4], 128
    $region65: #{tpu_custom_call.1} parent=1 // pred_fallthru
      _
    %2436 = vsyncpa [#allocation3], 1
    %2437 = vsyncpa [#allocation6], 1
    %2438 = vsyncpa [#allocation9], 1
    %2439 = vsyncpa [#allocation4], 1

// kernel: tpu_custom_call.1
$region0: #{tpu_custom_call.1}
  #allocation0 [shape = 'u32[]', space=smem, size = 0x4, offset = 0x4, fixed_abs, tag = 'smem constant byte address 0x4 - core index']
  #allocation1 [shape = 'u32[144,128]{1,0:T(1,128)}', space=vmem, size = 0x12000, scoped, tag = 'internal scratch']
  %s0 = inlined_call_operand.hbm [shape: f32[8,784], index: 0, kind: input, shape index: {}]
  %s1 = inlined_call_operand.hbm [shape: bf16[784,512], index: 1, kind: input, shape index: {}]
  %s2 = inlined_call_operand.vmem [shape: f32[1,512], index: 2, kind: input, shape index: {}]
  %s3 = inlined_call_operand.hbm [shape: bf16[512,256], index: 3, kind: input, shape index: {}]
  %s4 = inlined_call_operand.vmem [shape: f32[1,256], index: 4, kind: input, shape index: {}]
  %s5 = inlined_call_operand.hbm [shape: bf16[256,128], index: 5, kind: input, shape index: {}]
  %s6 = inlined_call_operand.vmem [shape: f32[1,128], index: 6, kind: input, shape index: {}]
  %s7 = inlined_call_operand.hbm [shape: bf16[128,128], index: 7, kind: input, shape index: {}]
  %s8 = inlined_call_operand.vmem [shape: f32[1,128], index: 8, kind: input, shape index: {}]
  %s9 = inlined_call_operand.hbm [shape: f32[8,128], index: 9, kind: output, shape index: {}]
  %s10 = sld [smem:[#allocation0]]
  $region66: #{tpu_custom_call.1} parent=0
    _
  %s12 = ssub.s32 1, %s10
  %s13 = scalar_select 0, %s12, %s10
  $region1: #{tpu_custom_call.1} parent=0
    #allocation2 [shape = 'u8[28672]{0}', space=vmem, size = 0x7000, scoped, tag = 'input window, operand 0, single buffered']
    #allocation3 [shape = 's32[1]{0}', space=sflag, size = 0x4, scoped, tag = 'scoped memory for tpu_custom_call.1']
    #allocation4 [shape = 's32[1]{0}', space=sflag, size = 0x4, scoped, tag = 'scoped memory for tpu_custom_call.1']
    #allocation5 [shape = 'u8[802816]{0}', space=vmem, size = 0xc4000, scoped, tag = 'input window, operand 1, single buffered']
    #allocation6 [shape = 's32[1]{0}', space=sflag, size = 0x4, scoped, tag = 'scoped memory for tpu_custom_call.1']
    #allocation7 [shape = 'u8[262144]{0}', space=vmem, size = 0x40000, scoped, tag = 'input window, operand 3, single buffered']
    #allocation8 [shape = 'u8[65536]{0}', space=vmem, size = 0x10000, scoped, tag = 'input window, operand 5, single buffered']
    #allocation9 [shape = 's32[1]{0}', space=sflag, size = 0x4, scoped, tag = 'scoped memory for tpu_custom_call.1']
    #allocation10 [shape = 'u8[32768]{0}', space=vmem, size = 0x8000, scoped, tag = 'input window, operand 7, single buffered']
    #allocation11 [shape = 'u8[4096]{0}', space=vmem, size = 0x1000, scoped, tag = 'output window, operand 0, single buffered']
    %14 = vsyncpa [#allocation3], 0
    %15 = vsyncpa [#allocation6], 0
    %16 = vsyncpa [#allocation9], 0
    %17 = vsyncpa [#allocation4], 0
    // Predicated region
    $region2: #{tpu_custom_call.1} parent=1 // pred_check
      _
    $region3: #{tpu_custom_call.1} parent=1 // pred_check_branch
      %19 = sbr.rel (0) target = $region5
    $region4: #{tpu_custom_call.1} parent=1 // pred_region
      %s21 = ssub.s32 896, 896
      %22 = vsyncadd [#allocation3], %s21
      %s24 = sshll.u32 [#allocation2], 4
      %s25 = int_to_ptr.vmem [resolvable:$true] %s24
      %27 = dma.hbm_to_vmem [thread:$0]  %s0, 896, %s25, [#allocation3]
    $region5: #{tpu_custom_call.1} parent=1 // pred_fallthru
      _
    // Predicated region
    $region6: #{tpu_custom_call.1} parent=1 // pred_check
      _
    $region7: #{tpu_custom_call.1} parent=1 // pred_check_branch
      %29 = sbr.rel (0) target = $region9
    $region8: #{tpu_custom_call.1} parent=1 // pred_region
      %s31 = ssub.s32 25088, 25088
      %32 = vsyncadd [#allocation6], %s31
      %s33 = sshll.u32 [#allocation5], 4
      %s34 = int_to_ptr.vmem [resolvable:$true] %s33
      %39 = dma.hbm_to_vmem [thread:$0]  %s1, 25088, %s34, [#allocation6], 256, 256, 16
    $region9: #{tpu_custom_call.1} parent=1 // pred_fallthru
      _
    // Predicated region
    $region10: #{tpu_custom_call.1} parent=1 // pred_check
      _
    $region11: #{tpu_custom_call.1} parent=1 // pred_check_branch
      %41 = sbr.rel (0) target = $region13
    $region12: #{tpu_custom_call.1} parent=1 // pred_region
      _
    $region13: #{tpu_custom_call.1} parent=1 // pred_fallthru
      _
    // Predicated region
    $region14: #{tpu_custom_call.1} parent=1 // pred_check
      _
    $region15: #{tpu_custom_call.1} parent=1 // pred_check_branch
      %43 = sbr.rel (0) target = $region17
    $region16: #{tpu_custom_call.1} parent=1 // pred_region
      %s45 = ssub.s32 8192, 8192
      %46 = vsyncadd [#allocation6], %s45
      %s47 = sshll.u32 [#allocation7], 4
      %s48 = int_to_ptr.vmem [resolvable:$true] %s47
      %53 = dma.hbm_to_vmem [thread:$0]  %s3, 8192, %s48, [#allocation6], 128, 128, 8
    $region17: #{tpu_custom_call.1} parent=1 // pred_fallthru
      _
    // Predicated region
    $region18: #{tpu_custom_call.1} parent=1 // pred_check
      _
    $region19: #{tpu_custom_call.1} parent=1 // pred_check_branch
      %55 = sbr.rel (0) target = $region21
    $region20: #{tpu_custom_call.1} parent=1 // pred_region
      _
    $region21: #{tpu_custom_call.1} parent=1 // pred_fallthru
      _
    // Predicated region
    $region22: #{tpu_custom_call.1} parent=1 // pred_check
      _
    $region23: #{tpu_custom_call.1} parent=1 // pred_check_branch
      %57 = sbr.rel (0) target = $region25
    $region24: #{tpu_custom_call.1} parent=1 // pred_region
      %s59 = ssub.s32 2048, 2048
      %60 = vsyncadd [#allocation9], %s59
      %s61 = sshll.u32 [#allocation8], 4
      %s62 = int_to_ptr.vmem [resolvable:$true] %s61
      %67 = dma.hbm_to_vmem [thread:$0]  %s5, 2048, %s62, [#allocation9], 64, 64, 4
    $region25: #{tpu_custom_call.1} parent=1 // pred_fallthru
      _
    // Predicated region
    $region26: #{tpu_custom_call.1} parent=1 // pred_check
      _
    $region27: #{tpu_custom_call.1} parent=1 // pred_check_branch
      %69 = sbr.rel (0) target = $region29
    $region28: #{tpu_custom_call.1} parent=1 // pred_region
      _
    $region29: #{tpu_custom_call.1} parent=1 // pred_fallthru
      _
    // Predicated region
    $region30: #{tpu_custom_call.1} parent=1 // pred_check
      _
    $region31: #{tpu_custom_call.1} parent=1 // pred_check_branch
      %71 = sbr.rel (0) target = $region33
    $region32: #{tpu_custom_call.1} parent=1 // pred_region
      %s73 = ssub.s32 1024, 1024
      %74 = vsyncadd [#allocation9], %s73
      %s75 = sshll.u32 [#allocation10], 4
      %s76 = int_to_ptr.vmem [resolvable:$true] %s75
      %81 = dma.hbm_to_vmem [thread:$0]  %s7, 1024, %s76, [#allocation9], 64, 64, 4
    $region33: #{tpu_custom_call.1} parent=1 // pred_fallthru
      _
    // Predicated region
    $region34: #{tpu_custom_call.1} parent=1 // pred_check
      _
    $region35: #{tpu_custom_call.1} parent=1 // pred_check_branch
      %83 = sbr.rel (0) target = $region37
    $region36: #{tpu_custom_call.1} parent=1 // pred_region
      _
    $region37: #{tpu_custom_call.1} parent=1 // pred_fallthru
      _
    // Predicated region
    $region38: #{tpu_custom_call.1} parent=1 // pred_check
      _
    $region39: #{tpu_custom_call.1} parent=1 // pred_check_branch
      %85 = sbr.rel (0) target = $region41
    $region40: #{tpu_custom_call.1} parent=1 // pred_region
      %86 = dma.done [#allocation3], 896
    $region41: #{tpu_custom_call.1} parent=1 // pred_fallthru
      _
    // Predicated region
    $region42: #{tpu_custom_call.1} parent=1 // pred_check
      _
    $region43: #{tpu_custom_call.1} parent=1 // pred_check_branch
      %88 = sbr.rel (0) target = $region45
    $region44: #{tpu_custom_call.1} parent=1 // pred_region
      %89 = dma.done [#allocation6], 25088
    $region45: #{tpu_custom_call.1} parent=1 // pred_fallthru
      _
    // Predicated region
    $region46: #{tpu_custom_call.1} parent=1 // pred_check
      _
    $region47: #{tpu_custom_call.1} parent=1 // pred_check_branch
      %91 = sbr.rel (0) target = $region49
    $region48: #{tpu_custom_call.1} parent=1 // pred_region
      %92 = dma.done [#allocation6], 8192
    $region49: #{tpu_custom_call.1} parent=1 // pred_fallthru
      _
    // Predicated region
    $region50: #{tpu_custom_call.1} parent=1 // pred_check
      _
    $region51: #{tpu_custom_call.1} parent=1 // pred_check_branch
      %94 = sbr.rel (0) target = $region53
    $region52: #{tpu_custom_call.1} parent=1 // pred_region
      %95 = dma.done [#allocation9], 2048
    $region53: #{tpu_custom_call.1} parent=1 // pred_fallthru
      _
    // Predicated region
    $region54: #{tpu_custom_call.1} parent=1 // pred_check
      _
    $region55: #{tpu_custom_call.1} parent=1 // pred_check_branch
      %97 = sbr.rel (0) target = $region57
    $region56: #{tpu_custom_call.1} parent=1 // pred_region
      %98 = dma.done [#allocation9], 1024
    $region57: #{tpu_custom_call.1} parent=1 // pred_fallthru
      _
    %v100 = vld [vmem:[#allocation2] sm:$0xff]
    %v101 = vld [vmem:[#allocation2 + $0x8] sm:$0xff]
    %v102 = vld [vmem:[#allocation2 + $0x10] sm:$0xff]
    %v103 = vld [vmem:[#allocation2 + $0x18] sm:$0xff]
    %v104 = vld [vmem:[#allocation2 + $0x20] sm:$0xff]
    %v105 = vld [vmem:[#allocation2 + $0x28] sm:$0xff]
    %v106 = vld [vmem:[#allocation2 + $0x30] sm:$0xff]
    %v107 = vpack.c.bf16 %v100, %v100
    %v108 = vpack.c.bf16 %v101, %v101
    %v109 = vpack.c.bf16 %v102, %v102
    %v110 = vpack.c.bf16 %v103, %v103
    %v111 = vpack.c.bf16 %v104, %v104
    %v112 = vpack.c.bf16 %v105, %v105
    %v113 = vpack.c.bf16 %v106, %v106
    %v114 = vld [vmem:[#allocation5] sm:$0xff]
    %v115 = vld [vmem:[#allocation5 + $0x8] sm:$0xff]
    %v116 = vld [vmem:[#allocation5 + $0x10] sm:$0xff]
    %v117 = vld [vmem:[#allocation5 + $0x18] sm:$0xff]
    %v118 = vld [vmem:[#allocation5 + $0x20] sm:$0xff]
    %v119 = vld [vmem:[#allocation5 + $0x28] sm:$0xff]
    %v120 = vld [vmem:[#allocation5 + $0x30] sm:$0xff]
    %v121 = vld [vmem:[#allocation5 + $0x38] sm:$0xff]
    %v122 = vld [vmem:[#allocation5 + $0x40] sm:$0xff]
    %v123 = vld [vmem:[#allocation5 + $0x48] sm:$0xff]
    %v124 = vld [vmem:[#allocation5 + $0x50] sm:$0xff]
    %v125 = vld [vmem:[#allocation5 + $0x58] sm:$0xff]
    %v126 = vld [vmem:[#allocation5 + $0x60] sm:$0xff]
    %v127 = vld [vmem:[#allocation5 + $0x68] sm:$0xff]
    %v128 = vld [vmem:[#allocation5 + $0x70] sm:$0xff]
    %v129 = vld [vmem:[#allocation5 + $0x78] sm:$0xff]
    %v130 = vld [vmem:[#allocation5 + $0x80] sm:$0xff]
    %v131 = vld [vmem:[#allocation5 + $0x88] sm:$0xff]
    %v132 = vld [vmem:[#allocation5 + $0x90] sm:$0xff]
    %v133 = vld [vmem:[#allocation5 + $0x98] sm:$0xff]
    %v134 = vld [vmem:[#allocation5 + $0xa0] sm:$0xff]
    %v135 = vld [vmem:[#allocation5 + $0xa8] sm:$0xff]
    %v136 = vld [vmem:[#allocation5 + $0xb0] sm:$0xff]
    %v137 = vld [vmem:[#allocation5 + $0xb8] sm:$0xff]
    %v138 = vld [vmem:[#allocation5 + $0xc0] sm:$0xff]
    %v139 = vld [vmem:[#allocation5 + $0xc8] sm:$0xff]
    %v140 = vld [vmem:[#allocation5 + $0xd0] sm:$0xff]
    %v141 = vld [vmem:[#allocation5 + $0xd8] sm:$0xff]
    %v142 = vld [vmem:[#allocation5 + $0xe0] sm:$0xff]
    %v143 = vld [vmem:[#allocation5 + $0xe8] sm:$0xff]
    %v144 = vld [vmem:[#allocation5 + $0xf0] sm:$0xff]
    %v145 = vld [vmem:[#allocation5 + $0xf8] sm:$0xff]
    %v146 = vld [vmem:[#allocation5 + $0x100] sm:$0xff]
    %v147 = vld [vmem:[#allocation5 + $0x108] sm:$0xff]
    %v148 = vld [vmem:[#allocation5 + $0x110] sm:$0xff]
    %v149 = vld [vmem:[#allocation5 + $0x118] sm:$0xff]
    %v150 = vld [vmem:[#allocation5 + $0x120] sm:$0xff]
    %v151 = vld [vmem:[#allocation5 + $0x128] sm:$0xff]
    %v152 = vld [vmem:[#allocation5 + $0x130] sm:$0xff]
    %v153 = vld [vmem:[#allocation5 + $0x138] sm:$0xff]
    %v154 = vld [vmem:[#allocation5 + $0x140] sm:$0xff]
    %v155 = vld [vmem:[#allocation5 + $0x148] sm:$0xff]
    %v156 = vld [vmem:[#allocation5 + $0x150] sm:$0xff]
    %v157 = vld [vmem:[#allocation5 + $0x158] sm:$0xff]
    %v158 = vld [vmem:[#allocation5 + $0x160] sm:$0xff]
    %v159 = vld [vmem:[#allocation5 + $0x168] sm:$0xff]
    %v160 = vld [vmem:[#allocation5 + $0x170] sm:$0xff]
    %v161 = vld [vmem:[#allocation5 + $0x178] sm:$0xff]
    %v162 = vld [vmem:[#allocation5 + $0x180] sm:$0xff]
    %v163 = vld [vmem:[#allocation5 + $0x188] sm:$0xff]
    %v164 = vld [vmem:[#allocation5 + $0x190] sm:$0xff]
    %v165 = vld [vmem:[#allocation5 + $0x198] sm:$0xff]
    %v166 = vld [vmem:[#allocation5 + $0x1a0] sm:$0xff]
    %v167 = vld [vmem:[#allocation5 + $0x1a8] sm:$0xff]
    %v168 = vld [vmem:[#allocation5 + $0x1b0] sm:$0xff]
    %v169 = vld [vmem:[#allocation5 + $0x1b8] sm:$0xff]
    %v170 = vld [vmem:[#allocation5 + $0x1c0] sm:$0xff]
    %v171 = vld [vmem:[#allocation5 + $0x1c8] sm:$0xff]
    %v172 = vld [vmem:[#allocation5 + $0x1d0] sm:$0xff]
    %v173 = vld [vmem:[#allocation5 + $0x1d8] sm:$0xff]
    %v174 = vld [vmem:[#allocation5 + $0x1e0] sm:$0xff]
    %v175 = vld [vmem:[#allocation5 + $0x1e8] sm:$0xff]
    %v176 = vld [vmem:[#allocation5 + $0x1f0] sm:$0xff]
    %v177 = vld [vmem:[#allocation5 + $0x1f8] sm:$0xff]
    %v178 = vld [vmem:[#allocation5 + $0x200] sm:$0xff]
    %v179 = vld [vmem:[#allocation5 + $0x208] sm:$0xff]
    %v180 = vld [vmem:[#allocation5 + $0x210] sm:$0xff]
    %v181 = vld [vmem:[#allocation5 + $0x218] sm:$0xff]
    %v182 = vld [vmem:[#allocation5 + $0x220] sm:$0xff]
    %v183 = vld [vmem:[#allocation5 + $0x228] sm:$0xff]
    %v184 = vld [vmem:[#allocation5 + $0x230] sm:$0xff]
    %v185 = vld [vmem:[#allocation5 + $0x238] sm:$0xff]
    %v186 = vld [vmem:[#allocation5 + $0x240] sm:$0xff]
    %v187 = vld [vmem:[#allocation5 + $0x248] sm:$0xff]
    %v188 = vld [vmem:[#allocation5 + $0x250] sm:$0xff]
    %v189 = vld [vmem:[#allocation5 + $0x258] sm:$0xff]
    %v190 = vld [vmem:[#allocation5 + $0x260] sm:$0xff]
    %v191 = vld [vmem:[#allocation5 + $0x268] sm:$0xff]
    %v192 = vld [vmem:[#allocation5 + $0x270] sm:$0xff]
    %v193 = vld [vmem:[#allocation5 + $0x278] sm:$0xff]
    %v194 = vld [vmem:[#allocation5 + $0x280] sm:$0xff]
    %v195 = vld [vmem:[#allocation5 + $0x288] sm:$0xff]
    %v196 = vld [vmem:[#allocation5 + $0x290] sm:$0xff]
    %v197 = vld [vmem:[#allocation5 + $0x298] sm:$0xff]
    %v198 = vld [vmem:[#allocation5 + $0x2a0] sm:$0xff]
    %v199 = vld [vmem:[#allocation5 + $0x2a8] sm:$0xff]
    %v200 = vld [vmem:[#allocation5 + $0x2b0] sm:$0xff]
    %v201 = vld [vmem:[#allocation5 + $0x2b8] sm:$0xff]
    %v202 = vld [vmem:[#allocation5 + $0x2c0] sm:$0xff]
    %v203 = vld [vmem:[#allocation5 + $0x2c8] sm:$0xff]
    %v204 = vld [vmem:[#allocation5 + $0x2d0] sm:$0xff]
    %v205 = vld [vmem:[#allocation5 + $0x2d8] sm:$0xff]
    %v206 = vld [vmem:[#allocation5 + $0x2e0] sm:$0xff]
    %v207 = vld [vmem:[#allocation5 + $0x2e8] sm:$0xff]
    %v208 = vld [vmem:[#allocation5 + $0x2f0] sm:$0xff]
    %v209 = vld [vmem:[#allocation5 + $0x2f8] sm:$0xff]
    %v210 = vld [vmem:[#allocation5 + $0x300] sm:$0xff]
    %v211 = vld [vmem:[#allocation5 + $0x308] sm:$0xff]
    %v212 = vld [vmem:[#allocation5 + $0x310] sm:$0xff]
    %v213 = vld [vmem:[#allocation5 + $0x318] sm:$0xff]
    %v214 = vld [vmem:[#allocation5 + $0x320] sm:$0xff]
    %v215 = vld [vmem:[#allocation5 + $0x328] sm:$0xff]
    %v216 = vld [vmem:[#allocation5 + $0x330] sm:$0xff]
    %v217 = vld [vmem:[#allocation5 + $0x338] sm:$0xff]
    %v218 = vld [vmem:[#allocation5 + $0x340] sm:$0xff]
    %v219 = vld [vmem:[#allocation5 + $0x348] sm:$0xff]
    %v220 = vld [vmem:[#allocation5 + $0x350] sm:$0xff]
    %v221 = vld [vmem:[#allocation5 + $0x358] sm:$0xff]
    %v222 = vld [vmem:[#allocation5 + $0x360] sm:$0xff]
    %v223 = vld [vmem:[#allocation5 + $0x368] sm:$0xff]
    %v224 = vld [vmem:[#allocation5 + $0x370] sm:$0xff]
    %v225 = vld [vmem:[#allocation5 + $0x378] sm:$0xff]
    %v226 = vld [vmem:[#allocation5 + $0x380] sm:$0xff]
    %v227 = vld [vmem:[#allocation5 + $0x388] sm:$0xff]
    %v228 = vld [vmem:[#allocation5 + $0x390] sm:$0xff]
    %v229 = vld [vmem:[#allocation5 + $0x398] sm:$0xff]
    %v230 = vld [vmem:[#allocation5 + $0x3a0] sm:$0xff]
    %v231 = vld [vmem:[#allocation5 + $0x3a8] sm:$0xff]
    %v232 = vld [vmem:[#allocation5 + $0x3b0] sm:$0xff]
    %v233 = vld [vmem:[#allocation5 + $0x3b8] sm:$0xff]
    %v234 = vld [vmem:[#allocation5 + $0x3c0] sm:$0xff]
    %v235 = vld [vmem:[#allocation5 + $0x3c8] sm:$0xff]
    %v236 = vld [vmem:[#allocation5 + $0x3d0] sm:$0xff]
    %v237 = vld [vmem:[#allocation5 + $0x3d8] sm:$0xff]
    %v238 = vld [vmem:[#allocation5 + $0x3e0] sm:$0xff]
    %v239 = vld [vmem:[#allocation5 + $0x3e8] sm:$0xff]
    %v240 = vld [vmem:[#allocation5 + $0x3f0] sm:$0xff]
    %v241 = vld [vmem:[#allocation5 + $0x3f8] sm:$0xff]
    %v242 = vld [vmem:[#allocation5 + $0x400] sm:$0xff]
    %v243 = vld [vmem:[#allocation5 + $0x408] sm:$0xff]
    %v244 = vld [vmem:[#allocation5 + $0x410] sm:$0xff]
    %v245 = vld [vmem:[#allocation5 + $0x418] sm:$0xff]
    %v246 = vld [vmem:[#allocation5 + $0x420] sm:$0xff]
    %v247 = vld [vmem:[#allocation5 + $0x428] sm:$0xff]
    %v248 = vld [vmem:[#allocation5 + $0x430] sm:$0xff]
    %v249 = vld [vmem:[#allocation5 + $0x438] sm:$0xff]
    %v250 = vld [vmem:[#allocation5 + $0x440] sm:$0xff]
    %v251 = vld [vmem:[#allocation5 + $0x448] sm:$0xff]
    %v252 = vld [vmem:[#allocation5 + $0x450] sm:$0xff]
    %v253 = vld [vmem:[#allocation5 + $0x458] sm:$0xff]
    %v254 = vld [vmem:[#allocation5 + $0x460] sm:$0xff]
    %v255 = vld [vmem:[#allocation5 + $0x468] sm:$0xff]
    %v256 = vld [vmem:[#allocation5 + $0x470] sm:$0xff]
    %v257 = vld [vmem:[#allocation5 + $0x478] sm:$0xff]
    %v258 = vld [vmem:[#allocation5 + $0x480] sm:$0xff]
    %v259 = vld [vmem:[#allocation5 + $0x488] sm:$0xff]
    %v260 = vld [vmem:[#allocation5 + $0x490] sm:$0xff]
    %v261 = vld [vmem:[#allocation5 + $0x498] sm:$0xff]
    %v262 = vld [vmem:[#allocation5 + $0x4a0] sm:$0xff]
    %v263 = vld [vmem:[#allocation5 + $0x4a8] sm:$0xff]
    %v264 = vld [vmem:[#allocation5 + $0x4b0] sm:$0xff]
    %v265 = vld [vmem:[#allocation5 + $0x4b8] sm:$0xff]
    %v266 = vld [vmem:[#allocation5 + $0x4c0] sm:$0xff]
    %v267 = vld [vmem:[#allocation5 + $0x4c8] sm:$0xff]
    %v268 = vld [vmem:[#allocation5 + $0x4d0] sm:$0xff]
    %v269 = vld [vmem:[#allocation5 + $0x4d8] sm:$0xff]
    %v270 = vld [vmem:[#allocation5 + $0x4e0] sm:$0xff]
    %v271 = vld [vmem:[#allocation5 + $0x4e8] sm:$0xff]
    %v272 = vld [vmem:[#allocation5 + $0x4f0] sm:$0xff]
    %v273 = vld [vmem:[#allocation5 + $0x4f8] sm:$0xff]
    %v274 = vld [vmem:[#allocation5 + $0x500] sm:$0xff]
    %v275 = vld [vmem:[#allocation5 + $0x508] sm:$0xff]
    %v276 = vld [vmem:[#allocation5 + $0x510] sm:$0xff]
    %v277 = vld [vmem:[#allocation5 + $0x518] sm:$0xff]
    %v278 = vld [vmem:[#allocation5 + $0x520] sm:$0xff]
    %v279 = vld [vmem:[#allocation5 + $0x528] sm:$0xff]
    %v280 = vld [vmem:[#allocation5 + $0x530] sm:$0xff]
    %v281 = vld [vmem:[#allocation5 + $0x538] sm:$0xff]
    %v282 = vld [vmem:[#allocation5 + $0x540] sm:$0xff]
    %v283 = vld [vmem:[#allocation5 + $0x548] sm:$0xff]
    %v284 = vld [vmem:[#allocation5 + $0x550] sm:$0xff]
    %v285 = vld [vmem:[#allocation5 + $0x558] sm:$0xff]
    %v286 = vld [vmem:[#allocation5 + $0x560] sm:$0xff]
    %v287 = vld [vmem:[#allocation5 + $0x568] sm:$0xff]
    %v288 = vld [vmem:[#allocation5 + $0x570] sm:$0xff]
    %v289 = vld [vmem:[#allocation5 + $0x578] sm:$0xff]
    %v290 = vld [vmem:[#allocation5 + $0x580] sm:$0xff]
    %v291 = vld [vmem:[#allocation5 + $0x588] sm:$0xff]
    %v292 = vld [vmem:[#allocation5 + $0x590] sm:$0xff]
    %v293 = vld [vmem:[#allocation5 + $0x598] sm:$0xff]
    %v294 = vld [vmem:[#allocation5 + $0x5a0] sm:$0xff]
    %v295 = vld [vmem:[#allocation5 + $0x5a8] sm:$0xff]
    %v296 = vld [vmem:[#allocation5 + $0x5b0] sm:$0xff]
    %v297 = vld [vmem:[#allocation5 + $0x5b8] sm:$0xff]
    %v298 = vld [vmem:[#allocation5 + $0x5c0] sm:$0xff]
    %v299 = vld [vmem:[#allocation5 + $0x5c8] sm:$0xff]
    %v300 = vld [vmem:[#allocation5 + $0x5d0] sm:$0xff]
    %v301 = vld [vmem:[#allocation5 + $0x5d8] sm:$0xff]
    %v302 = vld [vmem:[#allocation5 + $0x5e0] sm:$0xff]
    %v303 = vld [vmem:[#allocation5 + $0x5e8] sm:$0xff]
    %v304 = vld [vmem:[#allocation5 + $0x5f0] sm:$0xff]
    %v305 = vld [vmem:[#allocation5 + $0x5f8] sm:$0xff]
    %v306 = vld [vmem:[#allocation5 + $0x600] sm:$0xff]
    %v307 = vld [vmem:[#allocation5 + $0x608] sm:$0xff]
    %v308 = vld [vmem:[#allocation5 + $0x610] sm:$0xff]
    %v309 = vld [vmem:[#allocation5 + $0x618] sm:$0xff]
    %v310 = vld [vmem:[%s2] sm:$0xf]
    %v312 = vlaneseq
    %v313 = vshrl.u32 %v312, 7
    %v314 = vsub.s32 0, %v313
    %v315 = vrot.slane %v310, %v314
    %v316 = vlaneseq
    %v317 = vshrl.u32 %v316, 7
    %v318 = vsub.s32 1, %v317
    %v319 = vrot.slane %v310, %v318
    %v320 = vlaneseq
    %v321 = vshrl.u32 %v320, 7
    %v322 = vsub.s32 2, %v321
    %v323 = vrot.slane %v310, %v322
    %v324 = vlaneseq
    %v325 = vshrl.u32 %v324, 7
    %v326 = vsub.s32 3, %v325
    %v327 = vrot.slane %v310, %v326
    %v528 = vunpack.c.l.b16 %v114
    %v529 = vunpack.c.h.b16 %v114
    %v530 = vunpack.c.l.b16 %v115
    %v531 = vunpack.c.h.b16 %v115
    %v532 = vunpack.c.l.b16 %v116
    %v533 = vunpack.c.h.b16 %v116
    %v534 = vunpack.c.l.b16 %v117
    %v535 = vunpack.c.h.b16 %v117
    %v536 = vunpack.c.l.b16 %v118
    %v537 = vunpack.c.h.b16 %v118
    %v538 = vunpack.c.l.b16 %v119
    %v539 = vunpack.c.h.b16 %v119
    %v540 = vunpack.c.l.b16 %v120
    %v541 = vunpack.c.h.b16 %v120
    %v542 = vunpack.c.l.b16 %v121
    %v543 = vunpack.c.h.b16 %v121
    %v544 = vunpack.c.l.b16 %v122
    %v545 = vunpack.c.h.b16 %v122
    %v546 = vunpack.c.l.b16 %v123
    %v547 = vunpack.c.h.b16 %v123
    %v548 = vunpack.c.l.b16 %v124
    %v549 = vunpack.c.h.b16 %v124
    %v550 = vunpack.c.l.b16 %v125
    %v551 = vunpack.c.h.b16 %v125
    %v552 = vunpack.c.l.b16 %v126
    %v553 = vunpack.c.h.b16 %v126
    %v554 = vunpack.c.l.b16 %v127
    %v555 = vunpack.c.h.b16 %v127
    %v556 = vunpack.c.l.b16 %v128
    %v557 = vunpack.c.h.b16 %v128
    %v558 = vunpack.c.l.b16 %v129
    %v559 = vunpack.c.h.b16 %v129
    %v560 = vunpack.c.l.b16 %v130
    %v561 = vunpack.c.h.b16 %v130
    %v562 = vunpack.c.l.b16 %v131
    %v563 = vunpack.c.h.b16 %v131
    %v564 = vunpack.c.l.b16 %v132
    %v565 = vunpack.c.h.b16 %v132
    %v566 = vunpack.c.l.b16 %v133
    %v567 = vunpack.c.h.b16 %v133
    %v568 = vunpack.c.l.b16 %v134
    %v569 = vunpack.c.h.b16 %v134
    %v570 = vunpack.c.l.b16 %v135
    %v571 = vunpack.c.h.b16 %v135
    %v572 = vunpack.c.l.b16 %v136
    %v573 = vunpack.c.h.b16 %v136
    %v574 = vunpack.c.l.b16 %v137
    %v575 = vunpack.c.h.b16 %v137
    %v576 = vunpack.c.l.b16 %v138
    %v577 = vunpack.c.h.b16 %v138
    %v578 = vunpack.c.l.b16 %v139
    %v579 = vunpack.c.h.b16 %v139
    %v580 = vunpack.c.l.b16 %v140
    %v581 = vunpack.c.h.b16 %v140
    %v582 = vunpack.c.l.b16 %v141
    %v583 = vunpack.c.h.b16 %v141
    %v584 = vunpack.c.l.b16 %v142
    %v585 = vunpack.c.h.b16 %v142
    %v586 = vunpack.c.l.b16 %v143
    %v587 = vunpack.c.h.b16 %v143
    %v588 = vunpack.c.l.b16 %v144
    %v589 = vunpack.c.h.b16 %v144
    %v590 = vunpack.c.l.b16 %v145
    %v591 = vunpack.c.h.b16 %v145
    %v592 = vunpack.c.l.b16 %v146
    %v593 = vunpack.c.h.b16 %v146
    %v594 = vunpack.c.l.b16 %v147
    %v595 = vunpack.c.h.b16 %v147
    %v596 = vunpack.c.l.b16 %v148
    %v597 = vunpack.c.h.b16 %v148
    %v598 = vunpack.c.l.b16 %v149
    %v599 = vunpack.c.h.b16 %v149
    %v600 = vunpack.c.l.b16 %v150
    %v601 = vunpack.c.h.b16 %v150
    %v602 = vunpack.c.l.b16 %v151
    %v603 = vunpack.c.h.b16 %v151
    %v604 = vunpack.c.l.b16 %v152
    %v605 = vunpack.c.h.b16 %v152
    %v606 = vunpack.c.l.b16 %v153
    %v607 = vunpack.c.h.b16 %v153
    %v608 = vunpack.c.l.b16 %v154
    %v609 = vunpack.c.h.b16 %v154
    %v610 = vunpack.c.l.b16 %v155
    %v611 = vunpack.c.h.b16 %v155
    %v612 = vunpack.c.l.b16 %v156
    %v613 = vunpack.c.h.b16 %v156
    %v614 = vunpack.c.l.b16 %v157
    %v615 = vunpack.c.h.b16 %v157
    %v616 = vunpack.c.l.b16 %v158
    %v617 = vunpack.c.h.b16 %v158
    %v618 = vunpack.c.l.b16 %v159
    %v619 = vunpack.c.h.b16 %v159
    %v620 = vunpack.c.l.b16 %v160
    %v621 = vunpack.c.h.b16 %v160
    %v622 = vunpack.c.l.b16 %v161
    %v623 = vunpack.c.h.b16 %v161
    %v624 = vunpack.c.l.b16 %v162
    %v625 = vunpack.c.h.b16 %v162
    %v626 = vunpack.c.l.b16 %v163
    %v627 = vunpack.c.h.b16 %v163
    %v628 = vunpack.c.l.b16 %v164
    %v629 = vunpack.c.h.b16 %v164
    %v630 = vunpack.c.l.b16 %v165
    %v631 = vunpack.c.h.b16 %v165
    %v632 = vunpack.c.l.b16 %v166
    %v633 = vunpack.c.h.b16 %v166
    %v634 = vunpack.c.l.b16 %v167
    %v635 = vunpack.c.h.b16 %v167
    %v636 = vunpack.c.l.b16 %v168
    %v637 = vunpack.c.h.b16 %v168
    %v638 = vunpack.c.l.b16 %v169
    %v639 = vunpack.c.h.b16 %v169
    %v640 = vunpack.c.l.b16 %v170
    %v641 = vunpack.c.h.b16 %v170
    %v642 = vunpack.c.l.b16 %v171
    %v643 = vunpack.c.h.b16 %v171
    %v644 = vunpack.c.l.b16 %v172
    %v645 = vunpack.c.h.b16 %v172
    %v646 = vunpack.c.l.b16 %v173
    %v647 = vunpack.c.h.b16 %v173
    %v648 = vunpack.c.l.b16 %v174
    %v649 = vunpack.c.h.b16 %v174
    %v650 = vunpack.c.l.b16 %v175
    %v651 = vunpack.c.h.b16 %v175
    %v652 = vunpack.c.l.b16 %v176
    %v653 = vunpack.c.h.b16 %v176
    %v654 = vunpack.c.l.b16 %v177
    %v655 = vunpack.c.h.b16 %v177
    %v656 = vunpack.c.l.b16 %v178
    %v657 = vunpack.c.h.b16 %v178
    %v658 = vunpack.c.l.b16 %v179
    %v659 = vunpack.c.h.b16 %v179
    %v660 = vunpack.c.l.b16 %v180
    %v661 = vunpack.c.h.b16 %v180
    %v662 = vunpack.c.l.b16 %v181
    %v663 = vunpack.c.h.b16 %v181
    %v664 = vunpack.c.l.b16 %v182
    %v665 = vunpack.c.h.b16 %v182
    %v666 = vunpack.c.l.b16 %v183
    %v667 = vunpack.c.h.b16 %v183
    %v668 = vunpack.c.l.b16 %v184
    %v669 = vunpack.c.h.b16 %v184
    %v670 = vunpack.c.l.b16 %v185
    %v671 = vunpack.c.h.b16 %v185
    %v672 = vunpack.c.l.b16 %v186
    %v673 = vunpack.c.h.b16 %v186
    %v674 = vunpack.c.l.b16 %v187
    %v675 = vunpack.c.h.b16 %v187
    %v676 = vunpack.c.l.b16 %v188
    %v677 = vunpack.c.h.b16 %v188
    %v678 = vunpack.c.l.b16 %v189
    %v679 = vunpack.c.h.b16 %v189
    %v680 = vunpack.c.l.b16 %v190
    %v681 = vunpack.c.h.b16 %v190
    %v682 = vunpack.c.l.b16 %v191
    %v683 = vunpack.c.h.b16 %v191
    %v684 = vunpack.c.l.b16 %v192
    %v685 = vunpack.c.h.b16 %v192
    %v686 = vunpack.c.l.b16 %v193
    %v687 = vunpack.c.h.b16 %v193
    %v688 = vunpack.c.l.b16 %v194
    %v689 = vunpack.c.h.b16 %v194
    %v690 = vunpack.c.l.b16 %v195
    %v691 = vunpack.c.h.b16 %v195
    %v692 = vunpack.c.l.b16 %v196
    %v693 = vunpack.c.h.b16 %v196
    %v694 = vunpack.c.l.b16 %v197
    %v695 = vunpack.c.h.b16 %v197
    %v696 = vunpack.c.l.b16 %v198
    %v697 = vunpack.c.h.b16 %v198
    %v698 = vunpack.c.l.b16 %v199
    %v699 = vunpack.c.h.b16 %v199
    %v700 = vunpack.c.l.b16 %v200
    %v701 = vunpack.c.h.b16 %v200
    %v702 = vunpack.c.l.b16 %v201
    %v703 = vunpack.c.h.b16 %v201
    %v704 = vunpack.c.l.b16 %v202
    %v705 = vunpack.c.h.b16 %v202
    %v706 = vunpack.c.l.b16 %v203
    %v707 = vunpack.c.h.b16 %v203
    %v708 = vunpack.c.l.b16 %v204
    %v709 = vunpack.c.h.b16 %v204
    %v710 = vunpack.c.l.b16 %v205
    %v711 = vunpack.c.h.b16 %v205
    %v712 = vunpack.c.l.b16 %v206
    %v713 = vunpack.c.h.b16 %v206
    %v714 = vunpack.c.l.b16 %v207
    %v715 = vunpack.c.h.b16 %v207
    %v716 = vunpack.c.l.b16 %v208
    %v717 = vunpack.c.h.b16 %v208
    %v718 = vunpack.c.l.b16 %v209
    %v719 = vunpack.c.h.b16 %v209
    %v720 = vunpack.c.l.b16 %v210
    %v721 = vunpack.c.h.b16 %v210
    %v722 = vunpack.c.l.b16 %v211
    %v723 = vunpack.c.h.b16 %v211
    %v724 = vunpack.c.l.b16 %v212
    %v725 = vunpack.c.h.b16 %v212
    %v726 = vunpack.c.l.b16 %v213
    %v727 = vunpack.c.h.b16 %v213
    %v728 = vunpack.c.l.b16 %v214
    %v729 = vunpack.c.h.b16 %v214
    %v730 = vunpack.c.l.b16 %v215
    %v731 = vunpack.c.h.b16 %v215
    %v732 = vunpack.c.l.b16 %v216
    %v733 = vunpack.c.h.b16 %v216
    %v734 = vunpack.c.l.b16 %v217
    %v735 = vunpack.c.h.b16 %v217
    %v736 = vunpack.c.l.b16 %v218
    %v737 = vunpack.c.h.b16 %v218
    %v738 = vunpack.c.l.b16 %v219
    %v739 = vunpack.c.h.b16 %v219
    %v740 = vunpack.c.l.b16 %v220
    %v741 = vunpack.c.h.b16 %v220
    %v742 = vunpack.c.l.b16 %v221
    %v743 = vunpack.c.h.b16 %v221
    %v744 = vunpack.c.l.b16 %v222
    %v745 = vunpack.c.h.b16 %v222
    %v746 = vunpack.c.l.b16 %v223
    %v747 = vunpack.c.h.b16 %v223
    %v748 = vunpack.c.l.b16 %v224
    %v749 = vunpack.c.h.b16 %v224
    %v750 = vunpack.c.l.b16 %v225
    %v751 = vunpack.c.h.b16 %v225
    %v752 = vunpack.c.l.b16 %v226
    %v753 = vunpack.c.h.b16 %v226
    %v754 = vunpack.c.l.b16 %v227
    %v755 = vunpack.c.h.b16 %v227
    %v756 = vunpack.c.l.b16 %v228
    %v757 = vunpack.c.h.b16 %v228
    %v758 = vunpack.c.l.b16 %v229
    %v759 = vunpack.c.h.b16 %v229
    %v760 = vunpack.c.l.b16 %v230
    %v761 = vunpack.c.h.b16 %v230
    %v762 = vunpack.c.l.b16 %v231
    %v763 = vunpack.c.h.b16 %v231
    %v764 = vunpack.c.l.b16 %v232
    %v765 = vunpack.c.h.b16 %v232
    %v766 = vunpack.c.l.b16 %v233
    %v767 = vunpack.c.h.b16 %v233
    %v768 = vunpack.c.l.b16 %v234
    %v769 = vunpack.c.h.b16 %v234
    %v770 = vunpack.c.l.b16 %v235
    %v771 = vunpack.c.h.b16 %v235
    %v772 = vunpack.c.l.b16 %v236
    %v773 = vunpack.c.h.b16 %v236
    %v774 = vunpack.c.l.b16 %v237
    %v775 = vunpack.c.h.b16 %v237
    %v776 = vunpack.c.l.b16 %v238
    %v777 = vunpack.c.h.b16 %v238
    %v778 = vunpack.c.l.b16 %v239
    %v779 = vunpack.c.h.b16 %v239
    %v780 = vunpack.c.l.b16 %v240
    %v781 = vunpack.c.h.b16 %v240
    %v782 = vunpack.c.l.b16 %v241
    %v783 = vunpack.c.h.b16 %v241
    %v784 = vunpack.c.l.b16 %v242
    %v785 = vunpack.c.h.b16 %v242
    %v786 = vunpack.c.l.b16 %v243
    %v787 = vunpack.c.h.b16 %v243
    %v788 = vunpack.c.l.b16 %v244
    %v789 = vunpack.c.h.b16 %v244
    %v790 = vunpack.c.l.b16 %v245
    %v791 = vunpack.c.h.b16 %v245
    %v792 = vunpack.c.l.b16 %v246
    %v793 = vunpack.c.h.b16 %v246
    %v794 = vunpack.c.l.b16 %v247
    %v795 = vunpack.c.h.b16 %v247
    %v796 = vunpack.c.l.b16 %v248
    %v797 = vunpack.c.h.b16 %v248
    %v798 = vunpack.c.l.b16 %v249
    %v799 = vunpack.c.h.b16 %v249
    %v800 = vunpack.c.l.b16 %v250
    %v801 = vunpack.c.h.b16 %v250
    %v802 = vunpack.c.l.b16 %v251
    %v803 = vunpack.c.h.b16 %v251
    %v804 = vunpack.c.l.b16 %v252
    %v805 = vunpack.c.h.b16 %v252
    %v806 = vunpack.c.l.b16 %v253
    %v807 = vunpack.c.h.b16 %v253
    %v808 = vunpack.c.l.b16 %v254
    %v809 = vunpack.c.h.b16 %v254
    %v810 = vunpack.c.l.b16 %v255
    %v811 = vunpack.c.h.b16 %v255
    %v812 = vunpack.c.l.b16 %v256
    %v813 = vunpack.c.h.b16 %v256
    %v814 = vunpack.c.l.b16 %v257
    %v815 = vunpack.c.h.b16 %v257
    %v816 = vunpack.c.l.b16 %v258
    %v817 = vunpack.c.h.b16 %v258
    %v818 = vunpack.c.l.b16 %v259
    %v819 = vunpack.c.h.b16 %v259
    %v820 = vunpack.c.l.b16 %v260
    %v821 = vunpack.c.h.b16 %v260
    %v822 = vunpack.c.l.b16 %v261
    %v823 = vunpack.c.h.b16 %v261
    %v824 = vunpack.c.l.b16 %v262
    %v825 = vunpack.c.h.b16 %v262
    %v826 = vunpack.c.l.b16 %v263
    %v827 = vunpack.c.h.b16 %v263
    %v828 = vunpack.c.l.b16 %v264
    %v829 = vunpack.c.h.b16 %v264
    %v830 = vunpack.c.l.b16 %v265
    %v831 = vunpack.c.h.b16 %v265
    %v832 = vunpack.c.l.b16 %v266
    %v833 = vunpack.c.h.b16 %v266
    %v834 = vunpack.c.l.b16 %v267
    %v835 = vunpack.c.h.b16 %v267
    %v836 = vunpack.c.l.b16 %v268
    %v837 = vunpack.c.h.b16 %v268
    %v838 = vunpack.c.l.b16 %v269
    %v839 = vunpack.c.h.b16 %v269
    %v840 = vunpack.c.l.b16 %v270
    %v841 = vunpack.c.h.b16 %v270
    %v842 = vunpack.c.l.b16 %v271
    %v843 = vunpack.c.h.b16 %v271
    %v844 = vunpack.c.l.b16 %v272
    %v845 = vunpack.c.h.b16 %v272
    %v846 = vunpack.c.l.b16 %v273
    %v847 = vunpack.c.h.b16 %v273
    %v848 = vunpack.c.l.b16 %v274
    %v849 = vunpack.c.h.b16 %v274
    %v850 = vunpack.c.l.b16 %v275
    %v851 = vunpack.c.h.b16 %v275
    %v852 = vunpack.c.l.b16 %v276
    %v853 = vunpack.c.h.b16 %v276
    %v854 = vunpack.c.l.b16 %v277
    %v855 = vunpack.c.h.b16 %v277
    %v856 = vunpack.c.l.b16 %v278
    %v857 = vunpack.c.h.b16 %v278
    %v858 = vunpack.c.l.b16 %v279
    %v859 = vunpack.c.h.b16 %v279
    %v860 = vunpack.c.l.b16 %v280
    %v861 = vunpack.c.h.b16 %v280
    %v862 = vunpack.c.l.b16 %v281
    %v863 = vunpack.c.h.b16 %v281
    %v864 = vunpack.c.l.b16 %v282
    %v865 = vunpack.c.h.b16 %v282
    %v866 = vunpack.c.l.b16 %v283
    %v867 = vunpack.c.h.b16 %v283
    %v868 = vunpack.c.l.b16 %v284
    %v869 = vunpack.c.h.b16 %v284
    %v870 = vunpack.c.l.b16 %v285
    %v871 = vunpack.c.h.b16 %v285
    %v872 = vunpack.c.l.b16 %v286
    %v873 = vunpack.c.h.b16 %v286
    %v874 = vunpack.c.l.b16 %v287
    %v875 = vunpack.c.h.b16 %v287
    %v876 = vunpack.c.l.b16 %v288
    %v877 = vunpack.c.h.b16 %v288
    %v878 = vunpack.c.l.b16 %v289
    %v879 = vunpack.c.h.b16 %v289
    %v880 = vunpack.c.l.b16 %v290
    %v881 = vunpack.c.h.b16 %v290
    %v882 = vunpack.c.l.b16 %v291
    %v883 = vunpack.c.h.b16 %v291
    %v884 = vunpack.c.l.b16 %v292
    %v885 = vunpack.c.h.b16 %v292
    %v886 = vunpack.c.l.b16 %v293
    %v887 = vunpack.c.h.b16 %v293
    %v888 = vunpack.c.l.b16 %v294
    %v889 = vunpack.c.h.b16 %v294
    %v890 = vunpack.c.l.b16 %v295
    %v891 = vunpack.c.h.b16 %v295
    %v892 = vunpack.c.l.b16 %v296
    %v893 = vunpack.c.h.b16 %v296
    %v894 = vunpack.c.l.b16 %v297
    %v895 = vunpack.c.h.b16 %v297
    %v896 = vunpack.c.l.b16 %v298
    %v897 = vunpack.c.h.b16 %v298
    %v898 = vunpack.c.l.b16 %v299
    %v899 = vunpack.c.h.b16 %v299
    %v900 = vunpack.c.l.b16 %v300
    %v901 = vunpack.c.h.b16 %v300
    %v902 = vunpack.c.l.b16 %v301
    %v903 = vunpack.c.h.b16 %v301
    %v904 = vunpack.c.l.b16 %v302
    %v905 = vunpack.c.h.b16 %v302
    %v906 = vunpack.c.l.b16 %v303
    %v907 = vunpack.c.h.b16 %v303
    %v908 = vunpack.c.l.b16 %v304
    %v909 = vunpack.c.h.b16 %v304
    %v910 = vunpack.c.l.b16 %v305
    %v911 = vunpack.c.h.b16 %v305
    %v912 = vunpack.c.l.b16 %v306
    %v913 = vunpack.c.h.b16 %v306
    %v914 = vunpack.c.l.b16 %v307
    %v915 = vunpack.c.h.b16 %v307
    %v916 = vunpack.c.l.b16 %v308
    %v917 = vunpack.c.h.b16 %v308
    %v918 = vunpack.c.l.b16 %v309
    %v919 = vunpack.c.h.b16 %v309
    %v920 = vpack.c.b16 %v532, %v528
    %v921 = vpack.c.b16 %v533, %v529
    %v922 = vpack.c.b16 %v534, %v530
    %v923 = vpack.c.b16 %v535, %v531
    %v924 = vpack.c.b16 %v540, %v536
    %v925 = vpack.c.b16 %v541, %v537
    %v926 = vpack.c.b16 %v542, %v538
    %v927 = vpack.c.b16 %v543, %v539
    %v928 = vpack.c.b16 %v548, %v544
    %v929 = vpack.c.b16 %v549, %v545
    %v930 = vpack.c.b16 %v550, %v546
    %v931 = vpack.c.b16 %v551, %v547
    %v932 = vpack.c.b16 %v556, %v552
    %v933 = vpack.c.b16 %v557, %v553
    %v934 = vpack.c.b16 %v558, %v554
    %v935 = vpack.c.b16 %v559, %v555
    %v936 = vpack.c.b16 %v564, %v560
    %v937 = vpack.c.b16 %v565, %v561
    %v938 = vpack.c.b16 %v566, %v562
    %v939 = vpack.c.b16 %v567, %v563
    %v940 = vpack.c.b16 %v572, %v568
    %v941 = vpack.c.b16 %v573, %v569
    %v942 = vpack.c.b16 %v574, %v570
    %v943 = vpack.c.b16 %v575, %v571
    %v944 = vpack.c.b16 %v580, %v576
    %v945 = vpack.c.b16 %v581, %v577
    %v946 = vpack.c.b16 %v582, %v578
    %v947 = vpack.c.b16 %v583, %v579
    %v948 = vpack.c.b16 %v588, %v584
    %v949 = vpack.c.b16 %v589, %v585
    %v950 = vpack.c.b16 %v590, %v586
    %v951 = vpack.c.b16 %v591, %v587
    %v952 = vpack.c.b16 %v596, %v592
    %v953 = vpack.c.b16 %v597, %v593
    %v954 = vpack.c.b16 %v598, %v594
    %v955 = vpack.c.b16 %v599, %v595
    %v956 = vpack.c.b16 %v604, %v600
    %v957 = vpack.c.b16 %v605, %v601
    %v958 = vpack.c.b16 %v606, %v602
    %v959 = vpack.c.b16 %v607, %v603
    %v960 = vpack.c.b16 %v612, %v608
    %v961 = vpack.c.b16 %v613, %v609
    %v962 = vpack.c.b16 %v614, %v610
    %v963 = vpack.c.b16 %v615, %v611
    %v964 = vpack.c.b16 %v620, %v616
    %v965 = vpack.c.b16 %v621, %v617
    %v966 = vpack.c.b16 %v622, %v618
    %v967 = vpack.c.b16 %v623, %v619
    %v968 = vpack.c.b16 %v628, %v624
    %v969 = vpack.c.b16 %v629, %v625
    %v970 = vpack.c.b16 %v630, %v626
    %v971 = vpack.c.b16 %v631, %v627
    %v972 = vpack.c.b16 %v636, %v632
    %v973 = vpack.c.b16 %v637, %v633
    %v974 = vpack.c.b16 %v638, %v634
    %v975 = vpack.c.b16 %v639, %v635
    %v976 = vpack.c.b16 %v644, %v640
    %v977 = vpack.c.b16 %v645, %v641
    %v978 = vpack.c.b16 %v646, %v642
    %v979 = vpack.c.b16 %v647, %v643
    %v980 = vpack.c.b16 %v652, %v648
    %v981 = vpack.c.b16 %v653, %v649
    %v982 = vpack.c.b16 %v654, %v650
    %v983 = vpack.c.b16 %v655, %v651
    %v984 = vpack.c.b16 %v660, %v656
    %v985 = vpack.c.b16 %v661, %v657
    %v986 = vpack.c.b16 %v662, %v658
    %v987 = vpack.c.b16 %v663, %v659
    %v988 = vpack.c.b16 %v668, %v664
    %v989 = vpack.c.b16 %v669, %v665
    %v990 = vpack.c.b16 %v670, %v666
    %v991 = vpack.c.b16 %v671, %v667
    %v992 = vpack.c.b16 %v676, %v672
    %v993 = vpack.c.b16 %v677, %v673
    %v994 = vpack.c.b16 %v678, %v674
    %v995 = vpack.c.b16 %v679, %v675
    %v996 = vpack.c.b16 %v684, %v680
    %v997 = vpack.c.b16 %v685, %v681
    %v998 = vpack.c.b16 %v686, %v682
    %v999 = vpack.c.b16 %v687, %v683
    %v1000 = vpack.c.b16 %v692, %v688
    %v1001 = vpack.c.b16 %v693, %v689
    %v1002 = vpack.c.b16 %v694, %v690
    %v1003 = vpack.c.b16 %v695, %v691
    %v1004 = vpack.c.b16 %v700, %v696
    %v1005 = vpack.c.b16 %v701, %v697
    %v1006 = vpack.c.b16 %v702, %v698
    %v1007 = vpack.c.b16 %v703, %v699
    %v1008 = vpack.c.b16 %v708, %v704
    %v1009 = vpack.c.b16 %v709, %v705
    %v1010 = vpack.c.b16 %v710, %v706
    %v1011 = vpack.c.b16 %v711, %v707
    %v1012 = vpack.c.b16 %v716, %v712
    %v1013 = vpack.c.b16 %v717, %v713
    %v1014 = vpack.c.b16 %v718, %v714
    %v1015 = vpack.c.b16 %v719, %v715
    %v1016 = vpack.c.b16 %v724, %v720
    %v1017 = vpack.c.b16 %v725, %v721
    %v1018 = vpack.c.b16 %v726, %v722
    %v1019 = vpack.c.b16 %v727, %v723
    %v1020 = vpack.c.b16 %v732, %v728
    %v1021 = vpack.c.b16 %v733, %v729
    %v1022 = vpack.c.b16 %v734, %v730
    %v1023 = vpack.c.b16 %v735, %v731
    %v1024 = vpack.c.b16 %v740, %v736
    %v1025 = vpack.c.b16 %v741, %v737
    %v1026 = vpack.c.b16 %v742, %v738
    %v1027 = vpack.c.b16 %v743, %v739
    %v1028 = vpack.c.b16 %v748, %v744
    %v1029 = vpack.c.b16 %v749, %v745
    %v1030 = vpack.c.b16 %v750, %v746
    %v1031 = vpack.c.b16 %v751, %v747
    %v1032 = vpack.c.b16 %v756, %v752
    %v1033 = vpack.c.b16 %v757, %v753
    %v1034 = vpack.c.b16 %v758, %v754
    %v1035 = vpack.c.b16 %v759, %v755
    %v1036 = vpack.c.b16 %v764, %v760
    %v1037 = vpack.c.b16 %v765, %v761
    %v1038 = vpack.c.b16 %v766, %v762
    %v1039 = vpack.c.b16 %v767, %v763
    %v1040 = vpack.c.b16 %v772, %v768
    %v1041 = vpack.c.b16 %v773, %v769
    %v1042 = vpack.c.b16 %v774, %v770
    %v1043 = vpack.c.b16 %v775, %v771
    %v1044 = vpack.c.b16 %v780, %v776
    %v1045 = vpack.c.b16 %v781, %v777
    %v1046 = vpack.c.b16 %v782, %v778
    %v1047 = vpack.c.b16 %v783, %v779
    %v1048 = vpack.c.b16 %v788, %v784
    %v1049 = vpack.c.b16 %v789, %v785
    %v1050 = vpack.c.b16 %v790, %v786
    %v1051 = vpack.c.b16 %v791, %v787
    %v1052 = vpack.c.b16 %v796, %v792
    %v1053 = vpack.c.b16 %v797, %v793
    %v1054 = vpack.c.b16 %v798, %v794
    %v1055 = vpack.c.b16 %v799, %v795
    %v1056 = vpack.c.b16 %v804, %v800
    %v1057 = vpack.c.b16 %v805, %v801
    %v1058 = vpack.c.b16 %v806, %v802
    %v1059 = vpack.c.b16 %v807, %v803
    %v1060 = vpack.c.b16 %v812, %v808
    %v1061 = vpack.c.b16 %v813, %v809
    %v1062 = vpack.c.b16 %v814, %v810
    %v1063 = vpack.c.b16 %v815, %v811
    %v1064 = vpack.c.b16 %v820, %v816
    %v1065 = vpack.c.b16 %v821, %v817
    %v1066 = vpack.c.b16 %v822, %v818
    %v1067 = vpack.c.b16 %v823, %v819
    %v1068 = vpack.c.b16 %v828, %v824
    %v1069 = vpack.c.b16 %v829, %v825
    %v1070 = vpack.c.b16 %v830, %v826
    %v1071 = vpack.c.b16 %v831, %v827
    %v1072 = vpack.c.b16 %v836, %v832
    %v1073 = vpack.c.b16 %v837, %v833
    %v1074 = vpack.c.b16 %v838, %v834
    %v1075 = vpack.c.b16 %v839, %v835
    %v1076 = vpack.c.b16 %v844, %v840
    %v1077 = vpack.c.b16 %v845, %v841
    %v1078 = vpack.c.b16 %v846, %v842
    %v1079 = vpack.c.b16 %v847, %v843
    %v1080 = vpack.c.b16 %v852, %v848
    %v1081 = vpack.c.b16 %v853, %v849
    %v1082 = vpack.c.b16 %v854, %v850
    %v1083 = vpack.c.b16 %v855, %v851
    %v1084 = vpack.c.b16 %v860, %v856
    %v1085 = vpack.c.b16 %v861, %v857
    %v1086 = vpack.c.b16 %v862, %v858
    %v1087 = vpack.c.b16 %v863, %v859
    %v1088 = vpack.c.b16 %v868, %v864
    %v1089 = vpack.c.b16 %v869, %v865
    %v1090 = vpack.c.b16 %v870, %v866
    %v1091 = vpack.c.b16 %v871, %v867
    %v1092 = vpack.c.b16 %v876, %v872
    %v1093 = vpack.c.b16 %v877, %v873
    %v1094 = vpack.c.b16 %v878, %v874
    %v1095 = vpack.c.b16 %v879, %v875
    %v1096 = vpack.c.b16 %v884, %v880
    %v1097 = vpack.c.b16 %v885, %v881
    %v1098 = vpack.c.b16 %v886, %v882
    %v1099 = vpack.c.b16 %v887, %v883
    %v1100 = vpack.c.b16 %v892, %v888
    %v1101 = vpack.c.b16 %v893, %v889
    %v1102 = vpack.c.b16 %v894, %v890
    %v1103 = vpack.c.b16 %v895, %v891
    %v1104 = vpack.c.b16 %v900, %v896
    %v1105 = vpack.c.b16 %v901, %v897
    %v1106 = vpack.c.b16 %v902, %v898
    %v1107 = vpack.c.b16 %v903, %v899
    %v1108 = vpack.c.b16 %v908, %v904
    %v1109 = vpack.c.b16 %v909, %v905
    %v1110 = vpack.c.b16 %v910, %v906
    %v1111 = vpack.c.b16 %v911, %v907
    %v1112 = vpack.c.b16 %v916, %v912
    %v1113 = vpack.c.b16 %v917, %v913
    %v1114 = vpack.c.b16 %v918, %v914
    %v1115 = vpack.c.b16 %v919, %v915
    %vm1312 = vcmask 130048
    %v1314 = vsel %vm1312, %v113, 0
    %1316 = vmatprep.subr.bf16.mxu0 %v921
    %1317 = vmatpush1.bf16.msra.mxu0 %v920
    %1318 = vmatprep.subr.bf16.mxu0 %v925
    %1319 = vmatpush1.bf16.msra.mxu0 %v924
    %1320 = vmatprep.subr.bf16.mxu0 %v929
    %1321 = vmatpush1.bf16.msra.mxu0 %v928
    %1322 = vmatprep.subr.bf16.mxu0 %v933
    %1323 = vmatpush1.bf16.msra.mxu0 %v932
    %1324 = vmatprep.subr.bf16.mxu0 %v937
    %1325 = vmatpush1.bf16.msra.mxu0 %v936
    %1326 = vmatprep.subr.bf16.mxu0 %v941
    %1327 = vmatpush1.bf16.msra.mxu0 %v940
    %1328 = vmatprep.subr.bf16.mxu0 %v945
    %1329 = vmatpush1.bf16.msra.mxu0 %v944
    %1330 = vmatprep.subr.bf16.mxu0 %v949
    %1331 = vmatpush1.bf16.msra.mxu0 %v948
    %1332 = vmatprep.subr.bf16.mxu0 %v953
    %1333 = vmatpush1.bf16.msra.mxu0 %v952
    %1334 = vmatprep.subr.bf16.mxu0 %v957
    %1335 = vmatpush1.bf16.msra.mxu0 %v956
    %1336 = vmatprep.subr.bf16.mxu0 %v961
    %1337 = vmatpush1.bf16.msra.mxu0 %v960
    %1338 = vmatprep.subr.bf16.mxu0 %v965
    %1339 = vmatpush1.bf16.msra.mxu0 %v964
    %1340 = vmatprep.subr.bf16.mxu0 %v969
    %1341 = vmatpush1.bf16.msra.mxu0 %v968
    %1342 = vmatprep.subr.bf16.mxu0 %v973
    %1343 = vmatpush1.bf16.msra.mxu0 %v972
    %1344 = vmatprep.subr.bf16.mxu0 %v977
    %1345 = vmatpush1.bf16.msra.mxu0 %v976
    %1346 = vmatprep.subr.bf16.mxu0 %v981
    %1347 = vmatpush1.bf16.msra.mxu0 %v980
    %1348 = vmatprep.mubr.bf16.mxu0 %v108
    %1349 = vmatmul.mubr.bf16.gmra.mrb[0].mxu0 %v107
    %v1350 = vpop.f32.mrb[0].mxu0
    %v1351 = vadd.f32 %v315, %v1350
    %v1352 = vpop.f32.mrb[0].mxu0
    %v1353 = vadd.f32 %v319, %v1352
    %v1354 = vpop.f32.mrb[0].mxu0
    %v1355 = vpop.f32.mrb[0].mxu0
    %1356 = vdwg.mxu0
    %1357 = vmatprep.subr.bf16.mxu0 %v985
    %1358 = vmatpush1.bf16.msra.mxu0 %v984
    %1359 = vmatprep.subr.bf16.mxu0 %v989
    %1360 = vmatpush1.bf16.msra.mxu0 %v988
    %1361 = vmatprep.subr.bf16.mxu0 %v993
    %1362 = vmatpush1.bf16.msra.mxu0 %v992
    %1363 = vmatprep.subr.bf16.mxu0 %v997
    %1364 = vmatpush1.bf16.msra.mxu0 %v996
    %1365 = vmatprep.subr.bf16.mxu0 %v1001
    %1366 = vmatpush1.bf16.msra.mxu0 %v1000
    %1367 = vmatprep.subr.bf16.mxu0 %v1005
    %1368 = vmatpush1.bf16.msra.mxu0 %v1004
    %1369 = vmatprep.subr.bf16.mxu0 %v1009
    %1370 = vmatpush1.bf16.msra.mxu0 %v1008
    %1371 = vmatprep.subr.bf16.mxu0 %v1013
    %1372 = vmatpush1.bf16.msra.mxu0 %v1012
    %1373 = vmatprep.subr.bf16.mxu0 %v1017
    %1374 = vmatpush1.bf16.msra.mxu0 %v1016
    %1375 = vmatprep.subr.bf16.mxu0 %v1021
    %1376 = vmatpush1.bf16.msra.mxu0 %v1020
    %1377 = vmatprep.subr.bf16.mxu0 %v1025
    %1378 = vmatpush1.bf16.msra.mxu0 %v1024
    %1379 = vmatprep.subr.bf16.mxu0 %v1029
    %1380 = vmatpush1.bf16.msra.mxu0 %v1028
    %1381 = vmatprep.subr.bf16.mxu0 %v1033
    %1382 = vmatpush1.bf16.msra.mxu0 %v1032
    %1383 = vmatprep.subr.bf16.mxu0 %v1037
    %1384 = vmatpush1.bf16.msra.mxu0 %v1036
    %1385 = vmatprep.subr.bf16.mxu0 %v1041
    %1386 = vmatpush1.bf16.msra.mxu0 %v1040
    %1387 = vmatprep.subr.bf16.mxu0 %v1045
    %1388 = vmatpush1.bf16.msra.mxu0 %v1044
    %1389 = vmatprep.mubr.bf16.mxu0 %v110
    %1390 = vmatmul.mubr.bf16.gmra.mrb[0].mxu0 %v109
    %v1391 = vpop.f32.mrb[0].mxu0
    %v1392 = vadd.f32 %v1351, %v1391
    %v1393 = vpop.f32.mrb[0].mxu0
    %v1394 = vadd.f32 %v1353, %v1393
    %v1395 = vpop.f32.mrb[0].mxu0
    %v1396 = vpop.f32.mrb[0].mxu0
    %1397 = vdwg.mxu0
    %1398 = vmatprep.subr.bf16.mxu0 %v1049
    %1399 = vmatpush1.bf16.msra.mxu0 %v1048
    %1400 = vmatprep.subr.bf16.mxu0 %v1053
    %1401 = vmatpush1.bf16.msra.mxu0 %v1052
    %1402 = vmatprep.subr.bf16.mxu0 %v1057
    %1403 = vmatpush1.bf16.msra.mxu0 %v1056
    %1404 = vmatprep.subr.bf16.mxu0 %v1061
    %1405 = vmatpush1.bf16.msra.mxu0 %v1060
    %1406 = vmatprep.subr.bf16.mxu0 %v1065
    %1407 = vmatpush1.bf16.msra.mxu0 %v1064
    %1408 = vmatprep.subr.bf16.mxu0 %v1069
    %1409 = vmatpush1.bf16.msra.mxu0 %v1068
    %1410 = vmatprep.subr.bf16.mxu0 %v1073
    %1411 = vmatpush1.bf16.msra.mxu0 %v1072
    %1412 = vmatprep.subr.bf16.mxu0 %v1077
    %1413 = vmatpush1.bf16.msra.mxu0 %v1076
    %1414 = vmatprep.subr.bf16.mxu0 %v1081
    %1415 = vmatpush1.bf16.msra.mxu0 %v1080
    %1416 = vmatprep.subr.bf16.mxu0 %v1085
    %1417 = vmatpush1.bf16.msra.mxu0 %v1084
    %1418 = vmatprep.subr.bf16.mxu0 %v1089
    %1419 = vmatpush1.bf16.msra.mxu0 %v1088
    %1420 = vmatprep.subr.bf16.mxu0 %v1093
    %1421 = vmatpush1.bf16.msra.mxu0 %v1092
    %1422 = vmatprep.subr.bf16.mxu0 %v1097
    %1423 = vmatpush1.bf16.msra.mxu0 %v1096
    %1424 = vmatprep.subr.bf16.mxu0 %v1101
    %1425 = vmatpush1.bf16.msra.mxu0 %v1100
    %1426 = vmatprep.subr.bf16.mxu0 %v1105
    %1427 = vmatpush1.bf16.msra.mxu0 %v1104
    %1428 = vmatprep.subr.bf16.mxu0 %v1109
    %1429 = vmatpush1.bf16.msra.mxu0 %v1108
    %1430 = vmatprep.mubr.bf16.mxu0 %v112
    %1431 = vmatmul.mubr.bf16.gmra.mrb[0].mxu0 %v111
    %v1432 = vpop.f32.mrb[0].mxu0
    %v1433 = vadd.f32 %v1392, %v1432
    %v1434 = vpop.f32.mrb[0].mxu0
    %v1435 = vadd.f32 %v1394, %v1434
    %v1436 = vpop.f32.mrb[0].mxu0
    %v1437 = vpop.f32.mrb[0].mxu0
    %1438 = vdwg.mxu0
    %1439 = vmatprep.subr.bf16.mxu0 %v1113
    %1440 = vmatpush1.bf16.msra.mxu0 %v1112
    %1441 = vmatprep.subr.bf16.mxu0 0
    %1442 = vmatpush1.bf16.msra.mxu0 0
    %1443 = vmatprep.subr.bf16.mxu0 0
    %1444 = vmatpush1.bf16.msra.mxu0 0
    %1445 = vmatprep.subr.bf16.mxu0 0
    %1446 = vmatpush1.bf16.msra.mxu0 0
    %1447 = vmatprep.subr.bf16.mxu0 0
    %1448 = vmatpush1.bf16.msra.mxu0 0
    %1449 = vmatprep.subr.bf16.mxu0 0
    %1450 = vmatpush1.bf16.msra.mxu0 0
    %1451 = vmatprep.subr.bf16.mxu0 0
    %1452 = vmatpush1.bf16.msra.mxu0 0
    %1453 = vmatprep.subr.bf16.mxu0 0
    %1454 = vmatpush1.bf16.msra.mxu0 0
    %1455 = vmatprep.subr.bf16.mxu0 0
    %1456 = vmatpush1.bf16.msra.mxu0 0
    %1457 = vmatprep.subr.bf16.mxu0 0
    %1458 = vmatpush1.bf16.msra.mxu0 0
    %1459 = vmatprep.subr.bf16.mxu0 0
    %1460 = vmatpush1.bf16.msra.mxu0 0
    %1461 = vmatprep.subr.bf16.mxu0 0
    %1462 = vmatpush1.bf16.msra.mxu0 0
    %1463 = vmatprep.subr.bf16.mxu0 0
    %1464 = vmatpush1.bf16.msra.mxu0 0
    %1465 = vmatprep.subr.bf16.mxu0 0
    %1466 = vmatpush1.bf16.msra.mxu0 0
    %1467 = vmatprep.subr.bf16.mxu0 0
    %1468 = vmatpush1.bf16.msra.mxu0 0
    %1469 = vmatprep.subr.bf16.mxu0 0
    %1470 = vmatpush1.bf16.msra.mxu0 0
    %1471 = vmatprep.mubr.bf16.mxu0 0
    %1472 = vmatmul.mubr.bf16.gmra.mrb[0].mxu0 %v1314
    %v1473 = vpop.f32.mrb[0].mxu0
    %v1474 = vadd.f32 %v1433, %v1473
    %v1475 = vpop.f32.mrb[0].mxu0
    %v1476 = vadd.f32 %v1435, %v1475
    %v1477 = vpop.f32.mrb[0].mxu0
    %v1478 = vpop.f32.mrb[0].mxu0
    %1479 = vdwg.mxu0
    %1480 = vmatprep.subr.bf16.mxu0 %v923
    %1481 = vmatpush1.bf16.msra.mxu0 %v922
    %1482 = vmatprep.subr.bf16.mxu0 %v927
    %1483 = vmatpush1.bf16.msra.mxu0 %v926
    %1484 = vmatprep.subr.bf16.mxu0 %v931
    %1485 = vmatpush1.bf16.msra.mxu0 %v930
    %1486 = vmatprep.subr.bf16.mxu0 %v935
    %1487 = vmatpush1.bf16.msra.mxu0 %v934
    %1488 = vmatprep.subr.bf16.mxu0 %v939
    %1489 = vmatpush1.bf16.msra.mxu0 %v938
    %1490 = vmatprep.subr.bf16.mxu0 %v943
    %1491 = vmatpush1.bf16.msra.mxu0 %v942
    %1492 = vmatprep.subr.bf16.mxu0 %v947
    %1493 = vmatpush1.bf16.msra.mxu0 %v946
    %1494 = vmatprep.subr.bf16.mxu0 %v951
    %1495 = vmatpush1.bf16.msra.mxu0 %v950
    %1496 = vmatprep.subr.bf16.mxu0 %v955
    %1497 = vmatpush1.bf16.msra.mxu0 %v954
    %1498 = vmatprep.subr.bf16.mxu0 %v959
    %1499 = vmatpush1.bf16.msra.mxu0 %v958
    %1500 = vmatprep.subr.bf16.mxu0 %v963
    %1501 = vmatpush1.bf16.msra.mxu0 %v962
    %1502 = vmatprep.subr.bf16.mxu0 %v967
    %1503 = vmatpush1.bf16.msra.mxu0 %v966
    %1504 = vmatprep.subr.bf16.mxu0 %v971
    %1505 = vmatpush1.bf16.msra.mxu0 %v970
    %1506 = vmatprep.subr.bf16.mxu0 %v975
    %1507 = vmatpush1.bf16.msra.mxu0 %v974
    %1508 = vmatprep.subr.bf16.mxu0 %v979
    %1509 = vmatpush1.bf16.msra.mxu0 %v978
    %1510 = vmatprep.subr.bf16.mxu0 %v983
    %1511 = vmatpush1.bf16.msra.mxu0 %v982
    %1512 = vmatprep.mubr.bf16.mxu0 %v108
    %1513 = vmatmul.mubr.bf16.gmra.mrb[0].mxu0 %v107
    %v1514 = vpop.f32.mrb[0].mxu0
    %v1515 = vadd.f32 %v323, %v1514
    %v1516 = vpop.f32.mrb[0].mxu0
    %v1517 = vadd.f32 %v327, %v1516
    %v1518 = vpop.f32.mrb[0].mxu0
    %v1519 = vpop.f32.mrb[0].mxu0
    %1520 = vdwg.mxu0
    %1521 = vmatprep.subr.bf16.mxu0 %v987
    %1522 = vmatpush1.bf16.msra.mxu0 %v986
    %1523 = vmatprep.subr.bf16.mxu0 %v991
    %1524 = vmatpush1.bf16.msra.mxu0 %v990
    %1525 = vmatprep.subr.bf16.mxu0 %v995
    %1526 = vmatpush1.bf16.msra.mxu0 %v994
    %1527 = vmatprep.subr.bf16.mxu0 %v999
    %1528 = vmatpush1.bf16.msra.mxu0 %v998
    %1529 = vmatprep.subr.bf16.mxu0 %v1003
    %1530 = vmatpush1.bf16.msra.mxu0 %v1002
    %1531 = vmatprep.subr.bf16.mxu0 %v1007
    %1532 = vmatpush1.bf16.msra.mxu0 %v1006
    %1533 = vmatprep.subr.bf16.mxu0 %v1011
    %1534 = vmatpush1.bf16.msra.mxu0 %v1010
    %1535 = vmatprep.subr.bf16.mxu0 %v1015
    %1536 = vmatpush1.bf16.msra.mxu0 %v1014
    %1537 = vmatprep.subr.bf16.mxu0 %v1019
    %1538 = vmatpush1.bf16.msra.mxu0 %v1018
    %1539 = vmatprep.subr.bf16.mxu0 %v1023
    %1540 = vmatpush1.bf16.msra.mxu0 %v1022
    %1541 = vmatprep.subr.bf16.mxu0 %v1027
    %1542 = vmatpush1.bf16.msra.mxu0 %v1026
    %1543 = vmatprep.subr.bf16.mxu0 %v1031
    %1544 = vmatpush1.bf16.msra.mxu0 %v1030
    %1545 = vmatprep.subr.bf16.mxu0 %v1035
    %1546 = vmatpush1.bf16.msra.mxu0 %v1034
    %1547 = vmatprep.subr.bf16.mxu0 %v1039
    %1548 = vmatpush1.bf16.msra.mxu0 %v1038
    %1549 = vmatprep.subr.bf16.mxu0 %v1043
    %1550 = vmatpush1.bf16.msra.mxu0 %v1042
    %1551 = vmatprep.subr.bf16.mxu0 %v1047
    %1552 = vmatpush1.bf16.msra.mxu0 %v1046
    %1553 = vmatprep.mubr.bf16.mxu0 %v110
    %1554 = vmatmul.mubr.bf16.gmra.mrb[0].mxu0 %v109
    %v1555 = vpop.f32.mrb[0].mxu0
    %v1556 = vadd.f32 %v1515, %v1555
    %v1557 = vpop.f32.mrb[0].mxu0
    %v1558 = vadd.f32 %v1517, %v1557
    %v1559 = vpop.f32.mrb[0].mxu0
    %v1560 = vpop.f32.mrb[0].mxu0
    %1561 = vdwg.mxu0
    %1562 = vmatprep.subr.bf16.mxu0 %v1051
    %1563 = vmatpush1.bf16.msra.mxu0 %v1050
    %1564 = vmatprep.subr.bf16.mxu0 %v1055
    %1565 = vmatpush1.bf16.msra.mxu0 %v1054
    %1566 = vmatprep.subr.bf16.mxu0 %v1059
    %1567 = vmatpush1.bf16.msra.mxu0 %v1058
    %1568 = vmatprep.subr.bf16.mxu0 %v1063
    %1569 = vmatpush1.bf16.msra.mxu0 %v1062
    %1570 = vmatprep.subr.bf16.mxu0 %v1067
    %1571 = vmatpush1.bf16.msra.mxu0 %v1066
    %1572 = vmatprep.subr.bf16.mxu0 %v1071
    %1573 = vmatpush1.bf16.msra.mxu0 %v1070
    %1574 = vmatprep.subr.bf16.mxu0 %v1075
    %1575 = vmatpush1.bf16.msra.mxu0 %v1074
    %1576 = vmatprep.subr.bf16.mxu0 %v1079
    %1577 = vmatpush1.bf16.msra.mxu0 %v1078
    %1578 = vmatprep.subr.bf16.mxu0 %v1083
    %1579 = vmatpush1.bf16.msra.mxu0 %v1082
    %1580 = vmatprep.subr.bf16.mxu0 %v1087
    %1581 = vmatpush1.bf16.msra.mxu0 %v1086
    %1582 = vmatprep.subr.bf16.mxu0 %v1091
    %1583 = vmatpush1.bf16.msra.mxu0 %v1090
    %1584 = vmatprep.subr.bf16.mxu0 %v1095
    %1585 = vmatpush1.bf16.msra.mxu0 %v1094
    %1586 = vmatprep.subr.bf16.mxu0 %v1099
    %1587 = vmatpush1.bf16.msra.mxu0 %v1098
    %1588 = vmatprep.subr.bf16.mxu0 %v1103
    %1589 = vmatpush1.bf16.msra.mxu0 %v1102
    %1590 = vmatprep.subr.bf16.mxu0 %v1107
    %1591 = vmatpush1.bf16.msra.mxu0 %v1106
    %1592 = vmatprep.subr.bf16.mxu0 %v1111
    %1593 = vmatpush1.bf16.msra.mxu0 %v1110
    %1594 = vmatprep.mubr.bf16.mxu0 %v112
    %1595 = vmatmul.mubr.bf16.gmra.mrb[0].mxu0 %v111
    %v1596 = vpop.f32.mrb[0].mxu0
    %v1597 = vadd.f32 %v1556, %v1596
    %v1598 = vpop.f32.mrb[0].mxu0
    %v1599 = vadd.f32 %v1558, %v1598
    %v1600 = vpop.f32.mrb[0].mxu0
    %v1601 = vpop.f32.mrb[0].mxu0
    %1602 = vdwg.mxu0
    %1603 = vmatprep.subr.bf16.mxu0 %v1115
    %1604 = vmatpush1.bf16.msra.mxu0 %v1114
    %1605 = vmatprep.subr.bf16.mxu0 0
    %1606 = vmatpush1.bf16.msra.mxu0 0
    %1607 = vmatprep.subr.bf16.mxu0 0
    %1608 = vmatpush1.bf16.msra.mxu0 0
    %1609 = vmatprep.subr.bf16.mxu0 0
    %1610 = vmatpush1.bf16.msra.mxu0 0
    %1611 = vmatprep.subr.bf16.mxu0 0
    %1612 = vmatpush1.bf16.msra.mxu0 0
    %1613 = vmatprep.subr.bf16.mxu0 0
    %1614 = vmatpush1.bf16.msra.mxu0 0
    %1615 = vmatprep.subr.bf16.mxu0 0
    %1616 = vmatpush1.bf16.msra.mxu0 0
    %1617 = vmatprep.subr.bf16.mxu0 0
    %1618 = vmatpush1.bf16.msra.mxu0 0
    %1619 = vmatprep.subr.bf16.mxu0 0
    %1620 = vmatpush1.bf16.msra.mxu0 0
    %1621 = vmatprep.subr.bf16.mxu0 0
    %1622 = vmatpush1.bf16.msra.mxu0 0
    %1623 = vmatprep.subr.bf16.mxu0 0
    %1624 = vmatpush1.bf16.msra.mxu0 0
    %1625 = vmatprep.subr.bf16.mxu0 0
    %1626 = vmatpush1.bf16.msra.mxu0 0
    %1627 = vmatprep.subr.bf16.mxu0 0
    %1628 = vmatpush1.bf16.msra.mxu0 0
    %1629 = vmatprep.subr.bf16.mxu0 0
    %1630 = vmatpush1.bf16.msra.mxu0 0
    %1631 = vmatprep.subr.bf16.mxu0 0
    %1632 = vmatpush1.bf16.msra.mxu0 0
    %1633 = vmatprep.subr.bf16.mxu0 0
    %1634 = vmatpush1.bf16.msra.mxu0 0
    %1635 = vmatprep.mubr.bf16.mxu0 0
    %1636 = vmatmul.mubr.bf16.gmra.mrb[0].mxu0 %v1314
    %v1637 = vpop.f32.mrb[0].mxu0
    %v1638 = vadd.f32 %v1597, %v1637
    %v1639 = vpop.f32.mrb[0].mxu0
    %v1640 = vadd.f32 %v1599, %v1639
    %v1641 = vpop.f32.mrb[0].mxu0
    %v1642 = vpop.f32.mrb[0].mxu0
    %1643 = vdwg.mxu0
    %v1644 = vmax.f32 %v1474, 0.0
    %v1645 = vmax.f32 %v1476, 0.0
    %v1646 = vmax.f32 %v1638, 0.0
    %v1647 = vmax.f32 %v1640, 0.0
    %v1648 = vpack.c.bf16 %v1644, %v1644
    %v1649 = vpack.c.bf16 %v1645, %v1645
    %v1650 = vpack.c.bf16 %v1646, %v1646
    %v1651 = vpack.c.bf16 %v1647, %v1647
    %v1652 = vld [vmem:[#allocation7] sm:$0xff]
    %v1653 = vld [vmem:[#allocation7 + $0x8] sm:$0xff]
    %v1654 = vld [vmem:[#allocation7 + $0x10] sm:$0xff]
    %v1655 = vld [vmem:[#allocation7 + $0x18] sm:$0xff]
    %v1656 = vld [vmem:[#allocation7 + $0x20] sm:$0xff]
    %v1657 = vld [vmem:[#allocation7 + $0x28] sm:$0xff]
    %v1658 = vld [vmem:[#allocation7 + $0x30] sm:$0xff]
    %v1659 = vld [vmem:[#allocation7 + $0x38] sm:$0xff]
    %v1660 = vld [vmem:[#allocation7 + $0x40] sm:$0xff]
    %v1661 = vld [vmem:[#allocation7 + $0x48] sm:$0xff]
    %v1662 = vld [vmem:[#allocation7 + $0x50] sm:$0xff]
    %v1663 = vld [vmem:[#allocation7 + $0x58] sm:$0xff]
    %v1664 = vld [vmem:[#allocation7 + $0x60] sm:$0xff]
    %v1665 = vld [vmem:[#allocation7 + $0x68] sm:$0xff]
    %v1666 = vld [vmem:[#allocation7 + $0x70] sm:$0xff]
    %v1667 = vld [vmem:[#allocation7 + $0x78] sm:$0xff]
    %v1668 = vld [vmem:[#allocation7 + $0x80] sm:$0xff]
    %v1669 = vld [vmem:[#allocation7 + $0x88] sm:$0xff]
    %v1670 = vld [vmem:[#allocation7 + $0x90] sm:$0xff]
    %v1671 = vld [vmem:[#allocation7 + $0x98] sm:$0xff]
    %v1672 = vld [vmem:[#allocation7 + $0xa0] sm:$0xff]
    %v1673 = vld [vmem:[#allocation7 + $0xa8] sm:$0xff]
    %v1674 = vld [vmem:[#allocation7 + $0xb0] sm:$0xff]
    %v1675 = vld [vmem:[#allocation7 + $0xb8] sm:$0xff]
    %v1676 = vld [vmem:[#allocation7 + $0xc0] sm:$0xff]
    %v1677 = vld [vmem:[#allocation7 + $0xc8] sm:$0xff]
    %v1678 = vld [vmem:[#allocation7 + $0xd0] sm:$0xff]
    %v1679 = vld [vmem:[#allocation7 + $0xd8] sm:$0xff]
    %v1680 = vld [vmem:[#allocation7 + $0xe0] sm:$0xff]
    %v1681 = vld [vmem:[#allocation7 + $0xe8] sm:$0xff]
    %v1682 = vld [vmem:[#allocation7 + $0xf0] sm:$0xff]
    %v1683 = vld [vmem:[#allocation7 + $0xf8] sm:$0xff]
    %v1684 = vld [vmem:[#allocation7 + $0x100] sm:$0xff]
    %v1685 = vld [vmem:[#allocation7 + $0x108] sm:$0xff]
    %v1686 = vld [vmem:[#allocation7 + $0x110] sm:$0xff]
    %v1687 = vld [vmem:[#allocation7 + $0x118] sm:$0xff]
    %v1688 = vld [vmem:[#allocation7 + $0x120] sm:$0xff]
    %v1689 = vld [vmem:[#allocation7 + $0x128] sm:$0xff]
    %v1690 = vld [vmem:[#allocation7 + $0x130] sm:$0xff]
    %v1691 = vld [vmem:[#allocation7 + $0x138] sm:$0xff]
    %v1692 = vld [vmem:[#allocation7 + $0x140] sm:$0xff]
    %v1693 = vld [vmem:[#allocation7 + $0x148] sm:$0xff]
    %v1694 = vld [vmem:[#allocation7 + $0x150] sm:$0xff]
    %v1695 = vld [vmem:[#allocation7 + $0x158] sm:$0xff]
    %v1696 = vld [vmem:[#allocation7 + $0x160] sm:$0xff]
    %v1697 = vld [vmem:[#allocation7 + $0x168] sm:$0xff]
    %v1698 = vld [vmem:[#allocation7 + $0x170] sm:$0xff]
    %v1699 = vld [vmem:[#allocation7 + $0x178] sm:$0xff]
    %v1700 = vld [vmem:[#allocation7 + $0x180] sm:$0xff]
    %v1701 = vld [vmem:[#allocation7 + $0x188] sm:$0xff]
    %v1702 = vld [vmem:[#allocation7 + $0x190] sm:$0xff]
    %v1703 = vld [vmem:[#allocation7 + $0x198] sm:$0xff]
    %v1704 = vld [vmem:[#allocation7 + $0x1a0] sm:$0xff]
    %v1705 = vld [vmem:[#allocation7 + $0x1a8] sm:$0xff]
    %v1706 = vld [vmem:[#allocation7 + $0x1b0] sm:$0xff]
    %v1707 = vld [vmem:[#allocation7 + $0x1b8] sm:$0xff]
    %v1708 = vld [vmem:[#allocation7 + $0x1c0] sm:$0xff]
    %v1709 = vld [vmem:[#allocation7 + $0x1c8] sm:$0xff]
    %v1710 = vld [vmem:[#allocation7 + $0x1d0] sm:$0xff]
    %v1711 = vld [vmem:[#allocation7 + $0x1d8] sm:$0xff]
    %v1712 = vld [vmem:[#allocation7 + $0x1e0] sm:$0xff]
    %v1713 = vld [vmem:[#allocation7 + $0x1e8] sm:$0xff]
    %v1714 = vld [vmem:[#allocation7 + $0x1f0] sm:$0xff]
    %v1715 = vld [vmem:[#allocation7 + $0x1f8] sm:$0xff]
    %v1716 = vld [vmem:[%s4] sm:$0x3]
    %v1718 = vlaneseq
    %v1719 = vshrl.u32 %v1718, 7
    %v1720 = vsub.s32 0, %v1719
    %v1721 = vrot.slane %v1716, %v1720
    %v1722 = vlaneseq
    %v1723 = vshrl.u32 %v1722, 7
    %v1724 = vsub.s32 1, %v1723
    %v1725 = vrot.slane %v1716, %v1724
    %v1792 = vunpack.c.l.b16 %v1652
    %v1793 = vunpack.c.h.b16 %v1652
    %v1794 = vunpack.c.l.b16 %v1653
    %v1795 = vunpack.c.h.b16 %v1653
    %v1796 = vunpack.c.l.b16 %v1654
    %v1797 = vunpack.c.h.b16 %v1654
    %v1798 = vunpack.c.l.b16 %v1655
    %v1799 = vunpack.c.h.b16 %v1655
    %v1800 = vunpack.c.l.b16 %v1656
    %v1801 = vunpack.c.h.b16 %v1656
    %v1802 = vunpack.c.l.b16 %v1657
    %v1803 = vunpack.c.h.b16 %v1657
    %v1804 = vunpack.c.l.b16 %v1658
    %v1805 = vunpack.c.h.b16 %v1658
    %v1806 = vunpack.c.l.b16 %v1659
    %v1807 = vunpack.c.h.b16 %v1659
    %v1808 = vunpack.c.l.b16 %v1660
    %v1809 = vunpack.c.h.b16 %v1660
    %v1810 = vunpack.c.l.b16 %v1661
    %v1811 = vunpack.c.h.b16 %v1661
    %v1812 = vunpack.c.l.b16 %v1662
    %v1813 = vunpack.c.h.b16 %v1662
    %v1814 = vunpack.c.l.b16 %v1663
    %v1815 = vunpack.c.h.b16 %v1663
    %v1816 = vunpack.c.l.b16 %v1664
    %v1817 = vunpack.c.h.b16 %v1664
    %v1818 = vunpack.c.l.b16 %v1665
    %v1819 = vunpack.c.h.b16 %v1665
    %v1820 = vunpack.c.l.b16 %v1666
    %v1821 = vunpack.c.h.b16 %v1666
    %v1822 = vunpack.c.l.b16 %v1667
    %v1823 = vunpack.c.h.b16 %v1667
    %v1824 = vunpack.c.l.b16 %v1668
    %v1825 = vunpack.c.h.b16 %v1668
    %v1826 = vunpack.c.l.b16 %v1669
    %v1827 = vunpack.c.h.b16 %v1669
    %v1828 = vunpack.c.l.b16 %v1670
    %v1829 = vunpack.c.h.b16 %v1670
    %v1830 = vunpack.c.l.b16 %v1671
    %v1831 = vunpack.c.h.b16 %v1671
    %v1832 = vunpack.c.l.b16 %v1672
    %v1833 = vunpack.c.h.b16 %v1672
    %v1834 = vunpack.c.l.b16 %v1673
    %v1835 = vunpack.c.h.b16 %v1673
    %v1836 = vunpack.c.l.b16 %v1674
    %v1837 = vunpack.c.h.b16 %v1674
    %v1838 = vunpack.c.l.b16 %v1675
    %v1839 = vunpack.c.h.b16 %v1675
    %v1840 = vunpack.c.l.b16 %v1676
    %v1841 = vunpack.c.h.b16 %v1676
    %v1842 = vunpack.c.l.b16 %v1677
    %v1843 = vunpack.c.h.b16 %v1677
    %v1844 = vunpack.c.l.b16 %v1678
    %v1845 = vunpack.c.h.b16 %v1678
    %v1846 = vunpack.c.l.b16 %v1679
    %v1847 = vunpack.c.h.b16 %v1679
    %v1848 = vunpack.c.l.b16 %v1680
    %v1849 = vunpack.c.h.b16 %v1680
    %v1850 = vunpack.c.l.b16 %v1681
    %v1851 = vunpack.c.h.b16 %v1681
    %v1852 = vunpack.c.l.b16 %v1682
    %v1853 = vunpack.c.h.b16 %v1682
    %v1854 = vunpack.c.l.b16 %v1683
    %v1855 = vunpack.c.h.b16 %v1683
    %v1856 = vunpack.c.l.b16 %v1684
    %v1857 = vunpack.c.h.b16 %v1684
    %v1858 = vunpack.c.l.b16 %v1685
    %v1859 = vunpack.c.h.b16 %v1685
    %v1860 = vunpack.c.l.b16 %v1686
    %v1861 = vunpack.c.h.b16 %v1686
    %v1862 = vunpack.c.l.b16 %v1687
    %v1863 = vunpack.c.h.b16 %v1687
    %v1864 = vunpack.c.l.b16 %v1688
    %v1865 = vunpack.c.h.b16 %v1688
    %v1866 = vunpack.c.l.b16 %v1689
    %v1867 = vunpack.c.h.b16 %v1689
    %v1868 = vunpack.c.l.b16 %v1690
    %v1869 = vunpack.c.h.b16 %v1690
    %v1870 = vunpack.c.l.b16 %v1691
    %v1871 = vunpack.c.h.b16 %v1691
    %v1872 = vunpack.c.l.b16 %v1692
    %v1873 = vunpack.c.h.b16 %v1692
    %v1874 = vunpack.c.l.b16 %v1693
    %v1875 = vunpack.c.h.b16 %v1693
    %v1876 = vunpack.c.l.b16 %v1694
    %v1877 = vunpack.c.h.b16 %v1694
    %v1878 = vunpack.c.l.b16 %v1695
    %v1879 = vunpack.c.h.b16 %v1695
    %v1880 = vunpack.c.l.b16 %v1696
    %v1881 = vunpack.c.h.b16 %v1696
    %v1882 = vunpack.c.l.b16 %v1697
    %v1883 = vunpack.c.h.b16 %v1697
    %v1884 = vunpack.c.l.b16 %v1698
    %v1885 = vunpack.c.h.b16 %v1698
    %v1886 = vunpack.c.l.b16 %v1699
    %v1887 = vunpack.c.h.b16 %v1699
    %v1888 = vunpack.c.l.b16 %v1700
    %v1889 = vunpack.c.h.b16 %v1700
    %v1890 = vunpack.c.l.b16 %v1701
    %v1891 = vunpack.c.h.b16 %v1701
    %v1892 = vunpack.c.l.b16 %v1702
    %v1893 = vunpack.c.h.b16 %v1702
    %v1894 = vunpack.c.l.b16 %v1703
    %v1895 = vunpack.c.h.b16 %v1703
    %v1896 = vunpack.c.l.b16 %v1704
    %v1897 = vunpack.c.h.b16 %v1704
    %v1898 = vunpack.c.l.b16 %v1705
    %v1899 = vunpack.c.h.b16 %v1705
    %v1900 = vunpack.c.l.b16 %v1706
    %v1901 = vunpack.c.h.b16 %v1706
    %v1902 = vunpack.c.l.b16 %v1707
    %v1903 = vunpack.c.h.b16 %v1707
    %v1904 = vunpack.c.l.b16 %v1708
    %v1905 = vunpack.c.h.b16 %v1708
    %v1906 = vunpack.c.l.b16 %v1709
    %v1907 = vunpack.c.h.b16 %v1709
    %v1908 = vunpack.c.l.b16 %v1710
    %v1909 = vunpack.c.h.b16 %v1710
    %v1910 = vunpack.c.l.b16 %v1711
    %v1911 = vunpack.c.h.b16 %v1711
    %v1912 = vunpack.c.l.b16 %v1712
    %v1913 = vunpack.c.h.b16 %v1712
    %v1914 = vunpack.c.l.b16 %v1713
    %v1915 = vunpack.c.h.b16 %v1713
    %v1916 = vunpack.c.l.b16 %v1714
    %v1917 = vunpack.c.h.b16 %v1714
    %v1918 = vunpack.c.l.b16 %v1715
    %v1919 = vunpack.c.h.b16 %v1715
    %v1920 = vpack.c.b16 %v1794, %v1792
    %v1921 = vpack.c.b16 %v1795, %v1793
    %v1922 = vpack.c.b16 %v1798, %v1796
    %v1923 = vpack.c.b16 %v1799, %v1797
    %v1924 = vpack.c.b16 %v1802, %v1800
    %v1925 = vpack.c.b16 %v1803, %v1801
    %v1926 = vpack.c.b16 %v1806, %v1804
    %v1927 = vpack.c.b16 %v1807, %v1805
    %v1928 = vpack.c.b16 %v1810, %v1808
    %v1929 = vpack.c.b16 %v1811, %v1809
    %v1930 = vpack.c.b16 %v1814, %v1812
    %v1931 = vpack.c.b16 %v1815, %v1813
    %v1932 = vpack.c.b16 %v1818, %v1816
    %v1933 = vpack.c.b16 %v1819, %v1817
    %v1934 = vpack.c.b16 %v1822, %v1820
    %v1935 = vpack.c.b16 %v1823, %v1821
    %v1936 = vpack.c.b16 %v1826, %v1824
    %v1937 = vpack.c.b16 %v1827, %v1825
    %v1938 = vpack.c.b16 %v1830, %v1828
    %v1939 = vpack.c.b16 %v1831, %v1829
    %v1940 = vpack.c.b16 %v1834, %v1832
    %v1941 = vpack.c.b16 %v1835, %v1833
    %v1942 = vpack.c.b16 %v1838, %v1836
    %v1943 = vpack.c.b16 %v1839, %v1837
    %v1944 = vpack.c.b16 %v1842, %v1840
    %v1945 = vpack.c.b16 %v1843, %v1841
    %v1946 = vpack.c.b16 %v1846, %v1844
    %v1947 = vpack.c.b16 %v1847, %v1845
    %v1948 = vpack.c.b16 %v1850, %v1848
    %v1949 = vpack.c.b16 %v1851, %v1849
    %v1950 = vpack.c.b16 %v1854, %v1852
    %v1951 = vpack.c.b16 %v1855, %v1853
    %v1952 = vpack.c.b16 %v1858, %v1856
    %v1953 = vpack.c.b16 %v1859, %v1857
    %v1954 = vpack.c.b16 %v1862, %v1860
    %v1955 = vpack.c.b16 %v1863, %v1861
    %v1956 = vpack.c.b16 %v1866, %v1864
    %v1957 = vpack.c.b16 %v1867, %v1865
    %v1958 = vpack.c.b16 %v1870, %v1868
    %v1959 = vpack.c.b16 %v1871, %v1869
    %v1960 = vpack.c.b16 %v1874, %v1872
    %v1961 = vpack.c.b16 %v1875, %v1873
    %v1962 = vpack.c.b16 %v1878, %v1876
    %v1963 = vpack.c.b16 %v1879, %v1877
    %v1964 = vpack.c.b16 %v1882, %v1880
    %v1965 = vpack.c.b16 %v1883, %v1881
    %v1966 = vpack.c.b16 %v1886, %v1884
    %v1967 = vpack.c.b16 %v1887, %v1885
    %v1968 = vpack.c.b16 %v1890, %v1888
    %v1969 = vpack.c.b16 %v1891, %v1889
    %v1970 = vpack.c.b16 %v1894, %v1892
    %v1971 = vpack.c.b16 %v1895, %v1893
    %v1972 = vpack.c.b16 %v1898, %v1896
    %v1973 = vpack.c.b16 %v1899, %v1897
    %v1974 = vpack.c.b16 %v1902, %v1900
    %v1975 = vpack.c.b16 %v1903, %v1901
    %v1976 = vpack.c.b16 %v1906, %v1904
    %v1977 = vpack.c.b16 %v1907, %v1905
    %v1978 = vpack.c.b16 %v1910, %v1908
    %v1979 = vpack.c.b16 %v1911, %v1909
    %v1980 = vpack.c.b16 %v1914, %v1912
    %v1981 = vpack.c.b16 %v1915, %v1913
    %v1982 = vpack.c.b16 %v1918, %v1916
    %v1983 = vpack.c.b16 %v1919, %v1917
    %2048 = vmatprep.subr.bf16.mxu0 %v1921
    %2049 = vmatpush1.bf16.msra.mxu0 %v1920
    %2050 = vmatprep.subr.bf16.mxu0 %v1923
    %2051 = vmatpush1.bf16.msra.mxu0 %v1922
    %2052 = vmatprep.subr.bf16.mxu0 %v1925
    %2053 = vmatpush1.bf16.msra.mxu0 %v1924
    %2054 = vmatprep.subr.bf16.mxu0 %v1927
    %2055 = vmatpush1.bf16.msra.mxu0 %v1926
    %2056 = vmatprep.subr.bf16.mxu0 %v1929
    %2057 = vmatpush1.bf16.msra.mxu0 %v1928
    %2058 = vmatprep.subr.bf16.mxu0 %v1931
    %2059 = vmatpush1.bf16.msra.mxu0 %v1930
    %2060 = vmatprep.subr.bf16.mxu0 %v1933
    %2061 = vmatpush1.bf16.msra.mxu0 %v1932
    %2062 = vmatprep.subr.bf16.mxu0 %v1935
    %2063 = vmatpush1.bf16.msra.mxu0 %v1934
    %2064 = vmatprep.subr.bf16.mxu0 %v1937
    %2065 = vmatpush1.bf16.msra.mxu0 %v1936
    %2066 = vmatprep.subr.bf16.mxu0 %v1939
    %2067 = vmatpush1.bf16.msra.mxu0 %v1938
    %2068 = vmatprep.subr.bf16.mxu0 %v1941
    %2069 = vmatpush1.bf16.msra.mxu0 %v1940
    %2070 = vmatprep.subr.bf16.mxu0 %v1943
    %2071 = vmatpush1.bf16.msra.mxu0 %v1942
    %2072 = vmatprep.subr.bf16.mxu0 %v1945
    %2073 = vmatpush1.bf16.msra.mxu0 %v1944
    %2074 = vmatprep.subr.bf16.mxu0 %v1947
    %2075 = vmatpush1.bf16.msra.mxu0 %v1946
    %2076 = vmatprep.subr.bf16.mxu0 %v1949
    %2077 = vmatpush1.bf16.msra.mxu0 %v1948
    %2078 = vmatprep.subr.bf16.mxu0 %v1951
    %2079 = vmatpush1.bf16.msra.mxu0 %v1950
    %2080 = vmatprep.mubr.bf16.mxu0 %v1649
    %2081 = vmatmul.mubr.bf16.gmra.mrb[0].mxu0 %v1648
    %v2082 = vpop.f32.mrb[0].mxu0
    %v2083 = vadd.f32 %v1721, %v2082
    %v2084 = vpop.f32.mrb[0].mxu0
    %v2085 = vadd.f32 %v1725, %v2084
    %v2086 = vpop.f32.mrb[0].mxu0
    %v2087 = vpop.f32.mrb[0].mxu0
    %2088 = vdwg.mxu0
    %2089 = vmatprep.subr.bf16.mxu0 %v1953
    %2090 = vmatpush1.bf16.msra.mxu0 %v1952
    %2091 = vmatprep.subr.bf16.mxu0 %v1955
    %2092 = vmatpush1.bf16.msra.mxu0 %v1954
    %2093 = vmatprep.subr.bf16.mxu0 %v1957
    %2094 = vmatpush1.bf16.msra.mxu0 %v1956
    %2095 = vmatprep.subr.bf16.mxu0 %v1959
    %2096 = vmatpush1.bf16.msra.mxu0 %v1958
    %2097 = vmatprep.subr.bf16.mxu0 %v1961
    %2098 = vmatpush1.bf16.msra.mxu0 %v1960
    %2099 = vmatprep.subr.bf16.mxu0 %v1963
    %2100 = vmatpush1.bf16.msra.mxu0 %v1962
    %2101 = vmatprep.subr.bf16.mxu0 %v1965
    %2102 = vmatpush1.bf16.msra.mxu0 %v1964
    %2103 = vmatprep.subr.bf16.mxu0 %v1967
    %2104 = vmatpush1.bf16.msra.mxu0 %v1966
    %2105 = vmatprep.subr.bf16.mxu0 %v1969
    %2106 = vmatpush1.bf16.msra.mxu0 %v1968
    %2107 = vmatprep.subr.bf16.mxu0 %v1971
    %2108 = vmatpush1.bf16.msra.mxu0 %v1970
    %2109 = vmatprep.subr.bf16.mxu0 %v1973
    %2110 = vmatpush1.bf16.msra.mxu0 %v1972
    %2111 = vmatprep.subr.bf16.mxu0 %v1975
    %2112 = vmatpush1.bf16.msra.mxu0 %v1974
    %2113 = vmatprep.subr.bf16.mxu0 %v1977
    %2114 = vmatpush1.bf16.msra.mxu0 %v1976
    %2115 = vmatprep.subr.bf16.mxu0 %v1979
    %2116 = vmatpush1.bf16.msra.mxu0 %v1978
    %2117 = vmatprep.subr.bf16.mxu0 %v1981
    %2118 = vmatpush1.bf16.msra.mxu0 %v1980
    %2119 = vmatprep.subr.bf16.mxu0 %v1983
    %2120 = vmatpush1.bf16.msra.mxu0 %v1982
    %2121 = vmatprep.mubr.bf16.mxu0 %v1651
    %2122 = vmatmul.mubr.bf16.gmra.mrb[0].mxu0 %v1650
    %v2123 = vpop.f32.mrb[0].mxu0
    %v2124 = vadd.f32 %v2083, %v2123
    %v2125 = vpop.f32.mrb[0].mxu0
    %v2126 = vadd.f32 %v2085, %v2125
    %v2127 = vpop.f32.mrb[0].mxu0
    %v2128 = vpop.f32.mrb[0].mxu0
    %2129 = vdwg.mxu0
    %v2130 = vmax.f32 %v2124, 0.0
    %v2131 = vmax.f32 %v2126, 0.0
    %v2132 = vpack.c.bf16 %v2130, %v2130
    %v2133 = vpack.c.bf16 %v2131, %v2131
    %v2134 = vld [vmem:[#allocation8] sm:$0xf]
    %v2135 = vld [vmem:[#allocation8 + $0x4] sm:$0xf]
    %v2136 = vld [vmem:[#allocation8 + $0x8] sm:$0xf]
    %v2137 = vld [vmem:[#allocation8 + $0xc] sm:$0xf]
    %v2138 = vld [vmem:[#allocation8 + $0x10] sm:$0xf]
    %v2139 = vld [vmem:[#allocation8 + $0x14] sm:$0xf]
    %v2140 = vld [vmem:[#allocation8 + $0x18] sm:$0xf]
    %v2141 = vld [vmem:[#allocation8 + $0x1c] sm:$0xf]
    %v2142 = vld [vmem:[#allocation8 + $0x20] sm:$0xf]
    %v2143 = vld [vmem:[#allocation8 + $0x24] sm:$0xf]
    %v2144 = vld [vmem:[#allocation8 + $0x28] sm:$0xf]
    %v2145 = vld [vmem:[#allocation8 + $0x2c] sm:$0xf]
    %v2146 = vld [vmem:[#allocation8 + $0x30] sm:$0xf]
    %v2147 = vld [vmem:[#allocation8 + $0x34] sm:$0xf]
    %v2148 = vld [vmem:[#allocation8 + $0x38] sm:$0xf]
    %v2149 = vld [vmem:[#allocation8 + $0x3c] sm:$0xf]
    %v2150 = vld [vmem:[#allocation8 + $0x40] sm:$0xf]
    %v2151 = vld [vmem:[#allocation8 + $0x44] sm:$0xf]
    %v2152 = vld [vmem:[#allocation8 + $0x48] sm:$0xf]
    %v2153 = vld [vmem:[#allocation8 + $0x4c] sm:$0xf]
    %v2154 = vld [vmem:[#allocation8 + $0x50] sm:$0xf]
    %v2155 = vld [vmem:[#allocation8 + $0x54] sm:$0xf]
    %v2156 = vld [vmem:[#allocation8 + $0x58] sm:$0xf]
    %v2157 = vld [vmem:[#allocation8 + $0x5c] sm:$0xf]
    %v2158 = vld [vmem:[#allocation8 + $0x60] sm:$0xf]
    %v2159 = vld [vmem:[#allocation8 + $0x64] sm:$0xf]
    %v2160 = vld [vmem:[#allocation8 + $0x68] sm:$0xf]
    %v2161 = vld [vmem:[#allocation8 + $0x6c] sm:$0xf]
    %v2162 = vld [vmem:[#allocation8 + $0x70] sm:$0xf]
    %v2163 = vld [vmem:[#allocation8 + $0x74] sm:$0xf]
    %v2164 = vld [vmem:[#allocation8 + $0x78] sm:$0xf]
    %v2165 = vld [vmem:[#allocation8 + $0x7c] sm:$0xf]
    %v2166 = vld [vmem:[%s6] sm:$0x1]
    %v2168 = vlaneseq
    %v2169 = vshrl.u32 %v2168, 7
    %v2170 = vsub.s32 0, %v2169
    %v2171 = vrot.slane %v2166, %v2170
    %v2205 = vunpack.c.l.b16 %v2134
    %v2206 = vunpack.c.l.b16 %v2135
    %v2207 = vunpack.c.l.b16 %v2136
    %v2208 = vunpack.c.l.b16 %v2137
    %v2209 = vunpack.c.l.b16 %v2138
    %v2210 = vunpack.c.l.b16 %v2139
    %v2211 = vunpack.c.l.b16 %v2140
    %v2212 = vunpack.c.l.b16 %v2141
    %v2213 = vunpack.c.l.b16 %v2142
    %v2214 = vunpack.c.l.b16 %v2143
    %v2215 = vunpack.c.l.b16 %v2144
    %v2216 = vunpack.c.l.b16 %v2145
    %v2217 = vunpack.c.l.b16 %v2146
    %v2218 = vunpack.c.l.b16 %v2147
    %v2219 = vunpack.c.l.b16 %v2148
    %v2220 = vunpack.c.l.b16 %v2149
    %v2221 = vunpack.c.l.b16 %v2150
    %v2222 = vunpack.c.l.b16 %v2151
    %v2223 = vunpack.c.l.b16 %v2152
    %v2224 = vunpack.c.l.b16 %v2153
    %v2225 = vunpack.c.l.b16 %v2154
    %v2226 = vunpack.c.l.b16 %v2155
    %v2227 = vunpack.c.l.b16 %v2156
    %v2228 = vunpack.c.l.b16 %v2157
    %v2229 = vunpack.c.l.b16 %v2158
    %v2230 = vunpack.c.l.b16 %v2159
    %v2231 = vunpack.c.l.b16 %v2160
    %v2232 = vunpack.c.l.b16 %v2161
    %v2233 = vunpack.c.l.b16 %v2162
    %v2234 = vunpack.c.l.b16 %v2163
    %v2235 = vunpack.c.l.b16 %v2164
    %v2236 = vunpack.c.l.b16 %v2165
    %v2237 = vpack.c.b16 %v2206, %v2205
    %v2238 = vpack.c.b16 %v2208, %v2207
    %v2239 = vpack.c.b16 %v2210, %v2209
    %v2240 = vpack.c.b16 %v2212, %v2211
    %v2241 = vpack.c.b16 %v2214, %v2213
    %v2242 = vpack.c.b16 %v2216, %v2215
    %v2243 = vpack.c.b16 %v2218, %v2217
    %v2244 = vpack.c.b16 %v2220, %v2219
    %v2245 = vpack.c.b16 %v2222, %v2221
    %v2246 = vpack.c.b16 %v2224, %v2223
    %v2247 = vpack.c.b16 %v2226, %v2225
    %v2248 = vpack.c.b16 %v2228, %v2227
    %v2249 = vpack.c.b16 %v2230, %v2229
    %v2250 = vpack.c.b16 %v2232, %v2231
    %v2251 = vpack.c.b16 %v2234, %v2233
    %v2252 = vpack.c.b16 %v2236, %v2235
    %2269 = vmatprep.subr.bf16.mxu0 0
    %2270 = vmatpush1.bf16.msra.mxu0 %v2237
    %2271 = vmatprep.subr.bf16.mxu0 0
    %2272 = vmatpush1.bf16.msra.mxu0 %v2238
    %2273 = vmatprep.subr.bf16.mxu0 0
    %2274 = vmatpush1.bf16.msra.mxu0 %v2239
    %2275 = vmatprep.subr.bf16.mxu0 0
    %2276 = vmatpush1.bf16.msra.mxu0 %v2240
    %2277 = vmatprep.subr.bf16.mxu0 0
    %2278 = vmatpush1.bf16.msra.mxu0 %v2241
    %2279 = vmatprep.subr.bf16.mxu0 0
    %2280 = vmatpush1.bf16.msra.mxu0 %v2242
    %2281 = vmatprep.subr.bf16.mxu0 0
    %2282 = vmatpush1.bf16.msra.mxu0 %v2243
    %2283 = vmatprep.subr.bf16.mxu0 0
    %2284 = vmatpush1.bf16.msra.mxu0 %v2244
    %2285 = vmatprep.subr.bf16.mxu0 0
    %2286 = vmatpush1.bf16.msra.mxu0 %v2245
    %2287 = vmatprep.subr.bf16.mxu0 0
    %2288 = vmatpush1.bf16.msra.mxu0 %v2246
    %2289 = vmatprep.subr.bf16.mxu0 0
    %2290 = vmatpush1.bf16.msra.mxu0 %v2247
    %2291 = vmatprep.subr.bf16.mxu0 0
    %2292 = vmatpush1.bf16.msra.mxu0 %v2248
    %2293 = vmatprep.subr.bf16.mxu0 0
    %2294 = vmatpush1.bf16.msra.mxu0 %v2249
    %2295 = vmatprep.subr.bf16.mxu0 0
    %2296 = vmatpush1.bf16.msra.mxu0 %v2250
    %2297 = vmatprep.subr.bf16.mxu0 0
    %2298 = vmatpush1.bf16.msra.mxu0 %v2251
    %2299 = vmatprep.subr.bf16.mxu0 0
    %2300 = vmatpush1.bf16.msra.mxu0 %v2252
    %2301 = vmatprep.mubr.bf16.mxu0 %v2133
    %2302 = vmatmul.mubr.bf16.gmra.mrb[0].mxu0 %v2132
    %v2303 = vpop.f32.mrb[0].mxu0
    %v2304 = vadd.f32 %v2171, %v2303
    %v2305 = vpop.f32.mrb[0].mxu0
    %v2306 = vpop.f32.mrb[0].mxu0
    %v2307 = vpop.f32.mrb[0].mxu0
    %2308 = vdwg.mxu0
    %v2309 = vmax.f32 %v2304, 0.0
    %v2310 = vpack.c.bf16 %v2309, %v2309
    %v2311 = vld [vmem:[#allocation10] sm:$0xf]
    %v2312 = vld [vmem:[#allocation10 + $0x4] sm:$0xf]
    %v2313 = vld [vmem:[#allocation10 + $0x8] sm:$0xf]
    %v2314 = vld [vmem:[#allocation10 + $0xc] sm:$0xf]
    %v2315 = vld [vmem:[#allocation10 + $0x10] sm:$0xf]
    %v2316 = vld [vmem:[#allocation10 + $0x14] sm:$0xf]
    %v2317 = vld [vmem:[#allocation10 + $0x18] sm:$0xf]
    %v2318 = vld [vmem:[#allocation10 + $0x1c] sm:$0xf]
    %v2319 = vld [vmem:[#allocation10 + $0x20] sm:$0xf]
    %v2320 = vld [vmem:[#allocation10 + $0x24] sm:$0xf]
    %v2321 = vld [vmem:[#allocation10 + $0x28] sm:$0xf]
    %v2322 = vld [vmem:[#allocation10 + $0x2c] sm:$0xf]
    %v2323 = vld [vmem:[#allocation10 + $0x30] sm:$0xf]
    %v2324 = vld [vmem:[#allocation10 + $0x34] sm:$0xf]
    %v2325 = vld [vmem:[#allocation10 + $0x38] sm:$0xf]
    %v2326 = vld [vmem:[#allocation10 + $0x3c] sm:$0xf]
    %v2327 = vld [vmem:[%s8] sm:$0x1]
    %v2329 = vlaneseq
    %v2330 = vshrl.u32 %v2329, 7
    %v2331 = vsub.s32 0, %v2330
    %v2332 = vrot.slane %v2327, %v2331
    %v2350 = vunpack.c.l.b16 %v2311
    %v2351 = vunpack.c.l.b16 %v2312
    %v2352 = vunpack.c.l.b16 %v2313
    %v2353 = vunpack.c.l.b16 %v2314
    %v2354 = vunpack.c.l.b16 %v2315
    %v2355 = vunpack.c.l.b16 %v2316
    %v2356 = vunpack.c.l.b16 %v2317
    %v2357 = vunpack.c.l.b16 %v2318
    %v2358 = vunpack.c.l.b16 %v2319
    %v2359 = vunpack.c.l.b16 %v2320
    %v2360 = vunpack.c.l.b16 %v2321
    %v2361 = vunpack.c.l.b16 %v2322
    %v2362 = vunpack.c.l.b16 %v2323
    %v2363 = vunpack.c.l.b16 %v2324
    %v2364 = vunpack.c.l.b16 %v2325
    %v2365 = vunpack.c.l.b16 %v2326
    %v2366 = vpack.c.b16 %v2351, %v2350
    %v2367 = vpack.c.b16 %v2353, %v2352
    %v2368 = vpack.c.b16 %v2355, %v2354
    %v2369 = vpack.c.b16 %v2357, %v2356
    %v2370 = vpack.c.b16 %v2359, %v2358
    %v2371 = vpack.c.b16 %v2361, %v2360
    %v2372 = vpack.c.b16 %v2363, %v2362
    %v2373 = vpack.c.b16 %v2365, %v2364
    %2382 = vmatprep.subr.bf16.mxu0 0
    %2383 = vmatpush1.bf16.msra.mxu0 %v2366
    %2384 = vmatprep.subr.bf16.mxu0 0
    %2385 = vmatpush1.bf16.msra.mxu0 %v2367
    %2386 = vmatprep.subr.bf16.mxu0 0
    %2387 = vmatpush1.bf16.msra.mxu0 %v2368
    %2388 = vmatprep.subr.bf16.mxu0 0
    %2389 = vmatpush1.bf16.msra.mxu0 %v2369
    %2390 = vmatprep.subr.bf16.mxu0 0
    %2391 = vmatpush1.bf16.msra.mxu0 %v2370
    %2392 = vmatprep.subr.bf16.mxu0 0
    %2393 = vmatpush1.bf16.msra.mxu0 %v2371
    %2394 = vmatprep.subr.bf16.mxu0 0
    %2395 = vmatpush1.bf16.msra.mxu0 %v2372
    %2396 = vmatprep.subr.bf16.mxu0 0
    %2397 = vmatpush1.bf16.msra.mxu0 %v2373
    %2398 = vmatprep.subr.bf16.mxu0 0
    %2399 = vmatpush1.bf16.msra.mxu0 0
    %2400 = vmatprep.subr.bf16.mxu0 0
    %2401 = vmatpush1.bf16.msra.mxu0 0
    %2402 = vmatprep.subr.bf16.mxu0 0
    %2403 = vmatpush1.bf16.msra.mxu0 0
    %2404 = vmatprep.subr.bf16.mxu0 0
    %2405 = vmatpush1.bf16.msra.mxu0 0
    %2406 = vmatprep.subr.bf16.mxu0 0
    %2407 = vmatpush1.bf16.msra.mxu0 0
    %2408 = vmatprep.subr.bf16.mxu0 0
    %2409 = vmatpush1.bf16.msra.mxu0 0
    %2410 = vmatprep.subr.bf16.mxu0 0
    %2411 = vmatpush1.bf16.msra.mxu0 0
    %2412 = vmatprep.subr.bf16.mxu0 0
    %2413 = vmatpush1.bf16.msra.mxu0 0
    %2414 = vmatprep.mubr.bf16.mxu0 0
    %2415 = vmatmul.mubr.bf16.gmra.mrb[0].mxu0 %v2310
    %v2416 = vpop.f32.mrb[0].mxu0
    %v2417 = vadd.f32 %v2332, %v2416
    %v2418 = vpop.f32.mrb[0].mxu0
    %v2419 = vpop.f32.mrb[0].mxu0
    %v2420 = vpop.f32.mrb[0].mxu0
    %2421 = vdwg.mxu0
    %2422 = vst [vmem:[#allocation11] sm:$0xff] %v2417
    // Predicated region
    $region58: #{tpu_custom_call.1} parent=1 // pred_check
      _
    $region59: #{tpu_custom_call.1} parent=1 // pred_check_branch
      %2424 = sbr.rel (0) target = $region61
    $region60: #{tpu_custom_call.1} parent=1 // pred_region
      %s2426 = ssub.s32 128, 128
      %2427 = vsyncadd [#allocation4], %s2426
      %s2429 = sshll.u32 [#allocation11], 4
      %s2430 = int_to_ptr.vmem [resolvable:$true] %s2429
      %2432 = dma.vmem_to_hbm [thread:$0]  %s2430, 128, %s9, [#allocation4]
    $region61: #{tpu_custom_call.1} parent=1 // pred_fallthru
      _
    // Predicated region
    $region62: #{tpu_custom_call.1} parent=1 // pred_check
      _
    $region63: #{tpu_custom_call.1} parent=1 // pred_check_branch
      %2434 = sbr.rel (0) target = $region65
    $region64: #{tpu_custom_call.1} parent=1 // pred_region
      %2435 = dma.done [#allocation4], 128
    $region65: #{tpu_custom_call.1} parent=1 // pred_fallthru
      _
    %2436 = vsyncpa [#allocation3], 1
    %2437 = vsyncpa [#allocation6], 1
    %2438 = vsyncpa [#allocation9], 1
    %2439 = vsyncpa [#allocation4], 1

</llo_original>
